<compile_context>
chip_gen: v5e
topology: v5e:2x2
jax: 0.10.0
libtpu: 0.0.40
codegen_flags: <defaults>
</compile_context>

<pallas_src>
import jax
import jax.numpy as jnp
from jax import lax
from jax.experimental import pallas as pl
from jax.experimental.pallas import tpu as pltpu
import numpy as np


def _pool_conv_map(h_in, w_in, h_out, w_out):
    """0/1 scatter map M[pin, slot, tap] for a 3x3 SAME conv feeding a 2x2/s2
    max-pool.  slot = (p*2+q)*(h_out*w_out) + oh*w_out + ow addresses the
    conv-output pixel (2*oh+p, 2*ow+q); tap = di*3+dj; pin is the row-major
    input pixel.  Out-of-range taps (zero padding) have no entry, and conv
    outputs dropped by floor pooling are never materialised."""
    m = np.zeros((h_in * w_in, 4 * h_out * w_out, 9), np.float32)
    for p in range(2):
        for q in range(2):
            for oh in range(h_out):
                for ow in range(w_out):
                    i, j = 2 * oh + p, 2 * ow + q
                    slot = (p * 2 + q) * (h_out * w_out) + oh * w_out + ow
                    for di in range(3):
                        for dj in range(3):
                            ii, jj = i + di - 1, j + dj - 1
                            if 0 <= ii < h_in and 0 <= jj < w_in:
                                m[ii * w_in + jj, slot, di * 3 + dj] = 1.0
    return m


def pack_params(params, h, w):
    """One-time, host-side (numpy) repackaging of the PyTorch-layout params
    into MXU-friendly bf16 matrices.  Done outside the per-call hot path."""
    w1, b1, w2, b2, w3, b3, w4, b4 = [np.asarray(p, np.float32) for p in params]
    c1, c2 = w1.shape[0], w2.shape[0]
    hid, out_dim = w3.shape[0], w4.shape[0]
    h2, w2p = h // 2, w // 2                    # pool1 grid (floor)
    h3, w3p = h2 // 2, w2p // 2                 # pool2 grid (floor)
    assert w3.shape[1] == c2 * h3 * w3p

    m1 = _pool_conv_map(h, w, h2, w2p)          # (h*w,    4*h2*w2p, 9)
    m2 = _pool_conv_map(h2, w2p, h3, w3p)       # (h2*w2p, 4*h3*w3p, 9)
    w1t = w1.reshape(c1, 9).T                                  # (9, c1)
    w2t = np.transpose(w2.reshape(c2, c1, 9), (2, 1, 0))       # (9, c1, c2)
    # Columns ordered (pool_member, pooled_pixel, channel); rows of w2big are
    # (pooled_pixel, channel) matching the pooled activation layout.
    w1big = np.einsum('pst,tc->psc', m1, w1t).reshape(h * w, 4 * h2 * w2p * c1)
    w2big = np.einsum('pst,tcd->pcsd', m2, w2t).reshape(
        h2 * w2p * c1, 4 * h3 * w3p * c2)
    # Per-member-block biases (each member block repeats the same bias tile).
    b1big = np.tile(b1, h2 * w2p).reshape(1, -1)               # (1, h2*w2p*c1)
    b2big = np.tile(b2, h3 * w3p).reshape(1, -1)               # (1, h3*w3p*c2)
    # fc1: PyTorch NCHW flatten (c2, oh, ow) -> our (oh, ow, c2) column order.
    w3k = np.transpose(w3.reshape(hid, c2, h3, w3p),
                       (2, 3, 1, 0)).reshape(h3 * w3p * c2, hid)
    b3k = b3.reshape(1, -1)
    # fc2: pad to 128 output lanes for an unmasked lane-dense store.
    npad = ((out_dim + 127) // 128) * 128
    w4k = np.zeros((hid, npad), np.float32)
    w4k[:, :out_dim] = w4.T
    b4k = np.zeros((1, npad), np.float32)
    b4k[0, :out_dim] = b4

    bf16 = lambda a: jnp.asarray(a, jnp.bfloat16)
    f32 = lambda a: jnp.asarray(a, jnp.float32)
    return (bf16(w1big), f32(b1big), bf16(w2big), f32(b2big),
            bf16(w3k), f32(b3k), bf16(w4k), f32(b4k),
            (h, w, out_dim, npad))


def _cnn_kernel(x_ref, w1_ref, b1_ref, w2_ref, b2_ref,
                w3_ref, b3_ref, w4_ref, b4_ref, out_ref):
    def conv_relu_pool(act_f32, w_ref, b_ref):
        # act_f32: (nb, K).  Weight columns are (pool_member, pooled_pixel,
        # channel); the 2x2 max-pool is a running max over the four 128-aligned
        # per-member dots, so the full (nb, 4*cw) conv output is never live.
        ab = act_f32.astype(jnp.bfloat16)
        cw = w_ref.shape[1] // 4
        bias = b_ref[...]
        pooled = None
        for m in range(4):                       # static unroll
            y = jnp.dot(ab, w_ref[:, m * cw:(m + 1) * cw],
                        preferred_element_type=jnp.float32)
            y = jnp.maximum(y + bias, 0.0)
            pooled = y if pooled is None else jnp.maximum(pooled, y)
        return pooled

    p1 = conv_relu_pool(x_ref[...], w1_ref, b1_ref)          # (nb, h2*w2p*c1)
    p2 = conv_relu_pool(p1, w2_ref, b2_ref)                   # (nb, h3*w3p*c2)
    h = jnp.dot(p2.astype(jnp.bfloat16), w3_ref[...],
                preferred_element_type=jnp.float32)
    h = jnp.maximum(h + b3_ref[...], 0.0)                      # (nb, 64)
    out_ref[...] = (jnp.dot(h.astype(jnp.bfloat16), w4_ref[...],
                            preferred_element_type=jnp.float32)
                    + b4_ref[...])                             # (nb, 128)


def simple_cnn_forward(x, packed, *, batch_tile=256):
    """x: (N, 1, H, W) float32 NCHW like PyTorch.  packed = pack_params(...).
    Returns (N, output_dim) float32."""
    (w1b, b1b, w2b, b2b, w3k, b3k, w4k, b4k, meta) = packed
    h, w, out_dim, npad = meta
    n, cin = x.shape[0], x.shape[1]
    assert cin == 1 and x.shape[2] == h and x.shape[3] == w

    xm = x.astype(jnp.float32).reshape(n, h * w)   # Cin == 1 -> (N, H*W)

    # ---- batch grid -----------------------------------------------------
    if n <= batch_tile:
        if n >= 16:
            # >=2 grid steps so both v7x TensorCores get work on the
            # "parallel" axis (harmless on single-TC v5e/v6e).
            nb = ((-(-n // 2)) + 7) // 8 * 8
        else:
            nb = n
    else:
        nb = batch_tile
    n_pad = pl.cdiv(n, nb) * nb
    if n_pad != n:
        xm = jnp.concatenate(
            [xm, jnp.zeros((n_pad - n, h * w), xm.dtype)], axis=0)

    def _const(arr):
        # Grid-invariant weight/bias: full block, constant index_map,
        # single-buffered (no point double-buffering a block that never moves).
        nd = arr.ndim
        return pl.BlockSpec(arr.shape, lambda i, _nd=nd: (0,) * _nd,
                            pipeline_mode=pl.Buffered(1))

    out = pl.pallas_call(
        _cnn_kernel,
        out_shape=jax.ShapeDtypeStruct((n_pad, npad), jnp.float32),
        grid=(n_pad // nb,),
        in_specs=[pl.BlockSpec((nb, h * w), lambda i: (i, 0)),
                  _const(w1b), _const(b1b), _const(w2b), _const(b2b),
                  _const(w3k), _const(b3k), _const(w4k), _const(b4k)],
        out_specs=pl.BlockSpec((nb, npad), lambda i: (i, 0)),
        compiler_params=pltpu.CompilerParams(
            dimension_semantics=("parallel",),
            vmem_limit_bytes=32 * 1024 * 1024),
    )(xm, w1b, b1b, w2b, b2b, w3k, b3k, w4k, b4k)
    return out[:n, :out_dim]


def init_params(key, num_features, output_dim):
    h3, w3dim = num_features // 4, 10 // 4
    shared = 32 * h3 * w3dim
    ks = jax.random.split(key, 8)

    def unif(k, shape, fan_in):
        bound = 1.0 / float(np.sqrt(fan_in))
        return jax.random.uniform(k, shape, jnp.float32, -bound, bound)

    w1 = unif(ks[0], (16, 1, 3, 3), 1 * 9)
    b1 = unif(ks[1], (16,), 1 * 9)
    w2 = unif(ks[2], (32, 16, 3, 3), 16 * 9)
    b2 = unif(ks[3], (32,), 16 * 9)
    w3 = unif(ks[4], (64, shared), shared)
    b3 = unif(ks[5], (64,), shared)
    w4 = unif(ks[6], (output_dim, 64), 64)
    b4 = unif(ks[7], (output_dim,), 64)
    return (w1, b1, w2, b2, w3, b3, w4, b4)


def reference_forward(x, params):
    """Pure-JAX (XLA, f32 HIGHEST) reference matching the PyTorch module."""
    w1, b1, w2, b2, w3, b3, w4, b4 = params
    dn = ('NCHW', 'OIHW', 'NCHW')
    prec = lax.Precision.HIGHEST
    y = lax.conv_general_dilated(x, w1, (1, 1), 'SAME',
                                 dimension_numbers=dn, precision=prec)
    y = jnp.maximum(y + b1[None, :, None, None], 0.0)
    y = lax.reduce_window(y, -jnp.inf, lax.max, (1, 1, 2, 2), (1, 1, 2, 2), 'VALID')
    y = lax.conv_general_dilated(y, w2, (1, 1), 'SAME',
                                 dimension_numbers=dn, precision=prec)
    y = jnp.maximum(y + b2[None, :, None, None], 0.0)
    y = lax.reduce_window(y, -jnp.inf, lax.max, (1, 1, 2, 2), (1, 1, 2, 2), 'VALID')
    y = y.reshape(x.shape[0], -1)                              # NCHW flatten
    y = jnp.maximum(jnp.dot(y, w3.T, precision=prec) + b3, 0.0)
    return jnp.dot(y, w4.T, precision=prec) + b4


if __name__ == "__main__":
    num_features, output_dim, batch = 16, 8, 2
    key = jax.random.PRNGKey(0)
    kp, kx = jax.random.split(key)
    params = init_params(kp, num_features, output_dim)
    # width is fixed at 10 by the module's dummy_input / Linear sizing
    x = jax.random.normal(kx, (batch, 1, num_features, 10), jnp.float32)

    packed = pack_params(params, num_features, 10)   # one-time repackaging
    out = jax.block_until_ready(simple_cnn_forward(x, packed))
    ref = jax.block_until_ready(reference_forward(x, params))

    assert out.shape == (batch, output_dim)
    # bf16 MXU operands with f32 accumulation vs f32 HIGHEST reference.
    np.testing.assert_allclose(np.asarray(out), np.asarray(ref),
                               rtol=2e-2, atol=2e-2)
    print("KERNEL_OK")
</pallas_src>

<mosaic_0001>
module attributes {stable_mosaic.version = 11 : i64} {
  func.func @_cnn_kernel(%arg0: i32, %arg1: memref<2x160xf32, #tpu.memory_space<vmem>>, %arg2: memref<160x2560xbf16, #tpu.memory_space<vmem>>, %arg3: memref<1x640xf32, #tpu.memory_space<vmem>>, %arg4: memref<640x1024xbf16, #tpu.memory_space<vmem>>, %arg5: memref<1x256xf32, #tpu.memory_space<vmem>>, %arg6: memref<256x64xbf16, #tpu.memory_space<vmem>>, %arg7: memref<1x64xf32, #tpu.memory_space<vmem>>, %arg8: memref<64x128xbf16, #tpu.memory_space<vmem>>, %arg9: memref<1x128xf32, #tpu.memory_space<vmem>>, %arg10: memref<2x128xf32, #tpu.memory_space<vmem>>) attributes {dimension_semantics = [#tpu.dimension_semantics<parallel>], iteration_bounds = array<i64: 1>, scalar_prefetch = 0 : i64, scratch_operands = 0 : i64, tpu.core_type = #tpu.core_type<tc>, window_params = [{transform_indices = @transform_0, window_bounds = array<i64: 2, 160>}, {pipeline_mode = #tpu.pipeline_mode<synchronous>, transform_indices = @transform_1, window_bounds = array<i64: 160, 2560>}, {pipeline_mode = #tpu.pipeline_mode<synchronous>, transform_indices = @transform_2, window_bounds = array<i64: 1, 640>}, {pipeline_mode = #tpu.pipeline_mode<synchronous>, transform_indices = @transform_3, window_bounds = array<i64: 640, 1024>}, {pipeline_mode = #tpu.pipeline_mode<synchronous>, transform_indices = @transform_4, window_bounds = array<i64: 1, 256>}, {pipeline_mode = #tpu.pipeline_mode<synchronous>, transform_indices = @transform_5, window_bounds = array<i64: 256, 64>}, {pipeline_mode = #tpu.pipeline_mode<synchronous>, transform_indices = @transform_6, window_bounds = array<i64: 1, 64>}, {pipeline_mode = #tpu.pipeline_mode<synchronous>, transform_indices = @transform_7, window_bounds = array<i64: 64, 128>}, {pipeline_mode = #tpu.pipeline_mode<synchronous>, transform_indices = @transform_8, window_bounds = array<i64: 1, 128>}, {transform_indices = @transform_9, window_bounds = array<i64: 2, 128>}]} {
    %c0 = arith.constant 0 : index
    %c0_0 = arith.constant 0 : index
    %0 = vector.load %arg1[%c0, %c0_0] : memref<2x160xf32, #tpu.memory_space<vmem>>, vector<2x160xf32>
    %1 = arith.truncf %0 : vector<2x160xf32> to vector<2x160xbf16>
    %c0_1 = arith.constant 0 : index
    %c0_2 = arith.constant 0 : index
    %2 = vector.load %arg3[%c0_1, %c0_2] : memref<1x640xf32, #tpu.memory_space<vmem>>, vector<1x640xf32>
    %c0_3 = arith.constant 0 : index
    %c0_4 = arith.constant 0 : index
    %3 = vector.load %arg2[%c0_3, %c0_4] : memref<160x2560xbf16, #tpu.memory_space<vmem>>, vector<160x640xbf16>
    %cst = arith.constant dense<0.000000e+00> : vector<2x640xf32>
    %4 = tpu.matmul %1, %3, %cst {dimension_numbers = #tpu.dot_dimension_numbers<[1], [0], [0], [1], [0, 0, 1, 1], [], []>} : vector<2x160xbf16>, vector<160x640xbf16>, vector<2x640xf32> -> vector<2x640xf32>
    %5 = vector.broadcast %2 : vector<1x640xf32> to vector<2x640xf32>
    %6 = arith.addf %4, %5 : vector<2x640xf32>
    %cst_5 = arith.constant 0.000000e+00 : f32
    %7 = vector.broadcast %cst_5 : f32 to vector<2x640xf32>
    %8 = arith.maximumf %6, %7 : vector<2x640xf32>
    %c0_6 = arith.constant 0 : index
    %c640 = arith.constant 640 : index
    %9 = vector.load %arg2[%c0_6, %c640] : memref<160x2560xbf16, #tpu.memory_space<vmem>>, vector<160x640xbf16>
    %cst_7 = arith.constant dense<0.000000e+00> : vector<2x640xf32>
    %10 = tpu.matmul %1, %9, %cst_7 {dimension_numbers = #tpu.dot_dimension_numbers<[1], [0], [0], [1], [0, 0, 1, 1], [], []>} : vector<2x160xbf16>, vector<160x640xbf16>, vector<2x640xf32> -> vector<2x640xf32>
    %11 = vector.broadcast %2 : vector<1x640xf32> to vector<2x640xf32>
    %12 = arith.addf %10, %11 : vector<2x640xf32>
    %cst_8 = arith.constant 0.000000e+00 : f32
    %13 = vector.broadcast %cst_8 : f32 to vector<2x640xf32>
    %14 = arith.maximumf %12, %13 : vector<2x640xf32>
    %15 = arith.maximumf %8, %14 : vector<2x640xf32>
    %c0_9 = arith.constant 0 : index
    %c1280 = arith.constant 1280 : index
    %16 = vector.load %arg2[%c0_9, %c1280] : memref<160x2560xbf16, #tpu.memory_space<vmem>>, vector<160x640xbf16>
    %cst_10 = arith.constant dense<0.000000e+00> : vector<2x640xf32>
    %17 = tpu.matmul %1, %16, %cst_10 {dimension_numbers = #tpu.dot_dimension_numbers<[1], [0], [0], [1], [0, 0, 1, 1], [], []>} : vector<2x160xbf16>, vector<160x640xbf16>, vector<2x640xf32> -> vector<2x640xf32>
    %18 = vector.broadcast %2 : vector<1x640xf32> to vector<2x640xf32>
    %19 = arith.addf %17, %18 : vector<2x640xf32>
    %cst_11 = arith.constant 0.000000e+00 : f32
    %20 = vector.broadcast %cst_11 : f32 to vector<2x640xf32>
    %21 = arith.maximumf %19, %20 : vector<2x640xf32>
    %22 = arith.maximumf %15, %21 : vector<2x640xf32>
    %c0_12 = arith.constant 0 : index
    %c1920 = arith.constant 1920 : index
    %23 = vector.load %arg2[%c0_12, %c1920] : memref<160x2560xbf16, #tpu.memory_space<vmem>>, vector<160x640xbf16>
    %cst_13 = arith.constant dense<0.000000e+00> : vector<2x640xf32>
    %24 = tpu.matmul %1, %23, %cst_13 {dimension_numbers = #tpu.dot_dimension_numbers<[1], [0], [0], [1], [0, 0, 1, 1], [], []>} : vector<2x160xbf16>, vector<160x640xbf16>, vector<2x640xf32> -> vector<2x640xf32>
    %25 = vector.broadcast %2 : vector<1x640xf32> to vector<2x640xf32>
    %26 = arith.addf %24, %25 : vector<2x640xf32>
    %cst_14 = arith.constant 0.000000e+00 : f32
    %27 = vector.broadcast %cst_14 : f32 to vector<2x640xf32>
    %28 = arith.maximumf %26, %27 : vector<2x640xf32>
    %29 = arith.maximumf %22, %28 : vector<2x640xf32>
    %30 = arith.truncf %29 : vector<2x640xf32> to vector<2x640xbf16>
    %c0_15 = arith.constant 0 : index
    %c0_16 = arith.constant 0 : index
    %31 = vector.load %arg5[%c0_15, %c0_16] : memref<1x256xf32, #tpu.memory_space<vmem>>, vector<1x256xf32>
    %c0_17 = arith.constant 0 : index
    %c0_18 = arith.constant 0 : index
    %32 = vector.load %arg4[%c0_17, %c0_18] : memref<640x1024xbf16, #tpu.memory_space<vmem>>, vector<640x256xbf16>
    %cst_19 = arith.constant dense<0.000000e+00> : vector<2x256xf32>
    %33 = tpu.matmul %30, %32, %cst_19 {dimension_numbers = #tpu.dot_dimension_numbers<[1], [0], [0], [1], [0, 0, 1, 1], [], []>} : vector<2x640xbf16>, vector<640x256xbf16>, vector<2x256xf32> -> vector<2x256xf32>
    %34 = vector.broadcast %31 : vector<1x256xf32> to vector<2x256xf32>
    %35 = arith.addf %33, %34 : vector<2x256xf32>
    %cst_20 = arith.constant 0.000000e+00 : f32
    %36 = vector.broadcast %cst_20 : f32 to vector<2x256xf32>
    %37 = arith.maximumf %35, %36 : vector<2x256xf32>
    %c0_21 = arith.constant 0 : index
    %c256 = arith.constant 256 : index
    %38 = vector.load %arg4[%c0_21, %c256] : memref<640x1024xbf16, #tpu.memory_space<vmem>>, vector<640x256xbf16>
    %cst_22 = arith.constant dense<0.000000e+00> : vector<2x256xf32>
    %39 = tpu.matmul %30, %38, %cst_22 {dimension_numbers = #tpu.dot_dimension_numbers<[1], [0], [0], [1], [0, 0, 1, 1], [], []>} : vector<2x640xbf16>, vector<640x256xbf16>, vector<2x256xf32> -> vector<2x256xf32>
    %40 = vector.broadcast %31 : vector<1x256xf32> to vector<2x256xf32>
    %41 = arith.addf %39, %40 : vector<2x256xf32>
    %cst_23 = arith.constant 0.000000e+00 : f32
    %42 = vector.broadcast %cst_23 : f32 to vector<2x256xf32>
    %43 = arith.maximumf %41, %42 : vector<2x256xf32>
    %44 = arith.maximumf %37, %43 : vector<2x256xf32>
    %c0_24 = arith.constant 0 : index
    %c512 = arith.constant 512 : index
    %45 = vector.load %arg4[%c0_24, %c512] : memref<640x1024xbf16, #tpu.memory_space<vmem>>, vector<640x256xbf16>
    %cst_25 = arith.constant dense<0.000000e+00> : vector<2x256xf32>
    %46 = tpu.matmul %30, %45, %cst_25 {dimension_numbers = #tpu.dot_dimension_numbers<[1], [0], [0], [1], [0, 0, 1, 1], [], []>} : vector<2x640xbf16>, vector<640x256xbf16>, vector<2x256xf32> -> vector<2x256xf32>
    %47 = vector.broadcast %31 : vector<1x256xf32> to vector<2x256xf32>
    %48 = arith.addf %46, %47 : vector<2x256xf32>
    %cst_26 = arith.constant 0.000000e+00 : f32
    %49 = vector.broadcast %cst_26 : f32 to vector<2x256xf32>
    %50 = arith.maximumf %48, %49 : vector<2x256xf32>
    %51 = arith.maximumf %44, %50 : vector<2x256xf32>
    %c0_27 = arith.constant 0 : index
    %c768 = arith.constant 768 : index
    %52 = vector.load %arg4[%c0_27, %c768] : memref<640x1024xbf16, #tpu.memory_space<vmem>>, vector<640x256xbf16>
    %cst_28 = arith.constant dense<0.000000e+00> : vector<2x256xf32>
    %53 = tpu.matmul %30, %52, %cst_28 {dimension_numbers = #tpu.dot_dimension_numbers<[1], [0], [0], [1], [0, 0, 1, 1], [], []>} : vector<2x640xbf16>, vector<640x256xbf16>, vector<2x256xf32> -> vector<2x256xf32>
    %54 = vector.broadcast %31 : vector<1x256xf32> to vector<2x256xf32>
    %55 = arith.addf %53, %54 : vector<2x256xf32>
    %cst_29 = arith.constant 0.000000e+00 : f32
    %56 = vector.broadcast %cst_29 : f32 to vector<2x256xf32>
    %57 = arith.maximumf %55, %56 : vector<2x256xf32>
    %58 = arith.maximumf %51, %57 : vector<2x256xf32>
    %59 = arith.truncf %58 : vector<2x256xf32> to vector<2x256xbf16>
    %c0_30 = arith.constant 0 : index
    %c0_31 = arith.constant 0 : index
    %60 = vector.load %arg6[%c0_30, %c0_31] : memref<256x64xbf16, #tpu.memory_space<vmem>>, vector<256x64xbf16>
    %cst_32 = arith.constant dense<0.000000e+00> : vector<2x64xf32>
    %61 = tpu.matmul %59, %60, %cst_32 {dimension_numbers = #tpu.dot_dimension_numbers<[1], [0], [0], [1], [0, 0, 1, 1], [], []>} : vector<2x256xbf16>, vector<256x64xbf16>, vector<2x64xf32> -> vector<2x64xf32>
    %c0_33 = arith.constant 0 : index
    %c0_34 = arith.constant 0 : index
    %62 = vector.load %arg7[%c0_33, %c0_34] : memref<1x64xf32, #tpu.memory_space<vmem>>, vector<1x64xf32>
    %63 = vector.broadcast %62 : vector<1x64xf32> to vector<2x64xf32>
    %64 = arith.addf %61, %63 : vector<2x64xf32>
    %cst_35 = arith.constant 0.000000e+00 : f32
    %65 = vector.broadcast %cst_35 : f32 to vector<2x64xf32>
    %66 = arith.maximumf %64, %65 : vector<2x64xf32>
    %67 = arith.truncf %66 : vector<2x64xf32> to vector<2x64xbf16>
    %c0_36 = arith.constant 0 : index
    %c0_37 = arith.constant 0 : index
    %68 = vector.load %arg8[%c0_36, %c0_37] : memref<64x128xbf16, #tpu.memory_space<vmem>>, vector<64x128xbf16>
    %cst_38 = arith.constant dense<0.000000e+00> : vector<2x128xf32>
    %69 = tpu.matmul %67, %68, %cst_38 {dimension_numbers = #tpu.dot_dimension_numbers<[1], [0], [0], [1], [0, 0, 1, 1], [], []>} : vector<2x64xbf16>, vector<64x128xbf16>, vector<2x128xf32> -> vector<2x128xf32>
    %c0_39 = arith.constant 0 : index
    %c0_40 = arith.constant 0 : index
    %70 = vector.load %arg9[%c0_39, %c0_40] : memref<1x128xf32, #tpu.memory_space<vmem>>, vector<1x128xf32>
    %71 = vector.broadcast %70 : vector<1x128xf32> to vector<2x128xf32>
    %72 = arith.addf %69, %71 : vector<2x128xf32>
    %c0_41 = arith.constant 0 : index
    %c0_42 = arith.constant 0 : index
    %73 = vector.load %arg10[%c0_41, %c0_42] : memref<2x128xf32, #tpu.memory_space<vmem>>, vector<2x128xf32>
    tpu.vector_store %arg10[%c0_41, %c0_42], %72 {strides = array<i32>} : memref<2x128xf32, #tpu.memory_space<vmem>>, vector<2x128xf32>,
    return
  }
  func.func @transform_0(%arg0: i32) -> (i32, i32) {
    %c0_i32 = arith.constant 0 : i32
    %c0_i32_0 = arith.constant 0 : i32
    return %arg0, %c0_i32 : i32, i32
  }
  func.func @transform_1(%arg0: i32) -> (i32, i32) {
    %c0_i32 = arith.constant 0 : i32
    %c0_i32_0 = arith.constant 0 : i32
    %c0_i32_1 = arith.constant 0 : i32
    return %c0_i32, %c0_i32_0 : i32, i32
  }
  func.func @transform_2(%arg0: i32) -> (i32, i32) {
    %c0_i32 = arith.constant 0 : i32
    %c0_i32_0 = arith.constant 0 : i32
    %c0_i32_1 = arith.constant 0 : i32
    return %c0_i32, %c0_i32_0 : i32, i32
  }
  func.func @transform_3(%arg0: i32) -> (i32, i32) {
    %c0_i32 = arith.constant 0 : i32
    %c0_i32_0 = arith.constant 0 : i32
    %c0_i32_1 = arith.constant 0 : i32
    return %c0_i32, %c0_i32_0 : i32, i32
  }
  func.func @transform_4(%arg0: i32) -> (i32, i32) {
    %c0_i32 = arith.constant 0 : i32
    %c0_i32_0 = arith.constant 0 : i32
    %c0_i32_1 = arith.constant 0 : i32
    return %c0_i32, %c0_i32_0 : i32, i32
  }
  func.func @transform_5(%arg0: i32) -> (i32, i32) {
    %c0_i32 = arith.constant 0 : i32
    %c0_i32_0 = arith.constant 0 : i32
    %c0_i32_1 = arith.constant 0 : i32
    return %c0_i32, %c0_i32_0 : i32, i32
  }
  func.func @transform_6(%arg0: i32) -> (i32, i32) {
    %c0_i32 = arith.constant 0 : i32
    %c0_i32_0 = arith.constant 0 : i32
    %c0_i32_1 = arith.constant 0 : i32
    return %c0_i32, %c0_i32_0 : i32, i32
  }
  func.func @transform_7(%arg0: i32) -> (i32, i32) {
    %c0_i32 = arith.constant 0 : i32
    %c0_i32_0 = arith.constant 0 : i32
    %c0_i32_1 = arith.constant 0 : i32
    return %c0_i32, %c0_i32_0 : i32, i32
  }
  func.func @transform_8(%arg0: i32) -> (i32, i32) {
    %c0_i32 = arith.constant 0 : i32
    %c0_i32_0 = arith.constant 0 : i32
    %c0_i32_1 = arith.constant 0 : i32
    return %c0_i32, %c0_i32_0 : i32, i32
  }
  func.func @transform_9(%arg0: i32) -> (i32, i32) {
    %c0_i32 = arith.constant 0 : i32
    %c0_i32_0 = arith.constant 0 : i32
    return %arg0, %c0_i32 : i32, i32
  }
}

</mosaic_0001>

<llo_original>
// kernel: tpu_custom_call.1
$region0: #{tpu_custom_call.1}
  #allocation0 [shape = 'u32[]', space=smem, size = 0x4, offset = 0x4, fixed_abs, tag = 'smem constant byte address 0x4 - core index']
  #allocation1 [shape = 'u32[72,128]{1,0:T(1,128)}', space=vmem, size = 0x9000, scoped, tag = 'internal scratch']
  %s0 = inlined_call_operand.hbm [shape: f32[2,160], index: 0, kind: input, shape index: {}]
  %s1 = inlined_call_operand.hbm [shape: bf16[160,2560], index: 1, kind: input, shape index: {}]
  %s2 = inlined_call_operand.hbm [shape: f32[1,640], index: 2, kind: input, shape index: {}]
  %s3 = inlined_call_operand.hbm [shape: bf16[640,1024], index: 3, kind: input, shape index: {}]
  %s4 = inlined_call_operand.hbm [shape: f32[1,256], index: 4, kind: input, shape index: {}]
  %s5 = inlined_call_operand.vmem [shape: bf16[256,64], index: 5, kind: input, shape index: {}]
  %s6 = inlined_call_operand.hbm [shape: f32[1,64], index: 6, kind: input, shape index: {}]
  %s7 = inlined_call_operand.hbm [shape: bf16[64,128], index: 7, kind: input, shape index: {}]
  %s8 = inlined_call_operand.hbm [shape: f32[1,128], index: 8, kind: input, shape index: {}]
  %s9 = inlined_call_operand.hbm [shape: f32[2,128], index: 9, kind: output, shape index: {}]
  %s10 = sld [smem:[#allocation0]]
  $region78: #{tpu_custom_call.1} parent=0
    _
  %s12 = ssub.s32 1, %s10
  %s13 = scalar_select 0, %s12, %s10
  $region1: #{tpu_custom_call.1} parent=0
    #allocation2 [shape = 'u8[2048]{0}', space=vmem, size = 0x800, scoped, tag = 'input window, operand 0, single buffered']
    #allocation3 [shape = 's32[1]{0}', space=sflag, size = 0x4, scoped, tag = 'scoped memory for tpu_custom_call.1']
    #allocation4 [shape = 's32[1]{0}', space=sflag, size = 0x4, scoped, tag = 'scoped memory for tpu_custom_call.1']
    #allocation5 [shape = 'u8[819200]{0}', space=vmem, size = 0xc8000, scoped, tag = 'input window, operand 1, single buffered']
    #allocation6 [shape = 's32[1]{0}', space=sflag, size = 0x4, scoped, tag = 'scoped memory for tpu_custom_call.1']
    #allocation7 [shape = 'u8[2560]{0}', space=vmem, size = 0xc00, scoped, tag = 'input window, operand 2, single buffered']
    #allocation8 [shape = 'u8[1310720]{0}', space=vmem, size = 0x140000, scoped, tag = 'input window, operand 3, single buffered']
    #allocation9 [shape = 's32[1]{0}', space=sflag, size = 0x4, scoped, tag = 'scoped memory for tpu_custom_call.1']
    #allocation10 [shape = 'u8[1024]{0}', space=vmem, size = 0x400, scoped, tag = 'input window, operand 4, single buffered']
    #allocation11 [shape = 'u8[512]{0}', space=vmem, size = 0x400, scoped, tag = 'input window, operand 6, single buffered']
    #allocation12 [shape = 's32[1]{0}', space=sflag, size = 0x4, scoped, tag = 'scoped memory for tpu_custom_call.1']
    #allocation13 [shape = 'u8[16384]{0}', space=vmem, size = 0x4000, scoped, tag = 'input window, operand 7, single buffered']
    #allocation14 [shape = 'u8[512]{0}', space=vmem, size = 0x400, scoped, tag = 'input window, operand 8, single buffered']
    #allocation15 [shape = 's32[1]{0}', space=sflag, size = 0x4, scoped, tag = 'scoped memory for tpu_custom_call.1']
    #allocation16 [shape = 'u8[1024]{0}', space=vmem, size = 0x400, scoped, tag = 'output window, operand 0, single buffered']
    %14 = vsyncpa [#allocation3], 0
    %15 = vsyncpa [#allocation6], 0
    %16 = vsyncpa [#allocation9], 0
    %17 = vsyncpa [#allocation12], 0
    %18 = vsyncpa [#allocation15], 0
    %19 = vsyncpa [#allocation4], 0
    // Predicated region
    $region2: #{tpu_custom_call.1} parent=1 // pred_check
      _
    $region3: #{tpu_custom_call.1} parent=1 // pred_check_branch
      %21 = sbr.rel (0) target = $region5
    $region4: #{tpu_custom_call.1} parent=1 // pred_region
      %23 = vsyncadd [#allocation3], 0
      %s25 = sshll.u32 %s0, 4
      %s26 = int_to_ptr.hbm [resolvable:$true] %s25
      %s27 = sshll.u32 [#allocation2], 4
      %s28 = int_to_ptr.vmem [resolvable:$true] %s27
      %30 = dma.hbm_to_vmem [thread:$0]  %s26, 64, %s28, [#allocation3]
    $region5: #{tpu_custom_call.1} parent=1 // pred_fallthru
      _
    // Predicated region
    $region6: #{tpu_custom_call.1} parent=1 // pred_check
      _
    $region7: #{tpu_custom_call.1} parent=1 // pred_check_branch
      %32 = sbr.rel (0) target = $region9
    $region8: #{tpu_custom_call.1} parent=1 // pred_region
      %34 = vsyncadd [#allocation6], 0
      %s35 = sshll.u32 %s1, 4
      %s36 = int_to_ptr.hbm [resolvable:$true] %s35
      %s37 = sshll.u32 [#allocation5], 4
      %s38 = int_to_ptr.vmem [resolvable:$true] %s37
      %43 = dma.hbm_to_vmem [thread:$0]  %s36, 25600, %s38, [#allocation6], 1280, 1280, 80
    $region9: #{tpu_custom_call.1} parent=1 // pred_fallthru
      _
    // Predicated region
    $region10: #{tpu_custom_call.1} parent=1 // pred_check
      _
    $region11: #{tpu_custom_call.1} parent=1 // pred_check_branch
      %45 = sbr.rel (0) target = $region13
    $region12: #{tpu_custom_call.1} parent=1 // pred_region
      %47 = vsyncadd [#allocation6], 0
      %s49 = sshll.u32 %s2, 4
      %s50 = int_to_ptr.hbm [resolvable:$true] %s49
      %s51 = sshll.u32 [#allocation7], 4
      %s52 = int_to_ptr.vmem [resolvable:$true] %s51
      %54 = dma.hbm_to_vmem [thread:$0]  %s50, 80, %s52, [#allocation6]
    $region13: #{tpu_custom_call.1} parent=1 // pred_fallthru
      _
    // Predicated region
    $region14: #{tpu_custom_call.1} parent=1 // pred_check
      _
    $region15: #{tpu_custom_call.1} parent=1 // pred_check_branch
      %56 = sbr.rel (0) target = $region17
    $region16: #{tpu_custom_call.1} parent=1 // pred_region
      %58 = vsyncadd [#allocation9], 0
      %s59 = sshll.u32 %s3, 4
      %s60 = int_to_ptr.hbm [resolvable:$true] %s59
      %s61 = sshll.u32 [#allocation8], 4
      %s62 = int_to_ptr.vmem [resolvable:$true] %s61
      %67 = dma.hbm_to_vmem [thread:$0]  %s60, 40960, %s62, [#allocation9], 512, 512, 32
    $region17: #{tpu_custom_call.1} parent=1 // pred_fallthru
      _
    // Predicated region
    $region18: #{tpu_custom_call.1} parent=1 // pred_check
      _
    $region19: #{tpu_custom_call.1} parent=1 // pred_check_branch
      %69 = sbr.rel (0) target = $region21
    $region20: #{tpu_custom_call.1} parent=1 // pred_region
      %71 = vsyncadd [#allocation9], 0
      %s73 = sshll.u32 %s4, 4
      %s74 = int_to_ptr.hbm [resolvable:$true] %s73
      %s75 = sshll.u32 [#allocation10], 4
      %s76 = int_to_ptr.vmem [resolvable:$true] %s75
      %78 = dma.hbm_to_vmem [thread:$0]  %s74, 32, %s76, [#allocation9]
    $region21: #{tpu_custom_call.1} parent=1 // pred_fallthru
      _
    // Predicated region
    $region22: #{tpu_custom_call.1} parent=1 // pred_check
      _
    $region23: #{tpu_custom_call.1} parent=1 // pred_check_branch
      %80 = sbr.rel (0) target = $region25
    $region24: #{tpu_custom_call.1} parent=1 // pred_region
      _
    $region25: #{tpu_custom_call.1} parent=1 // pred_fallthru
      _
    // Predicated region
    $region26: #{tpu_custom_call.1} parent=1 // pred_check
      _
    $region27: #{tpu_custom_call.1} parent=1 // pred_check_branch
      %82 = sbr.rel (0) target = $region29
    $region28: #{tpu_custom_call.1} parent=1 // pred_region
      %84 = vsyncadd [#allocation12], 0
      %s86 = sshll.u32 %s6, 4
      %s87 = int_to_ptr.hbm [resolvable:$true] %s86
      %s88 = sshll.u32 [#allocation11], 4
      %s89 = int_to_ptr.vmem [resolvable:$true] %s88
      %91 = dma.hbm_to_vmem [thread:$0]  %s87, 16, %s89, [#allocation12]
    $region29: #{tpu_custom_call.1} parent=1 // pred_fallthru
      _
    // Predicated region
    $region30: #{tpu_custom_call.1} parent=1 // pred_check
      _
    $region31: #{tpu_custom_call.1} parent=1 // pred_check_branch
      %93 = sbr.rel (0) target = $region33
    $region32: #{tpu_custom_call.1} parent=1 // pred_region
      %95 = vsyncadd [#allocation12], 0
      %s96 = sshll.u32 %s7, 4
      %s97 = int_to_ptr.hbm [resolvable:$true] %s96
      %s98 = sshll.u32 [#allocation13], 4
      %s99 = int_to_ptr.vmem [resolvable:$true] %s98
      %104 = dma.hbm_to_vmem [thread:$0]  %s97, 512, %s99, [#allocation12], 64, 64, 4
    $region33: #{tpu_custom_call.1} parent=1 // pred_fallthru
      _
    // Predicated region
    $region34: #{tpu_custom_call.1} parent=1 // pred_check
      _
    $region35: #{tpu_custom_call.1} parent=1 // pred_check_branch
      %106 = sbr.rel (0) target = $region37
    $region36: #{tpu_custom_call.1} parent=1 // pred_region
      %108 = vsyncadd [#allocation15], 0
      %s110 = sshll.u32 %s8, 4
      %s111 = int_to_ptr.hbm [resolvable:$true] %s110
      %s112 = sshll.u32 [#allocation14], 4
      %s113 = int_to_ptr.vmem [resolvable:$true] %s112
      %115 = dma.hbm_to_vmem [thread:$0]  %s111, 16, %s113, [#allocation15]
    $region37: #{tpu_custom_call.1} parent=1 // pred_fallthru
      _
    // Predicated region
    $region38: #{tpu_custom_call.1} parent=1 // pred_check
      _
    $region39: #{tpu_custom_call.1} parent=1 // pred_check_branch
      %117 = sbr.rel (0) target = $region41
    $region40: #{tpu_custom_call.1} parent=1 // pred_region
      %119 = dma.done [#allocation3], 64
    $region41: #{tpu_custom_call.1} parent=1 // pred_fallthru
      _
    // Predicated region
    $region42: #{tpu_custom_call.1} parent=1 // pred_check
      _
    $region43: #{tpu_custom_call.1} parent=1 // pred_check_branch
      %121 = sbr.rel (0) target = $region45
    $region44: #{tpu_custom_call.1} parent=1 // pred_region
      %123 = dma.done [#allocation6], 25600
    $region45: #{tpu_custom_call.1} parent=1 // pred_fallthru
      _
    // Predicated region
    $region46: #{tpu_custom_call.1} parent=1 // pred_check
      _
    $region47: #{tpu_custom_call.1} parent=1 // pred_check_branch
      %125 = sbr.rel (0) target = $region49
    $region48: #{tpu_custom_call.1} parent=1 // pred_region
      %127 = dma.done [#allocation6], 80
    $region49: #{tpu_custom_call.1} parent=1 // pred_fallthru
      _
    // Predicated region
    $region50: #{tpu_custom_call.1} parent=1 // pred_check
      _
    $region51: #{tpu_custom_call.1} parent=1 // pred_check_branch
      %129 = sbr.rel (0) target = $region53
    $region52: #{tpu_custom_call.1} parent=1 // pred_region
      %131 = dma.done [#allocation9], 40960
    $region53: #{tpu_custom_call.1} parent=1 // pred_fallthru
      _
    // Predicated region
    $region54: #{tpu_custom_call.1} parent=1 // pred_check
      _
    $region55: #{tpu_custom_call.1} parent=1 // pred_check_branch
      %133 = sbr.rel (0) target = $region57
    $region56: #{tpu_custom_call.1} parent=1 // pred_region
      %135 = dma.done [#allocation9], 32
    $region57: #{tpu_custom_call.1} parent=1 // pred_fallthru
      _
    // Predicated region
    $region58: #{tpu_custom_call.1} parent=1 // pred_check
      _
    $region59: #{tpu_custom_call.1} parent=1 // pred_check_branch
      %137 = sbr.rel (0) target = $region61
    $region60: #{tpu_custom_call.1} parent=1 // pred_region
      %139 = dma.done [#allocation12], 16
    $region61: #{tpu_custom_call.1} parent=1 // pred_fallthru
      _
    // Predicated region
    $region62: #{tpu_custom_call.1} parent=1 // pred_check
      _
    $region63: #{tpu_custom_call.1} parent=1 // pred_check_branch
      %141 = sbr.rel (0) target = $region65
    $region64: #{tpu_custom_call.1} parent=1 // pred_region
      %143 = dma.done [#allocation12], 512
    $region65: #{tpu_custom_call.1} parent=1 // pred_fallthru
      _
    // Predicated region
    $region66: #{tpu_custom_call.1} parent=1 // pred_check
      _
    $region67: #{tpu_custom_call.1} parent=1 // pred_check_branch
      %145 = sbr.rel (0) target = $region69
    $region68: #{tpu_custom_call.1} parent=1 // pred_region
      %147 = dma.done [#allocation15], 16
    $region69: #{tpu_custom_call.1} parent=1 // pred_fallthru
      _
    %v149 = vld [vmem:[#allocation2] sm:$0xf]
    %151 = vst [vmem:[#allocation1] ss:$4 sm:$0xff] %v149
    %v152 = vld.sshfl [vmem:[#allocation1] sm:$0xff pattern:$0x73625140]
    %v153 = vld.sshfl [vmem:[#allocation1 + $0x8] sm:$0xff pattern:$0x73625140]
    %v156 = vpack.c.bf16 %v152, %v152
    %v157 = vpack.c.bf16 %v153, %v153
    %v158 = vld [vmem:[#allocation7] sm:$0x1f]
    %v159 = vld [vmem:[#allocation5] sm:$0xff]
    %v160 = vld [vmem:[#allocation5 + $0x8] sm:$0xff]
    %v161 = vld [vmem:[#allocation5 + $0x10] sm:$0xf]
    %v162 = vld [vmem:[#allocation5 + $0x50] sm:$0xff]
    %v163 = vld [vmem:[#allocation5 + $0x58] sm:$0xff]
    %v164 = vld [vmem:[#allocation5 + $0x60] sm:$0xf]
    %v165 = vld [vmem:[#allocation5 + $0xa0] sm:$0xff]
    %v166 = vld [vmem:[#allocation5 + $0xa8] sm:$0xff]
    %v167 = vld [vmem:[#allocation5 + $0xb0] sm:$0xf]
    %v168 = vld [vmem:[#allocation5 + $0xf0] sm:$0xff]
    %v169 = vld [vmem:[#allocation5 + $0xf8] sm:$0xff]
    %v170 = vld [vmem:[#allocation5 + $0x100] sm:$0xf]
    %v171 = vld [vmem:[#allocation5 + $0x140] sm:$0xff]
    %v172 = vld [vmem:[#allocation5 + $0x148] sm:$0xff]
    %v173 = vld [vmem:[#allocation5 + $0x150] sm:$0xf]
    %v174 = vld [vmem:[#allocation5 + $0x190] sm:$0xff]
    %v175 = vld [vmem:[#allocation5 + $0x198] sm:$0xff]
    %v176 = vld [vmem:[#allocation5 + $0x1a0] sm:$0xf]
    %v177 = vld [vmem:[#allocation5 + $0x1e0] sm:$0xff]
    %v178 = vld [vmem:[#allocation5 + $0x1e8] sm:$0xff]
    %v179 = vld [vmem:[#allocation5 + $0x1f0] sm:$0xf]
    %v180 = vld [vmem:[#allocation5 + $0x230] sm:$0xff]
    %v181 = vld [vmem:[#allocation5 + $0x238] sm:$0xff]
    %v182 = vld [vmem:[#allocation5 + $0x240] sm:$0xf]
    %v183 = vld [vmem:[#allocation5 + $0x280] sm:$0xff]
    %v184 = vld [vmem:[#allocation5 + $0x288] sm:$0xff]
    %v185 = vld [vmem:[#allocation5 + $0x290] sm:$0xf]
    %v186 = vld [vmem:[#allocation5 + $0x2d0] sm:$0xff]
    %v187 = vld [vmem:[#allocation5 + $0x2d8] sm:$0xff]
    %v188 = vld [vmem:[#allocation5 + $0x2e0] sm:$0xf]
    %v189 = vld [vmem:[#allocation5 + $0x320] sm:$0xff]
    %v190 = vld [vmem:[#allocation5 + $0x328] sm:$0xff]
    %v191 = vld [vmem:[#allocation5 + $0x330] sm:$0xf]
    %v192 = vld [vmem:[#allocation5 + $0x370] sm:$0xff]
    %v193 = vld [vmem:[#allocation5 + $0x378] sm:$0xff]
    %v194 = vld [vmem:[#allocation5 + $0x380] sm:$0xf]
    %v195 = vld [vmem:[#allocation5 + $0x3c0] sm:$0xff]
    %v196 = vld [vmem:[#allocation5 + $0x3c8] sm:$0xff]
    %v197 = vld [vmem:[#allocation5 + $0x3d0] sm:$0xf]
    %v198 = vld [vmem:[#allocation5 + $0x410] sm:$0xff]
    %v199 = vld [vmem:[#allocation5 + $0x418] sm:$0xff]
    %v200 = vld [vmem:[#allocation5 + $0x420] sm:$0xf]
    %v201 = vld [vmem:[#allocation5 + $0x460] sm:$0xff]
    %v202 = vld [vmem:[#allocation5 + $0x468] sm:$0xff]
    %v203 = vld [vmem:[#allocation5 + $0x470] sm:$0xf]
    %v204 = vld [vmem:[#allocation5 + $0x4b0] sm:$0xff]
    %v205 = vld [vmem:[#allocation5 + $0x4b8] sm:$0xff]
    %v206 = vld [vmem:[#allocation5 + $0x4c0] sm:$0xf]
    %v207 = vld [vmem:[#allocation5 + $0x500] sm:$0xff]
    %v208 = vld [vmem:[#allocation5 + $0x508] sm:$0xff]
    %v209 = vld [vmem:[#allocation5 + $0x510] sm:$0xf]
    %v210 = vld [vmem:[#allocation5 + $0x550] sm:$0xff]
    %v211 = vld [vmem:[#allocation5 + $0x558] sm:$0xff]
    %v212 = vld [vmem:[#allocation5 + $0x560] sm:$0xf]
    %v213 = vld [vmem:[#allocation5 + $0x5a0] sm:$0xff]
    %v214 = vld [vmem:[#allocation5 + $0x5a8] sm:$0xff]
    %v215 = vld [vmem:[#allocation5 + $0x5b0] sm:$0xf]
    %v216 = vld [vmem:[#allocation5 + $0x5f0] sm:$0xff]
    %v217 = vld [vmem:[#allocation5 + $0x5f8] sm:$0xff]
    %v218 = vld [vmem:[#allocation5 + $0x600] sm:$0xf]
    %v220 = vperm.slane %v158, 0
    %v221 = vperm.slane %v158, 1
    %v222 = vperm.slane %v158, 2
    %v223 = vperm.slane %v158, 3
    %v224 = vperm.slane %v158, 4
    %v290 = vunpack.c.l.b16 %v159
    %v291 = vunpack.c.h.b16 %v159
    %v292 = vunpack.c.l.b16 %v160
    %v293 = vunpack.c.h.b16 %v160
    %v294 = vunpack.c.l.b16 %v161
    %v295 = vunpack.c.l.b16 %v162
    %v296 = vunpack.c.h.b16 %v162
    %v297 = vunpack.c.l.b16 %v163
    %v298 = vunpack.c.h.b16 %v163
    %v299 = vunpack.c.l.b16 %v164
    %v300 = vunpack.c.l.b16 %v165
    %v301 = vunpack.c.h.b16 %v165
    %v302 = vunpack.c.l.b16 %v166
    %v303 = vunpack.c.h.b16 %v166
    %v304 = vunpack.c.l.b16 %v167
    %v305 = vunpack.c.l.b16 %v168
    %v306 = vunpack.c.h.b16 %v168
    %v307 = vunpack.c.l.b16 %v169
    %v308 = vunpack.c.h.b16 %v169
    %v309 = vunpack.c.l.b16 %v170
    %v310 = vunpack.c.l.b16 %v171
    %v311 = vunpack.c.h.b16 %v171
    %v312 = vunpack.c.l.b16 %v172
    %v313 = vunpack.c.h.b16 %v172
    %v314 = vunpack.c.l.b16 %v173
    %v315 = vunpack.c.l.b16 %v174
    %v316 = vunpack.c.h.b16 %v174
    %v317 = vunpack.c.l.b16 %v175
    %v318 = vunpack.c.h.b16 %v175
    %v319 = vunpack.c.l.b16 %v176
    %v320 = vunpack.c.l.b16 %v177
    %v321 = vunpack.c.h.b16 %v177
    %v322 = vunpack.c.l.b16 %v178
    %v323 = vunpack.c.h.b16 %v178
    %v324 = vunpack.c.l.b16 %v179
    %v325 = vunpack.c.l.b16 %v180
    %v326 = vunpack.c.h.b16 %v180
    %v327 = vunpack.c.l.b16 %v181
    %v328 = vunpack.c.h.b16 %v181
    %v329 = vunpack.c.l.b16 %v182
    %v330 = vunpack.c.l.b16 %v183
    %v331 = vunpack.c.h.b16 %v183
    %v332 = vunpack.c.l.b16 %v184
    %v333 = vunpack.c.h.b16 %v184
    %v334 = vunpack.c.l.b16 %v185
    %v335 = vunpack.c.l.b16 %v186
    %v336 = vunpack.c.h.b16 %v186
    %v337 = vunpack.c.l.b16 %v187
    %v338 = vunpack.c.h.b16 %v187
    %v339 = vunpack.c.l.b16 %v188
    %v340 = vunpack.c.l.b16 %v189
    %v341 = vunpack.c.h.b16 %v189
    %v342 = vunpack.c.l.b16 %v190
    %v343 = vunpack.c.h.b16 %v190
    %v344 = vunpack.c.l.b16 %v191
    %v345 = vunpack.c.l.b16 %v192
    %v346 = vunpack.c.h.b16 %v192
    %v347 = vunpack.c.l.b16 %v193
    %v348 = vunpack.c.h.b16 %v193
    %v349 = vunpack.c.l.b16 %v194
    %v350 = vunpack.c.l.b16 %v195
    %v351 = vunpack.c.h.b16 %v195
    %v352 = vunpack.c.l.b16 %v196
    %v353 = vunpack.c.h.b16 %v196
    %v354 = vunpack.c.l.b16 %v197
    %v355 = vunpack.c.l.b16 %v198
    %v356 = vunpack.c.h.b16 %v198
    %v357 = vunpack.c.l.b16 %v199
    %v358 = vunpack.c.h.b16 %v199
    %v359 = vunpack.c.l.b16 %v200
    %v360 = vunpack.c.l.b16 %v201
    %v361 = vunpack.c.h.b16 %v201
    %v362 = vunpack.c.l.b16 %v202
    %v363 = vunpack.c.h.b16 %v202
    %v364 = vunpack.c.l.b16 %v203
    %v365 = vunpack.c.l.b16 %v204
    %v366 = vunpack.c.h.b16 %v204
    %v367 = vunpack.c.l.b16 %v205
    %v368 = vunpack.c.h.b16 %v205
    %v369 = vunpack.c.l.b16 %v206
    %v370 = vunpack.c.l.b16 %v207
    %v371 = vunpack.c.h.b16 %v207
    %v372 = vunpack.c.l.b16 %v208
    %v373 = vunpack.c.h.b16 %v208
    %v374 = vunpack.c.l.b16 %v209
    %v375 = vunpack.c.l.b16 %v210
    %v376 = vunpack.c.h.b16 %v210
    %v377 = vunpack.c.l.b16 %v211
    %v378 = vunpack.c.h.b16 %v211
    %v379 = vunpack.c.l.b16 %v212
    %v380 = vunpack.c.l.b16 %v213
    %v381 = vunpack.c.h.b16 %v213
    %v382 = vunpack.c.l.b16 %v214
    %v383 = vunpack.c.h.b16 %v214
    %v384 = vunpack.c.l.b16 %v215
    %v385 = vunpack.c.l.b16 %v216
    %v386 = vunpack.c.h.b16 %v216
    %v387 = vunpack.c.l.b16 %v217
    %v388 = vunpack.c.h.b16 %v217
    %v389 = vunpack.c.l.b16 %v218
    %v390 = vpack.c.b16 %v295, %v290
    %v391 = vpack.c.b16 %v296, %v291
    %v392 = vpack.c.b16 %v297, %v292
    %v393 = vpack.c.b16 %v298, %v293
    %v394 = vpack.c.b16 %v299, %v294
    %v395 = vpack.c.b16 %v305, %v300
    %v396 = vpack.c.b16 %v306, %v301
    %v397 = vpack.c.b16 %v307, %v302
    %v398 = vpack.c.b16 %v308, %v303
    %v399 = vpack.c.b16 %v309, %v304
    %v400 = vpack.c.b16 %v315, %v310
    %v401 = vpack.c.b16 %v316, %v311
    %v402 = vpack.c.b16 %v317, %v312
    %v403 = vpack.c.b16 %v318, %v313
    %v404 = vpack.c.b16 %v319, %v314
    %v405 = vpack.c.b16 %v325, %v320
    %v406 = vpack.c.b16 %v326, %v321
    %v407 = vpack.c.b16 %v327, %v322
    %v408 = vpack.c.b16 %v328, %v323
    %v409 = vpack.c.b16 %v329, %v324
    %v410 = vpack.c.b16 %v335, %v330
    %v411 = vpack.c.b16 %v336, %v331
    %v412 = vpack.c.b16 %v337, %v332
    %v413 = vpack.c.b16 %v338, %v333
    %v414 = vpack.c.b16 %v339, %v334
    %v415 = vpack.c.b16 %v345, %v340
    %v416 = vpack.c.b16 %v346, %v341
    %v417 = vpack.c.b16 %v347, %v342
    %v418 = vpack.c.b16 %v348, %v343
    %v419 = vpack.c.b16 %v349, %v344
    %v420 = vpack.c.b16 %v355, %v350
    %v421 = vpack.c.b16 %v356, %v351
    %v422 = vpack.c.b16 %v357, %v352
    %v423 = vpack.c.b16 %v358, %v353
    %v424 = vpack.c.b16 %v359, %v354
    %v425 = vpack.c.b16 %v365, %v360
    %v426 = vpack.c.b16 %v366, %v361
    %v427 = vpack.c.b16 %v367, %v362
    %v428 = vpack.c.b16 %v368, %v363
    %v429 = vpack.c.b16 %v369, %v364
    %v430 = vpack.c.b16 %v375, %v370
    %v431 = vpack.c.b16 %v376, %v371
    %v432 = vpack.c.b16 %v377, %v372
    %v433 = vpack.c.b16 %v378, %v373
    %v434 = vpack.c.b16 %v379, %v374
    %v435 = vpack.c.b16 %v385, %v380
    %v436 = vpack.c.b16 %v386, %v381
    %v437 = vpack.c.b16 %v387, %v382
    %v438 = vpack.c.b16 %v388, %v383
    %v439 = vpack.c.b16 %v389, %v384
    %vm490 = vcmask 261120
    %v492 = vsel %vm490, %v157, 0
    %494 = vmatpush.bf16.msra.mxu0 %v425
    %495 = vmatpush.bf16.msra.mxu0 %v420
    %496 = vmatpush.bf16.msra.mxu0 %v415
    %497 = vmatpush.bf16.msra.mxu0 %v410
    %498 = vmatpush.bf16.msra.mxu0 %v405
    %499 = vmatpush.bf16.msra.mxu0 %v400
    %500 = vmatpush.bf16.msra.mxu0 %v395
    %501 = vmatpush.bf16.msra.mxu0 %v390
    %502 = vmatmul.bf16.gmra.mxu0 %v156
    %v503 = vpop.f32.mrf.mxu0
    %v504 = vadd.f32 %v220, %v503
    %v505 = vpop.f32.mrf.mxu0
    %506 = vdwg.mxu0
    %507 = vmatpush.bf16.msra.mxu0 0
    %508 = vmatpush.bf16.msra.mxu0 0
    %509 = vmatpush.bf16.msra.mxu0 0
    %510 = vmatpush.bf16.msra.mxu0 0
    %511 = vmatpush.bf16.msra.mxu0 0
    %512 = vmatpush.bf16.msra.mxu0 0
    %513 = vmatpush.bf16.msra.mxu0 %v435
    %514 = vmatpush.bf16.msra.mxu0 %v430
    %515 = vmatmul.bf16.gmra.mxu0 %v492
    %v516 = vpop.f32.mrf.mxu0
    %v517 = vadd.f32 %v504, %v516
    %v518 = vpop.f32.mrf.mxu0
    %519 = vdwg.mxu0
    %520 = vmatpush.bf16.msra.mxu0 %v426
    %521 = vmatpush.bf16.msra.mxu0 %v421
    %522 = vmatpush.bf16.msra.mxu0 %v416
    %523 = vmatpush.bf16.msra.mxu0 %v411
    %524 = vmatpush.bf16.msra.mxu0 %v406
    %525 = vmatpush.bf16.msra.mxu0 %v401
    %526 = vmatpush.bf16.msra.mxu0 %v396
    %527 = vmatpush.bf16.msra.mxu0 %v391
    %528 = vmatmul.bf16.gmra.mxu0 %v156
    %v529 = vpop.f32.mrf.mxu0
    %v530 = vadd.f32 %v221, %v529
    %v531 = vpop.f32.mrf.mxu0
    %532 = vdwg.mxu0
    %533 = vmatpush.bf16.msra.mxu0 0
    %534 = vmatpush.bf16.msra.mxu0 0
    %535 = vmatpush.bf16.msra.mxu0 0
    %536 = vmatpush.bf16.msra.mxu0 0
    %537 = vmatpush.bf16.msra.mxu0 0
    %538 = vmatpush.bf16.msra.mxu0 0
    %539 = vmatpush.bf16.msra.mxu0 %v436
    %540 = vmatpush.bf16.msra.mxu0 %v431
    %541 = vmatmul.bf16.gmra.mxu0 %v492
    %v542 = vpop.f32.mrf.mxu0
    %v543 = vadd.f32 %v530, %v542
    %v544 = vpop.f32.mrf.mxu0
    %545 = vdwg.mxu0
    %546 = vmatpush.bf16.msra.mxu0 %v427
    %547 = vmatpush.bf16.msra.mxu0 %v422
    %548 = vmatpush.bf16.msra.mxu0 %v417
    %549 = vmatpush.bf16.msra.mxu0 %v412
    %550 = vmatpush.bf16.msra.mxu0 %v407
    %551 = vmatpush.bf16.msra.mxu0 %v402
    %552 = vmatpush.bf16.msra.mxu0 %v397
    %553 = vmatpush.bf16.msra.mxu0 %v392
    %554 = vmatmul.bf16.gmra.mxu0 %v156
    %v555 = vpop.f32.mrf.mxu0
    %v556 = vadd.f32 %v222, %v555
    %v557 = vpop.f32.mrf.mxu0
    %558 = vdwg.mxu0
    %559 = vmatpush.bf16.msra.mxu0 0
    %560 = vmatpush.bf16.msra.mxu0 0
    %561 = vmatpush.bf16.msra.mxu0 0
    %562 = vmatpush.bf16.msra.mxu0 0
    %563 = vmatpush.bf16.msra.mxu0 0
    %564 = vmatpush.bf16.msra.mxu0 0
    %565 = vmatpush.bf16.msra.mxu0 %v437
    %566 = vmatpush.bf16.msra.mxu0 %v432
    %567 = vmatmul.bf16.gmra.mxu0 %v492
    %v568 = vpop.f32.mrf.mxu0
    %v569 = vadd.f32 %v556, %v568
    %v570 = vpop.f32.mrf.mxu0
    %571 = vdwg.mxu0
    %572 = vmatpush.bf16.msra.mxu0 %v428
    %573 = vmatpush.bf16.msra.mxu0 %v423
    %574 = vmatpush.bf16.msra.mxu0 %v418
    %575 = vmatpush.bf16.msra.mxu0 %v413
    %576 = vmatpush.bf16.msra.mxu0 %v408
    %577 = vmatpush.bf16.msra.mxu0 %v403
    %578 = vmatpush.bf16.msra.mxu0 %v398
    %579 = vmatpush.bf16.msra.mxu0 %v393
    %580 = vmatmul.bf16.gmra.mxu0 %v156
    %v581 = vpop.f32.mrf.mxu0
    %v582 = vadd.f32 %v223, %v581
    %v583 = vpop.f32.mrf.mxu0
    %584 = vdwg.mxu0
    %585 = vmatpush.bf16.msra.mxu0 0
    %586 = vmatpush.bf16.msra.mxu0 0
    %587 = vmatpush.bf16.msra.mxu0 0
    %588 = vmatpush.bf16.msra.mxu0 0
    %589 = vmatpush.bf16.msra.mxu0 0
    %590 = vmatpush.bf16.msra.mxu0 0
    %591 = vmatpush.bf16.msra.mxu0 %v438
    %592 = vmatpush.bf16.msra.mxu0 %v433
    %593 = vmatmul.bf16.gmra.mxu0 %v492
    %v594 = vpop.f32.mrf.mxu0
    %v595 = vadd.f32 %v582, %v594
    %v596 = vpop.f32.mrf.mxu0
    %597 = vdwg.mxu0
    %598 = vmatpush.bf16.msra.mxu0 %v429
    %599 = vmatpush.bf16.msra.mxu0 %v424
    %600 = vmatpush.bf16.msra.mxu0 %v419
    %601 = vmatpush.bf16.msra.mxu0 %v414
    %602 = vmatpush.bf16.msra.mxu0 %v409
    %603 = vmatpush.bf16.msra.mxu0 %v404
    %604 = vmatpush.bf16.msra.mxu0 %v399
    %605 = vmatpush.bf16.msra.mxu0 %v394
    %606 = vmatmul.bf16.gmra.mxu0 %v156
    %v607 = vpop.f32.mrf.mxu0
    %v608 = vadd.f32 %v224, %v607
    %v609 = vpop.f32.mrf.mxu0
    %610 = vdwg.mxu0
    %611 = vmatpush.bf16.msra.mxu0 0
    %612 = vmatpush.bf16.msra.mxu0 0
    %613 = vmatpush.bf16.msra.mxu0 0
    %614 = vmatpush.bf16.msra.mxu0 0
    %615 = vmatpush.bf16.msra.mxu0 0
    %616 = vmatpush.bf16.msra.mxu0 0
    %617 = vmatpush.bf16.msra.mxu0 %v439
    %618 = vmatpush.bf16.msra.mxu0 %v434
    %619 = vmatmul.bf16.gmra.mxu0 %v492
    %v620 = vpop.f32.mrf.mxu0
    %v621 = vadd.f32 %v608, %v620
    %v622 = vpop.f32.mrf.mxu0
    %623 = vdwg.mxu0
    %v624 = vmax.f32 %v517, 0.0
    %v625 = vmax.f32 %v543, 0.0
    %v626 = vmax.f32 %v569, 0.0
    %v627 = vmax.f32 %v595, 0.0
    %v628 = vmax.f32 %v621, 0.0
    %v629 = vld [vmem:[#allocation5 + $0x14] sm:$0xff]
    %v630 = vld [vmem:[#allocation5 + $0x1c] sm:$0xff]
    %v631 = vld [vmem:[#allocation5 + $0x24] sm:$0xf]
    %v632 = vld [vmem:[#allocation5 + $0x64] sm:$0xff]
    %v633 = vld [vmem:[#allocation5 + $0x6c] sm:$0xff]
    %v634 = vld [vmem:[#allocation5 + $0x74] sm:$0xf]
    %v635 = vld [vmem:[#allocation5 + $0xb4] sm:$0xff]
    %v636 = vld [vmem:[#allocation5 + $0xbc] sm:$0xff]
    %v637 = vld [vmem:[#allocation5 + $0xc4] sm:$0xf]
    %v638 = vld [vmem:[#allocation5 + $0x104] sm:$0xff]
    %v639 = vld [vmem:[#allocation5 + $0x10c] sm:$0xff]
    %v640 = vld [vmem:[#allocation5 + $0x114] sm:$0xf]
    %v641 = vld [vmem:[#allocation5 + $0x154] sm:$0xff]
    %v642 = vld [vmem:[#allocation5 + $0x15c] sm:$0xff]
    %v643 = vld [vmem:[#allocation5 + $0x164] sm:$0xf]
    %v644 = vld [vmem:[#allocation5 + $0x1a4] sm:$0xff]
    %v645 = vld [vmem:[#allocation5 + $0x1ac] sm:$0xff]
    %v646 = vld [vmem:[#allocation5 + $0x1b4] sm:$0xf]
    %v647 = vld [vmem:[#allocation5 + $0x1f4] sm:$0xff]
    %v648 = vld [vmem:[#allocation5 + $0x1fc] sm:$0xff]
    %v649 = vld [vmem:[#allocation5 + $0x204] sm:$0xf]
    %v650 = vld [vmem:[#allocation5 + $0x244] sm:$0xff]
    %v651 = vld [vmem:[#allocation5 + $0x24c] sm:$0xff]
    %v652 = vld [vmem:[#allocation5 + $0x254] sm:$0xf]
    %v653 = vld [vmem:[#allocation5 + $0x294] sm:$0xff]
    %v654 = vld [vmem:[#allocation5 + $0x29c] sm:$0xff]
    %v655 = vld [vmem:[#allocation5 + $0x2a4] sm:$0xf]
    %v656 = vld [vmem:[#allocation5 + $0x2e4] sm:$0xff]
    %v657 = vld [vmem:[#allocation5 + $0x2ec] sm:$0xff]
    %v658 = vld [vmem:[#allocation5 + $0x2f4] sm:$0xf]
    %v659 = vld [vmem:[#allocation5 + $0x334] sm:$0xff]
    %v660 = vld [vmem:[#allocation5 + $0x33c] sm:$0xff]
    %v661 = vld [vmem:[#allocation5 + $0x344] sm:$0xf]
    %v662 = vld [vmem:[#allocation5 + $0x384] sm:$0xff]
    %v663 = vld [vmem:[#allocation5 + $0x38c] sm:$0xff]
    %v664 = vld [vmem:[#allocation5 + $0x394] sm:$0xf]
    %v665 = vld [vmem:[#allocation5 + $0x3d4] sm:$0xff]
    %v666 = vld [vmem:[#allocation5 + $0x3dc] sm:$0xff]
    %v667 = vld [vmem:[#allocation5 + $0x3e4] sm:$0xf]
    %v668 = vld [vmem:[#allocation5 + $0x424] sm:$0xff]
    %v669 = vld [vmem:[#allocation5 + $0x42c] sm:$0xff]
    %v670 = vld [vmem:[#allocation5 + $0x434] sm:$0xf]
    %v671 = vld [vmem:[#allocation5 + $0x474] sm:$0xff]
    %v672 = vld [vmem:[#allocation5 + $0x47c] sm:$0xff]
    %v673 = vld [vmem:[#allocation5 + $0x484] sm:$0xf]
    %v674 = vld [vmem:[#allocation5 + $0x4c4] sm:$0xff]
    %v675 = vld [vmem:[#allocation5 + $0x4cc] sm:$0xff]
    %v676 = vld [vmem:[#allocation5 + $0x4d4] sm:$0xf]
    %v677 = vld [vmem:[#allocation5 + $0x514] sm:$0xff]
    %v678 = vld [vmem:[#allocation5 + $0x51c] sm:$0xff]
    %v679 = vld [vmem:[#allocation5 + $0x524] sm:$0xf]
    %v680 = vld [vmem:[#allocation5 + $0x564] sm:$0xff]
    %v681 = vld [vmem:[#allocation5 + $0x56c] sm:$0xff]
    %v682 = vld [vmem:[#allocation5 + $0x574] sm:$0xf]
    %v683 = vld [vmem:[#allocation5 + $0x5b4] sm:$0xff]
    %v684 = vld [vmem:[#allocation5 + $0x5bc] sm:$0xff]
    %v685 = vld [vmem:[#allocation5 + $0x5c4] sm:$0xf]
    %v686 = vld [vmem:[#allocation5 + $0x604] sm:$0xff]
    %v687 = vld [vmem:[#allocation5 + $0x60c] sm:$0xff]
    %v688 = vld [vmem:[#allocation5 + $0x614] sm:$0xf]
    %v749 = vunpack.c.l.b16 %v629
    %v750 = vunpack.c.h.b16 %v629
    %v751 = vunpack.c.l.b16 %v630
    %v752 = vunpack.c.h.b16 %v630
    %v753 = vunpack.c.l.b16 %v631
    %v754 = vunpack.c.l.b16 %v632
    %v755 = vunpack.c.h.b16 %v632
    %v756 = vunpack.c.l.b16 %v633
    %v757 = vunpack.c.h.b16 %v633
    %v758 = vunpack.c.l.b16 %v634
    %v759 = vunpack.c.l.b16 %v635
    %v760 = vunpack.c.h.b16 %v635
    %v761 = vunpack.c.l.b16 %v636
    %v762 = vunpack.c.h.b16 %v636
    %v763 = vunpack.c.l.b16 %v637
    %v764 = vunpack.c.l.b16 %v638
    %v765 = vunpack.c.h.b16 %v638
    %v766 = vunpack.c.l.b16 %v639
    %v767 = vunpack.c.h.b16 %v639
    %v768 = vunpack.c.l.b16 %v640
    %v769 = vunpack.c.l.b16 %v641
    %v770 = vunpack.c.h.b16 %v641
    %v771 = vunpack.c.l.b16 %v642
    %v772 = vunpack.c.h.b16 %v642
    %v773 = vunpack.c.l.b16 %v643
    %v774 = vunpack.c.l.b16 %v644
    %v775 = vunpack.c.h.b16 %v644
    %v776 = vunpack.c.l.b16 %v645
    %v777 = vunpack.c.h.b16 %v645
    %v778 = vunpack.c.l.b16 %v646
    %v779 = vunpack.c.l.b16 %v647
    %v780 = vunpack.c.h.b16 %v647
    %v781 = vunpack.c.l.b16 %v648
    %v782 = vunpack.c.h.b16 %v648
    %v783 = vunpack.c.l.b16 %v649
    %v784 = vunpack.c.l.b16 %v650
    %v785 = vunpack.c.h.b16 %v650
    %v786 = vunpack.c.l.b16 %v651
    %v787 = vunpack.c.h.b16 %v651
    %v788 = vunpack.c.l.b16 %v652
    %v789 = vunpack.c.l.b16 %v653
    %v790 = vunpack.c.h.b16 %v653
    %v791 = vunpack.c.l.b16 %v654
    %v792 = vunpack.c.h.b16 %v654
    %v793 = vunpack.c.l.b16 %v655
    %v794 = vunpack.c.l.b16 %v656
    %v795 = vunpack.c.h.b16 %v656
    %v796 = vunpack.c.l.b16 %v657
    %v797 = vunpack.c.h.b16 %v657
    %v798 = vunpack.c.l.b16 %v658
    %v799 = vunpack.c.l.b16 %v659
    %v800 = vunpack.c.h.b16 %v659
    %v801 = vunpack.c.l.b16 %v660
    %v802 = vunpack.c.h.b16 %v660
    %v803 = vunpack.c.l.b16 %v661
    %v804 = vunpack.c.l.b16 %v662
    %v805 = vunpack.c.h.b16 %v662
    %v806 = vunpack.c.l.b16 %v663
    %v807 = vunpack.c.h.b16 %v663
    %v808 = vunpack.c.l.b16 %v664
    %v809 = vunpack.c.l.b16 %v665
    %v810 = vunpack.c.h.b16 %v665
    %v811 = vunpack.c.l.b16 %v666
    %v812 = vunpack.c.h.b16 %v666
    %v813 = vunpack.c.l.b16 %v667
    %v814 = vunpack.c.l.b16 %v668
    %v815 = vunpack.c.h.b16 %v668
    %v816 = vunpack.c.l.b16 %v669
    %v817 = vunpack.c.h.b16 %v669
    %v818 = vunpack.c.l.b16 %v670
    %v819 = vunpack.c.l.b16 %v671
    %v820 = vunpack.c.h.b16 %v671
    %v821 = vunpack.c.l.b16 %v672
    %v822 = vunpack.c.h.b16 %v672
    %v823 = vunpack.c.l.b16 %v673
    %v824 = vunpack.c.l.b16 %v674
    %v825 = vunpack.c.h.b16 %v674
    %v826 = vunpack.c.l.b16 %v675
    %v827 = vunpack.c.h.b16 %v675
    %v828 = vunpack.c.l.b16 %v676
    %v829 = vunpack.c.l.b16 %v677
    %v830 = vunpack.c.h.b16 %v677
    %v831 = vunpack.c.l.b16 %v678
    %v832 = vunpack.c.h.b16 %v678
    %v833 = vunpack.c.l.b16 %v679
    %v834 = vunpack.c.l.b16 %v680
    %v835 = vunpack.c.h.b16 %v680
    %v836 = vunpack.c.l.b16 %v681
    %v837 = vunpack.c.h.b16 %v681
    %v838 = vunpack.c.l.b16 %v682
    %v839 = vunpack.c.l.b16 %v683
    %v840 = vunpack.c.h.b16 %v683
    %v841 = vunpack.c.l.b16 %v684
    %v842 = vunpack.c.h.b16 %v684
    %v843 = vunpack.c.l.b16 %v685
    %v844 = vunpack.c.l.b16 %v686
    %v845 = vunpack.c.h.b16 %v686
    %v846 = vunpack.c.l.b16 %v687
    %v847 = vunpack.c.h.b16 %v687
    %v848 = vunpack.c.l.b16 %v688
    %v849 = vpack.c.b16 %v754, %v749
    %v850 = vpack.c.b16 %v755, %v750
    %v851 = vpack.c.b16 %v756, %v751
    %v852 = vpack.c.b16 %v757, %v752
    %v853 = vpack.c.b16 %v758, %v753
    %v854 = vpack.c.b16 %v764, %v759
    %v855 = vpack.c.b16 %v765, %v760
    %v856 = vpack.c.b16 %v766, %v761
    %v857 = vpack.c.b16 %v767, %v762
    %v858 = vpack.c.b16 %v768, %v763
    %v859 = vpack.c.b16 %v774, %v769
    %v860 = vpack.c.b16 %v775, %v770
    %v861 = vpack.c.b16 %v776, %v771
    %v862 = vpack.c.b16 %v777, %v772
    %v863 = vpack.c.b16 %v778, %v773
    %v864 = vpack.c.b16 %v784, %v779
    %v865 = vpack.c.b16 %v785, %v780
    %v866 = vpack.c.b16 %v786, %v781
    %v867 = vpack.c.b16 %v787, %v782
    %v868 = vpack.c.b16 %v788, %v783
    %v869 = vpack.c.b16 %v794, %v789
    %v870 = vpack.c.b16 %v795, %v790
    %v871 = vpack.c.b16 %v796, %v791
    %v872 = vpack.c.b16 %v797, %v792
    %v873 = vpack.c.b16 %v798, %v793
    %v874 = vpack.c.b16 %v804, %v799
    %v875 = vpack.c.b16 %v805, %v800
    %v876 = vpack.c.b16 %v806, %v801
    %v877 = vpack.c.b16 %v807, %v802
    %v878 = vpack.c.b16 %v808, %v803
    %v879 = vpack.c.b16 %v814, %v809
    %v880 = vpack.c.b16 %v815, %v810
    %v881 = vpack.c.b16 %v816, %v811
    %v882 = vpack.c.b16 %v817, %v812
    %v883 = vpack.c.b16 %v818, %v813
    %v884 = vpack.c.b16 %v824, %v819
    %v885 = vpack.c.b16 %v825, %v820
    %v886 = vpack.c.b16 %v826, %v821
    %v887 = vpack.c.b16 %v827, %v822
    %v888 = vpack.c.b16 %v828, %v823
    %v889 = vpack.c.b16 %v834, %v829
    %v890 = vpack.c.b16 %v835, %v830
    %v891 = vpack.c.b16 %v836, %v831
    %v892 = vpack.c.b16 %v837, %v832
    %v893 = vpack.c.b16 %v838, %v833
    %v894 = vpack.c.b16 %v844, %v839
    %v895 = vpack.c.b16 %v845, %v840
    %v896 = vpack.c.b16 %v846, %v841
    %v897 = vpack.c.b16 %v847, %v842
    %v898 = vpack.c.b16 %v848, %v843
    %949 = vmatpush.bf16.msra.mxu0 %v884
    %950 = vmatpush.bf16.msra.mxu0 %v879
    %951 = vmatpush.bf16.msra.mxu0 %v874
    %952 = vmatpush.bf16.msra.mxu0 %v869
    %953 = vmatpush.bf16.msra.mxu0 %v864
    %954 = vmatpush.bf16.msra.mxu0 %v859
    %955 = vmatpush.bf16.msra.mxu0 %v854
    %956 = vmatpush.bf16.msra.mxu0 %v849
    %957 = vmatmul.bf16.gmra.mxu0 %v156
    %v958 = vpop.f32.mrf.mxu0
    %v959 = vadd.f32 %v220, %v958
    %v960 = vpop.f32.mrf.mxu0
    %961 = vdwg.mxu0
    %962 = vmatpush.bf16.msra.mxu0 0
    %963 = vmatpush.bf16.msra.mxu0 0
    %964 = vmatpush.bf16.msra.mxu0 0
    %965 = vmatpush.bf16.msra.mxu0 0
    %966 = vmatpush.bf16.msra.mxu0 0
    %967 = vmatpush.bf16.msra.mxu0 0
    %968 = vmatpush.bf16.msra.mxu0 %v894
    %969 = vmatpush.bf16.msra.mxu0 %v889
    %970 = vmatmul.bf16.gmra.mxu0 %v492
    %v971 = vpop.f32.mrf.mxu0
    %v972 = vadd.f32 %v959, %v971
    %v973 = vpop.f32.mrf.mxu0
    %974 = vdwg.mxu0
    %975 = vmatpush.bf16.msra.mxu0 %v885
    %976 = vmatpush.bf16.msra.mxu0 %v880
    %977 = vmatpush.bf16.msra.mxu0 %v875
    %978 = vmatpush.bf16.msra.mxu0 %v870
    %979 = vmatpush.bf16.msra.mxu0 %v865
    %980 = vmatpush.bf16.msra.mxu0 %v860
    %981 = vmatpush.bf16.msra.mxu0 %v855
    %982 = vmatpush.bf16.msra.mxu0 %v850
    %983 = vmatmul.bf16.gmra.mxu0 %v156
    %v984 = vpop.f32.mrf.mxu0
    %v985 = vadd.f32 %v221, %v984
    %v986 = vpop.f32.mrf.mxu0
    %987 = vdwg.mxu0
    %988 = vmatpush.bf16.msra.mxu0 0
    %989 = vmatpush.bf16.msra.mxu0 0
    %990 = vmatpush.bf16.msra.mxu0 0
    %991 = vmatpush.bf16.msra.mxu0 0
    %992 = vmatpush.bf16.msra.mxu0 0
    %993 = vmatpush.bf16.msra.mxu0 0
    %994 = vmatpush.bf16.msra.mxu0 %v895
    %995 = vmatpush.bf16.msra.mxu0 %v890
    %996 = vmatmul.bf16.gmra.mxu0 %v492
    %v997 = vpop.f32.mrf.mxu0
    %v998 = vadd.f32 %v985, %v997
    %v999 = vpop.f32.mrf.mxu0
    %1000 = vdwg.mxu0
    %1001 = vmatpush.bf16.msra.mxu0 %v886
    %1002 = vmatpush.bf16.msra.mxu0 %v881
    %1003 = vmatpush.bf16.msra.mxu0 %v876
    %1004 = vmatpush.bf16.msra.mxu0 %v871
    %1005 = vmatpush.bf16.msra.mxu0 %v866
    %1006 = vmatpush.bf16.msra.mxu0 %v861
    %1007 = vmatpush.bf16.msra.mxu0 %v856
    %1008 = vmatpush.bf16.msra.mxu0 %v851
    %1009 = vmatmul.bf16.gmra.mxu0 %v156
    %v1010 = vpop.f32.mrf.mxu0
    %v1011 = vadd.f32 %v222, %v1010
    %v1012 = vpop.f32.mrf.mxu0
    %1013 = vdwg.mxu0
    %1014 = vmatpush.bf16.msra.mxu0 0
    %1015 = vmatpush.bf16.msra.mxu0 0
    %1016 = vmatpush.bf16.msra.mxu0 0
    %1017 = vmatpush.bf16.msra.mxu0 0
    %1018 = vmatpush.bf16.msra.mxu0 0
    %1019 = vmatpush.bf16.msra.mxu0 0
    %1020 = vmatpush.bf16.msra.mxu0 %v896
    %1021 = vmatpush.bf16.msra.mxu0 %v891
    %1022 = vmatmul.bf16.gmra.mxu0 %v492
    %v1023 = vpop.f32.mrf.mxu0
    %v1024 = vadd.f32 %v1011, %v1023
    %v1025 = vpop.f32.mrf.mxu0
    %1026 = vdwg.mxu0
    %1027 = vmatpush.bf16.msra.mxu0 %v887
    %1028 = vmatpush.bf16.msra.mxu0 %v882
    %1029 = vmatpush.bf16.msra.mxu0 %v877
    %1030 = vmatpush.bf16.msra.mxu0 %v872
    %1031 = vmatpush.bf16.msra.mxu0 %v867
    %1032 = vmatpush.bf16.msra.mxu0 %v862
    %1033 = vmatpush.bf16.msra.mxu0 %v857
    %1034 = vmatpush.bf16.msra.mxu0 %v852
    %1035 = vmatmul.bf16.gmra.mxu0 %v156
    %v1036 = vpop.f32.mrf.mxu0
    %v1037 = vadd.f32 %v223, %v1036
    %v1038 = vpop.f32.mrf.mxu0
    %1039 = vdwg.mxu0
    %1040 = vmatpush.bf16.msra.mxu0 0
    %1041 = vmatpush.bf16.msra.mxu0 0
    %1042 = vmatpush.bf16.msra.mxu0 0
    %1043 = vmatpush.bf16.msra.mxu0 0
    %1044 = vmatpush.bf16.msra.mxu0 0
    %1045 = vmatpush.bf16.msra.mxu0 0
    %1046 = vmatpush.bf16.msra.mxu0 %v897
    %1047 = vmatpush.bf16.msra.mxu0 %v892
    %1048 = vmatmul.bf16.gmra.mxu0 %v492
    %v1049 = vpop.f32.mrf.mxu0
    %v1050 = vadd.f32 %v1037, %v1049
    %v1051 = vpop.f32.mrf.mxu0
    %1052 = vdwg.mxu0
    %1053 = vmatpush.bf16.msra.mxu0 %v888
    %1054 = vmatpush.bf16.msra.mxu0 %v883
    %1055 = vmatpush.bf16.msra.mxu0 %v878
    %1056 = vmatpush.bf16.msra.mxu0 %v873
    %1057 = vmatpush.bf16.msra.mxu0 %v868
    %1058 = vmatpush.bf16.msra.mxu0 %v863
    %1059 = vmatpush.bf16.msra.mxu0 %v858
    %1060 = vmatpush.bf16.msra.mxu0 %v853
    %1061 = vmatmul.bf16.gmra.mxu0 %v156
    %v1062 = vpop.f32.mrf.mxu0
    %v1063 = vadd.f32 %v224, %v1062
    %v1064 = vpop.f32.mrf.mxu0
    %1065 = vdwg.mxu0
    %1066 = vmatpush.bf16.msra.mxu0 0
    %1067 = vmatpush.bf16.msra.mxu0 0
    %1068 = vmatpush.bf16.msra.mxu0 0
    %1069 = vmatpush.bf16.msra.mxu0 0
    %1070 = vmatpush.bf16.msra.mxu0 0
    %1071 = vmatpush.bf16.msra.mxu0 0
    %1072 = vmatpush.bf16.msra.mxu0 %v898
    %1073 = vmatpush.bf16.msra.mxu0 %v893
    %1074 = vmatmul.bf16.gmra.mxu0 %v492
    %v1075 = vpop.f32.mrf.mxu0
    %v1076 = vadd.f32 %v1063, %v1075
    %v1077 = vpop.f32.mrf.mxu0
    %1078 = vdwg.mxu0
    %v1079 = vmax.f32 %v972, 0.0
    %v1080 = vmax.f32 %v998, 0.0
    %v1081 = vmax.f32 %v1024, 0.0
    %v1082 = vmax.f32 %v1050, 0.0
    %v1083 = vmax.f32 %v1076, 0.0
    %v1084 = vmax.f32 %v624, %v1079
    %v1085 = vmax.f32 %v625, %v1080
    %v1086 = vmax.f32 %v626, %v1081
    %v1087 = vmax.f32 %v627, %v1082
    %v1088 = vmax.f32 %v628, %v1083
    %v1089 = vld [vmem:[#allocation5 + $0x28] sm:$0xff]
    %v1090 = vld [vmem:[#allocation5 + $0x30] sm:$0xff]
    %v1091 = vld [vmem:[#allocation5 + $0x38] sm:$0xf]
    %v1092 = vld [vmem:[#allocation5 + $0x78] sm:$0xff]
    %v1093 = vld [vmem:[#allocation5 + $0x80] sm:$0xff]
    %v1094 = vld [vmem:[#allocation5 + $0x88] sm:$0xf]
    %v1095 = vld [vmem:[#allocation5 + $0xc8] sm:$0xff]
    %v1096 = vld [vmem:[#allocation5 + $0xd0] sm:$0xff]
    %v1097 = vld [vmem:[#allocation5 + $0xd8] sm:$0xf]
    %v1098 = vld [vmem:[#allocation5 + $0x118] sm:$0xff]
    %v1099 = vld [vmem:[#allocation5 + $0x120] sm:$0xff]
    %v1100 = vld [vmem:[#allocation5 + $0x128] sm:$0xf]
    %v1101 = vld [vmem:[#allocation5 + $0x168] sm:$0xff]
    %v1102 = vld [vmem:[#allocation5 + $0x170] sm:$0xff]
    %v1103 = vld [vmem:[#allocation5 + $0x178] sm:$0xf]
    %v1104 = vld [vmem:[#allocation5 + $0x1b8] sm:$0xff]
    %v1105 = vld [vmem:[#allocation5 + $0x1c0] sm:$0xff]
    %v1106 = vld [vmem:[#allocation5 + $0x1c8] sm:$0xf]
    %v1107 = vld [vmem:[#allocation5 + $0x208] sm:$0xff]
    %v1108 = vld [vmem:[#allocation5 + $0x210] sm:$0xff]
    %v1109 = vld [vmem:[#allocation5 + $0x218] sm:$0xf]
    %v1110 = vld [vmem:[#allocation5 + $0x258] sm:$0xff]
    %v1111 = vld [vmem:[#allocation5 + $0x260] sm:$0xff]
    %v1112 = vld [vmem:[#allocation5 + $0x268] sm:$0xf]
    %v1113 = vld [vmem:[#allocation5 + $0x2a8] sm:$0xff]
    %v1114 = vld [vmem:[#allocation5 + $0x2b0] sm:$0xff]
    %v1115 = vld [vmem:[#allocation5 + $0x2b8] sm:$0xf]
    %v1116 = vld [vmem:[#allocation5 + $0x2f8] sm:$0xff]
    %v1117 = vld [vmem:[#allocation5 + $0x300] sm:$0xff]
    %v1118 = vld [vmem:[#allocation5 + $0x308] sm:$0xf]
    %v1119 = vld [vmem:[#allocation5 + $0x348] sm:$0xff]
    %v1120 = vld [vmem:[#allocation5 + $0x350] sm:$0xff]
    %v1121 = vld [vmem:[#allocation5 + $0x358] sm:$0xf]
    %v1122 = vld [vmem:[#allocation5 + $0x398] sm:$0xff]
    %v1123 = vld [vmem:[#allocation5 + $0x3a0] sm:$0xff]
    %v1124 = vld [vmem:[#allocation5 + $0x3a8] sm:$0xf]
    %v1125 = vld [vmem:[#allocation5 + $0x3e8] sm:$0xff]
    %v1126 = vld [vmem:[#allocation5 + $0x3f0] sm:$0xff]
    %v1127 = vld [vmem:[#allocation5 + $0x3f8] sm:$0xf]
    %v1128 = vld [vmem:[#allocation5 + $0x438] sm:$0xff]
    %v1129 = vld [vmem:[#allocation5 + $0x440] sm:$0xff]
    %v1130 = vld [vmem:[#allocation5 + $0x448] sm:$0xf]
    %v1131 = vld [vmem:[#allocation5 + $0x488] sm:$0xff]
    %v1132 = vld [vmem:[#allocation5 + $0x490] sm:$0xff]
    %v1133 = vld [vmem:[#allocation5 + $0x498] sm:$0xf]
    %v1134 = vld [vmem:[#allocation5 + $0x4d8] sm:$0xff]
    %v1135 = vld [vmem:[#allocation5 + $0x4e0] sm:$0xff]
    %v1136 = vld [vmem:[#allocation5 + $0x4e8] sm:$0xf]
    %v1137 = vld [vmem:[#allocation5 + $0x528] sm:$0xff]
    %v1138 = vld [vmem:[#allocation5 + $0x530] sm:$0xff]
    %v1139 = vld [vmem:[#allocation5 + $0x538] sm:$0xf]
    %v1140 = vld [vmem:[#allocation5 + $0x578] sm:$0xff]
    %v1141 = vld [vmem:[#allocation5 + $0x580] sm:$0xff]
    %v1142 = vld [vmem:[#allocation5 + $0x588] sm:$0xf]
    %v1143 = vld [vmem:[#allocation5 + $0x5c8] sm:$0xff]
    %v1144 = vld [vmem:[#allocation5 + $0x5d0] sm:$0xff]
    %v1145 = vld [vmem:[#allocation5 + $0x5d8] sm:$0xf]
    %v1146 = vld [vmem:[#allocation5 + $0x618] sm:$0xff]
    %v1147 = vld [vmem:[#allocation5 + $0x620] sm:$0xff]
    %v1148 = vld [vmem:[#allocation5 + $0x628] sm:$0xf]
    %v1209 = vunpack.c.l.b16 %v1089
    %v1210 = vunpack.c.h.b16 %v1089
    %v1211 = vunpack.c.l.b16 %v1090
    %v1212 = vunpack.c.h.b16 %v1090
    %v1213 = vunpack.c.l.b16 %v1091
    %v1214 = vunpack.c.l.b16 %v1092
    %v1215 = vunpack.c.h.b16 %v1092
    %v1216 = vunpack.c.l.b16 %v1093
    %v1217 = vunpack.c.h.b16 %v1093
    %v1218 = vunpack.c.l.b16 %v1094
    %v1219 = vunpack.c.l.b16 %v1095
    %v1220 = vunpack.c.h.b16 %v1095
    %v1221 = vunpack.c.l.b16 %v1096
    %v1222 = vunpack.c.h.b16 %v1096
    %v1223 = vunpack.c.l.b16 %v1097
    %v1224 = vunpack.c.l.b16 %v1098
    %v1225 = vunpack.c.h.b16 %v1098
    %v1226 = vunpack.c.l.b16 %v1099
    %v1227 = vunpack.c.h.b16 %v1099
    %v1228 = vunpack.c.l.b16 %v1100
    %v1229 = vunpack.c.l.b16 %v1101
    %v1230 = vunpack.c.h.b16 %v1101
    %v1231 = vunpack.c.l.b16 %v1102
    %v1232 = vunpack.c.h.b16 %v1102
    %v1233 = vunpack.c.l.b16 %v1103
    %v1234 = vunpack.c.l.b16 %v1104
    %v1235 = vunpack.c.h.b16 %v1104
    %v1236 = vunpack.c.l.b16 %v1105
    %v1237 = vunpack.c.h.b16 %v1105
    %v1238 = vunpack.c.l.b16 %v1106
    %v1239 = vunpack.c.l.b16 %v1107
    %v1240 = vunpack.c.h.b16 %v1107
    %v1241 = vunpack.c.l.b16 %v1108
    %v1242 = vunpack.c.h.b16 %v1108
    %v1243 = vunpack.c.l.b16 %v1109
    %v1244 = vunpack.c.l.b16 %v1110
    %v1245 = vunpack.c.h.b16 %v1110
    %v1246 = vunpack.c.l.b16 %v1111
    %v1247 = vunpack.c.h.b16 %v1111
    %v1248 = vunpack.c.l.b16 %v1112
    %v1249 = vunpack.c.l.b16 %v1113
    %v1250 = vunpack.c.h.b16 %v1113
    %v1251 = vunpack.c.l.b16 %v1114
    %v1252 = vunpack.c.h.b16 %v1114
    %v1253 = vunpack.c.l.b16 %v1115
    %v1254 = vunpack.c.l.b16 %v1116
    %v1255 = vunpack.c.h.b16 %v1116
    %v1256 = vunpack.c.l.b16 %v1117
    %v1257 = vunpack.c.h.b16 %v1117
    %v1258 = vunpack.c.l.b16 %v1118
    %v1259 = vunpack.c.l.b16 %v1119
    %v1260 = vunpack.c.h.b16 %v1119
    %v1261 = vunpack.c.l.b16 %v1120
    %v1262 = vunpack.c.h.b16 %v1120
    %v1263 = vunpack.c.l.b16 %v1121
    %v1264 = vunpack.c.l.b16 %v1122
    %v1265 = vunpack.c.h.b16 %v1122
    %v1266 = vunpack.c.l.b16 %v1123
    %v1267 = vunpack.c.h.b16 %v1123
    %v1268 = vunpack.c.l.b16 %v1124
    %v1269 = vunpack.c.l.b16 %v1125
    %v1270 = vunpack.c.h.b16 %v1125
    %v1271 = vunpack.c.l.b16 %v1126
    %v1272 = vunpack.c.h.b16 %v1126
    %v1273 = vunpack.c.l.b16 %v1127
    %v1274 = vunpack.c.l.b16 %v1128
    %v1275 = vunpack.c.h.b16 %v1128
    %v1276 = vunpack.c.l.b16 %v1129
    %v1277 = vunpack.c.h.b16 %v1129
    %v1278 = vunpack.c.l.b16 %v1130
    %v1279 = vunpack.c.l.b16 %v1131
    %v1280 = vunpack.c.h.b16 %v1131
    %v1281 = vunpack.c.l.b16 %v1132
    %v1282 = vunpack.c.h.b16 %v1132
    %v1283 = vunpack.c.l.b16 %v1133
    %v1284 = vunpack.c.l.b16 %v1134
    %v1285 = vunpack.c.h.b16 %v1134
    %v1286 = vunpack.c.l.b16 %v1135
    %v1287 = vunpack.c.h.b16 %v1135
    %v1288 = vunpack.c.l.b16 %v1136
    %v1289 = vunpack.c.l.b16 %v1137
    %v1290 = vunpack.c.h.b16 %v1137
    %v1291 = vunpack.c.l.b16 %v1138
    %v1292 = vunpack.c.h.b16 %v1138
    %v1293 = vunpack.c.l.b16 %v1139
    %v1294 = vunpack.c.l.b16 %v1140
    %v1295 = vunpack.c.h.b16 %v1140
    %v1296 = vunpack.c.l.b16 %v1141
    %v1297 = vunpack.c.h.b16 %v1141
    %v1298 = vunpack.c.l.b16 %v1142
    %v1299 = vunpack.c.l.b16 %v1143
    %v1300 = vunpack.c.h.b16 %v1143
    %v1301 = vunpack.c.l.b16 %v1144
    %v1302 = vunpack.c.h.b16 %v1144
    %v1303 = vunpack.c.l.b16 %v1145
    %v1304 = vunpack.c.l.b16 %v1146
    %v1305 = vunpack.c.h.b16 %v1146
    %v1306 = vunpack.c.l.b16 %v1147
    %v1307 = vunpack.c.h.b16 %v1147
    %v1308 = vunpack.c.l.b16 %v1148
    %v1309 = vpack.c.b16 %v1214, %v1209
    %v1310 = vpack.c.b16 %v1215, %v1210
    %v1311 = vpack.c.b16 %v1216, %v1211
    %v1312 = vpack.c.b16 %v1217, %v1212
    %v1313 = vpack.c.b16 %v1218, %v1213
    %v1314 = vpack.c.b16 %v1224, %v1219
    %v1315 = vpack.c.b16 %v1225, %v1220
    %v1316 = vpack.c.b16 %v1226, %v1221
    %v1317 = vpack.c.b16 %v1227, %v1222
    %v1318 = vpack.c.b16 %v1228, %v1223
    %v1319 = vpack.c.b16 %v1234, %v1229
    %v1320 = vpack.c.b16 %v1235, %v1230
    %v1321 = vpack.c.b16 %v1236, %v1231
    %v1322 = vpack.c.b16 %v1237, %v1232
    %v1323 = vpack.c.b16 %v1238, %v1233
    %v1324 = vpack.c.b16 %v1244, %v1239
    %v1325 = vpack.c.b16 %v1245, %v1240
    %v1326 = vpack.c.b16 %v1246, %v1241
    %v1327 = vpack.c.b16 %v1247, %v1242
    %v1328 = vpack.c.b16 %v1248, %v1243
    %v1329 = vpack.c.b16 %v1254, %v1249
    %v1330 = vpack.c.b16 %v1255, %v1250
    %v1331 = vpack.c.b16 %v1256, %v1251
    %v1332 = vpack.c.b16 %v1257, %v1252
    %v1333 = vpack.c.b16 %v1258, %v1253
    %v1334 = vpack.c.b16 %v1264, %v1259
    %v1335 = vpack.c.b16 %v1265, %v1260
    %v1336 = vpack.c.b16 %v1266, %v1261
    %v1337 = vpack.c.b16 %v1267, %v1262
    %v1338 = vpack.c.b16 %v1268, %v1263
    %v1339 = vpack.c.b16 %v1274, %v1269
    %v1340 = vpack.c.b16 %v1275, %v1270
    %v1341 = vpack.c.b16 %v1276, %v1271
    %v1342 = vpack.c.b16 %v1277, %v1272
    %v1343 = vpack.c.b16 %v1278, %v1273
    %v1344 = vpack.c.b16 %v1284, %v1279
    %v1345 = vpack.c.b16 %v1285, %v1280
    %v1346 = vpack.c.b16 %v1286, %v1281
    %v1347 = vpack.c.b16 %v1287, %v1282
    %v1348 = vpack.c.b16 %v1288, %v1283
    %v1349 = vpack.c.b16 %v1294, %v1289
    %v1350 = vpack.c.b16 %v1295, %v1290
    %v1351 = vpack.c.b16 %v1296, %v1291
    %v1352 = vpack.c.b16 %v1297, %v1292
    %v1353 = vpack.c.b16 %v1298, %v1293
    %v1354 = vpack.c.b16 %v1304, %v1299
    %v1355 = vpack.c.b16 %v1305, %v1300
    %v1356 = vpack.c.b16 %v1306, %v1301
    %v1357 = vpack.c.b16 %v1307, %v1302
    %v1358 = vpack.c.b16 %v1308, %v1303
    %1409 = vmatpush.bf16.msra.mxu0 %v1344
    %1410 = vmatpush.bf16.msra.mxu0 %v1339
    %1411 = vmatpush.bf16.msra.mxu0 %v1334
    %1412 = vmatpush.bf16.msra.mxu0 %v1329
    %1413 = vmatpush.bf16.msra.mxu0 %v1324
    %1414 = vmatpush.bf16.msra.mxu0 %v1319
    %1415 = vmatpush.bf16.msra.mxu0 %v1314
    %1416 = vmatpush.bf16.msra.mxu0 %v1309
    %1417 = vmatmul.bf16.gmra.mxu0 %v156
    %v1418 = vpop.f32.mrf.mxu0
    %v1419 = vadd.f32 %v220, %v1418
    %v1420 = vpop.f32.mrf.mxu0
    %1421 = vdwg.mxu0
    %1422 = vmatpush.bf16.msra.mxu0 0
    %1423 = vmatpush.bf16.msra.mxu0 0
    %1424 = vmatpush.bf16.msra.mxu0 0
    %1425 = vmatpush.bf16.msra.mxu0 0
    %1426 = vmatpush.bf16.msra.mxu0 0
    %1427 = vmatpush.bf16.msra.mxu0 0
    %1428 = vmatpush.bf16.msra.mxu0 %v1354
    %1429 = vmatpush.bf16.msra.mxu0 %v1349
    %1430 = vmatmul.bf16.gmra.mxu0 %v492
    %v1431 = vpop.f32.mrf.mxu0
    %v1432 = vadd.f32 %v1419, %v1431
    %v1433 = vpop.f32.mrf.mxu0
    %1434 = vdwg.mxu0
    %1435 = vmatpush.bf16.msra.mxu0 %v1345
    %1436 = vmatpush.bf16.msra.mxu0 %v1340
    %1437 = vmatpush.bf16.msra.mxu0 %v1335
    %1438 = vmatpush.bf16.msra.mxu0 %v1330
    %1439 = vmatpush.bf16.msra.mxu0 %v1325
    %1440 = vmatpush.bf16.msra.mxu0 %v1320
    %1441 = vmatpush.bf16.msra.mxu0 %v1315
    %1442 = vmatpush.bf16.msra.mxu0 %v1310
    %1443 = vmatmul.bf16.gmra.mxu0 %v156
    %v1444 = vpop.f32.mrf.mxu0
    %v1445 = vadd.f32 %v221, %v1444
    %v1446 = vpop.f32.mrf.mxu0
    %1447 = vdwg.mxu0
    %1448 = vmatpush.bf16.msra.mxu0 0
    %1449 = vmatpush.bf16.msra.mxu0 0
    %1450 = vmatpush.bf16.msra.mxu0 0
    %1451 = vmatpush.bf16.msra.mxu0 0
    %1452 = vmatpush.bf16.msra.mxu0 0
    %1453 = vmatpush.bf16.msra.mxu0 0
    %1454 = vmatpush.bf16.msra.mxu0 %v1355
    %1455 = vmatpush.bf16.msra.mxu0 %v1350
    %1456 = vmatmul.bf16.gmra.mxu0 %v492
    %v1457 = vpop.f32.mrf.mxu0
    %v1458 = vadd.f32 %v1445, %v1457
    %v1459 = vpop.f32.mrf.mxu0
    %1460 = vdwg.mxu0
    %1461 = vmatpush.bf16.msra.mxu0 %v1346
    %1462 = vmatpush.bf16.msra.mxu0 %v1341
    %1463 = vmatpush.bf16.msra.mxu0 %v1336
    %1464 = vmatpush.bf16.msra.mxu0 %v1331
    %1465 = vmatpush.bf16.msra.mxu0 %v1326
    %1466 = vmatpush.bf16.msra.mxu0 %v1321
    %1467 = vmatpush.bf16.msra.mxu0 %v1316
    %1468 = vmatpush.bf16.msra.mxu0 %v1311
    %1469 = vmatmul.bf16.gmra.mxu0 %v156
    %v1470 = vpop.f32.mrf.mxu0
    %v1471 = vadd.f32 %v222, %v1470
    %v1472 = vpop.f32.mrf.mxu0
    %1473 = vdwg.mxu0
    %1474 = vmatpush.bf16.msra.mxu0 0
    %1475 = vmatpush.bf16.msra.mxu0 0
    %1476 = vmatpush.bf16.msra.mxu0 0
    %1477 = vmatpush.bf16.msra.mxu0 0
    %1478 = vmatpush.bf16.msra.mxu0 0
    %1479 = vmatpush.bf16.msra.mxu0 0
    %1480 = vmatpush.bf16.msra.mxu0 %v1356
    %1481 = vmatpush.bf16.msra.mxu0 %v1351
    %1482 = vmatmul.bf16.gmra.mxu0 %v492
    %v1483 = vpop.f32.mrf.mxu0
    %v1484 = vadd.f32 %v1471, %v1483
    %v1485 = vpop.f32.mrf.mxu0
    %1486 = vdwg.mxu0
    %1487 = vmatpush.bf16.msra.mxu0 %v1347
    %1488 = vmatpush.bf16.msra.mxu0 %v1342
    %1489 = vmatpush.bf16.msra.mxu0 %v1337
    %1490 = vmatpush.bf16.msra.mxu0 %v1332
    %1491 = vmatpush.bf16.msra.mxu0 %v1327
    %1492 = vmatpush.bf16.msra.mxu0 %v1322
    %1493 = vmatpush.bf16.msra.mxu0 %v1317
    %1494 = vmatpush.bf16.msra.mxu0 %v1312
    %1495 = vmatmul.bf16.gmra.mxu0 %v156
    %v1496 = vpop.f32.mrf.mxu0
    %v1497 = vadd.f32 %v223, %v1496
    %v1498 = vpop.f32.mrf.mxu0
    %1499 = vdwg.mxu0
    %1500 = vmatpush.bf16.msra.mxu0 0
    %1501 = vmatpush.bf16.msra.mxu0 0
    %1502 = vmatpush.bf16.msra.mxu0 0
    %1503 = vmatpush.bf16.msra.mxu0 0
    %1504 = vmatpush.bf16.msra.mxu0 0
    %1505 = vmatpush.bf16.msra.mxu0 0
    %1506 = vmatpush.bf16.msra.mxu0 %v1357
    %1507 = vmatpush.bf16.msra.mxu0 %v1352
    %1508 = vmatmul.bf16.gmra.mxu0 %v492
    %v1509 = vpop.f32.mrf.mxu0
    %v1510 = vadd.f32 %v1497, %v1509
    %v1511 = vpop.f32.mrf.mxu0
    %1512 = vdwg.mxu0
    %1513 = vmatpush.bf16.msra.mxu0 %v1348
    %1514 = vmatpush.bf16.msra.mxu0 %v1343
    %1515 = vmatpush.bf16.msra.mxu0 %v1338
    %1516 = vmatpush.bf16.msra.mxu0 %v1333
    %1517 = vmatpush.bf16.msra.mxu0 %v1328
    %1518 = vmatpush.bf16.msra.mxu0 %v1323
    %1519 = vmatpush.bf16.msra.mxu0 %v1318
    %1520 = vmatpush.bf16.msra.mxu0 %v1313
    %1521 = vmatmul.bf16.gmra.mxu0 %v156
    %v1522 = vpop.f32.mrf.mxu0
    %v1523 = vadd.f32 %v224, %v1522
    %v1524 = vpop.f32.mrf.mxu0
    %1525 = vdwg.mxu0
    %1526 = vmatpush.bf16.msra.mxu0 0
    %1527 = vmatpush.bf16.msra.mxu0 0
    %1528 = vmatpush.bf16.msra.mxu0 0
    %1529 = vmatpush.bf16.msra.mxu0 0
    %1530 = vmatpush.bf16.msra.mxu0 0
    %1531 = vmatpush.bf16.msra.mxu0 0
    %1532 = vmatpush.bf16.msra.mxu0 %v1358
    %1533 = vmatpush.bf16.msra.mxu0 %v1353
    %1534 = vmatmul.bf16.gmra.mxu0 %v492
    %v1535 = vpop.f32.mrf.mxu0
    %v1536 = vadd.f32 %v1523, %v1535
    %v1537 = vpop.f32.mrf.mxu0
    %1538 = vdwg.mxu0
    %v1539 = vmax.f32 %v1432, 0.0
    %v1540 = vmax.f32 %v1458, 0.0
    %v1541 = vmax.f32 %v1484, 0.0
    %v1542 = vmax.f32 %v1510, 0.0
    %v1543 = vmax.f32 %v1536, 0.0
    %v1544 = vmax.f32 %v1084, %v1539
    %v1545 = vmax.f32 %v1085, %v1540
    %v1546 = vmax.f32 %v1086, %v1541
    %v1547 = vmax.f32 %v1087, %v1542
    %v1548 = vmax.f32 %v1088, %v1543
    %v1549 = vld [vmem:[#allocation5 + $0x3c] sm:$0xff]
    %v1550 = vld [vmem:[#allocation5 + $0x44] sm:$0xff]
    %v1551 = vld [vmem:[#allocation5 + $0x4c] sm:$0xf]
    %v1552 = vld [vmem:[#allocation5 + $0x8c] sm:$0xff]
    %v1553 = vld [vmem:[#allocation5 + $0x94] sm:$0xff]
    %v1554 = vld [vmem:[#allocation5 + $0x9c] sm:$0xf]
    %v1555 = vld [vmem:[#allocation5 + $0xdc] sm:$0xff]
    %v1556 = vld [vmem:[#allocation5 + $0xe4] sm:$0xff]
    %v1557 = vld [vmem:[#allocation5 + $0xec] sm:$0xf]
    %v1558 = vld [vmem:[#allocation5 + $0x12c] sm:$0xff]
    %v1559 = vld [vmem:[#allocation5 + $0x134] sm:$0xff]
    %v1560 = vld [vmem:[#allocation5 + $0x13c] sm:$0xf]
    %v1561 = vld [vmem:[#allocation5 + $0x17c] sm:$0xff]
    %v1562 = vld [vmem:[#allocation5 + $0x184] sm:$0xff]
    %v1563 = vld [vmem:[#allocation5 + $0x18c] sm:$0xf]
    %v1564 = vld [vmem:[#allocation5 + $0x1cc] sm:$0xff]
    %v1565 = vld [vmem:[#allocation5 + $0x1d4] sm:$0xff]
    %v1566 = vld [vmem:[#allocation5 + $0x1dc] sm:$0xf]
    %v1567 = vld [vmem:[#allocation5 + $0x21c] sm:$0xff]
    %v1568 = vld [vmem:[#allocation5 + $0x224] sm:$0xff]
    %v1569 = vld [vmem:[#allocation5 + $0x22c] sm:$0xf]
    %v1570 = vld [vmem:[#allocation5 + $0x26c] sm:$0xff]
    %v1571 = vld [vmem:[#allocation5 + $0x274] sm:$0xff]
    %v1572 = vld [vmem:[#allocation5 + $0x27c] sm:$0xf]
    %v1573 = vld [vmem:[#allocation5 + $0x2bc] sm:$0xff]
    %v1574 = vld [vmem:[#allocation5 + $0x2c4] sm:$0xff]
    %v1575 = vld [vmem:[#allocation5 + $0x2cc] sm:$0xf]
    %v1576 = vld [vmem:[#allocation5 + $0x30c] sm:$0xff]
    %v1577 = vld [vmem:[#allocation5 + $0x314] sm:$0xff]
    %v1578 = vld [vmem:[#allocation5 + $0x31c] sm:$0xf]
    %v1579 = vld [vmem:[#allocation5 + $0x35c] sm:$0xff]
    %v1580 = vld [vmem:[#allocation5 + $0x364] sm:$0xff]
    %v1581 = vld [vmem:[#allocation5 + $0x36c] sm:$0xf]
    %v1582 = vld [vmem:[#allocation5 + $0x3ac] sm:$0xff]
    %v1583 = vld [vmem:[#allocation5 + $0x3b4] sm:$0xff]
    %v1584 = vld [vmem:[#allocation5 + $0x3bc] sm:$0xf]
    %v1585 = vld [vmem:[#allocation5 + $0x3fc] sm:$0xff]
    %v1586 = vld [vmem:[#allocation5 + $0x404] sm:$0xff]
    %v1587 = vld [vmem:[#allocation5 + $0x40c] sm:$0xf]
    %v1588 = vld [vmem:[#allocation5 + $0x44c] sm:$0xff]
    %v1589 = vld [vmem:[#allocation5 + $0x454] sm:$0xff]
    %v1590 = vld [vmem:[#allocation5 + $0x45c] sm:$0xf]
    %v1591 = vld [vmem:[#allocation5 + $0x49c] sm:$0xff]
    %v1592 = vld [vmem:[#allocation5 + $0x4a4] sm:$0xff]
    %v1593 = vld [vmem:[#allocation5 + $0x4ac] sm:$0xf]
    %v1594 = vld [vmem:[#allocation5 + $0x4ec] sm:$0xff]
    %v1595 = vld [vmem:[#allocation5 + $0x4f4] sm:$0xff]
    %v1596 = vld [vmem:[#allocation5 + $0x4fc] sm:$0xf]
    %v1597 = vld [vmem:[#allocation5 + $0x53c] sm:$0xff]
    %v1598 = vld [vmem:[#allocation5 + $0x544] sm:$0xff]
    %v1599 = vld [vmem:[#allocation5 + $0x54c] sm:$0xf]
    %v1600 = vld [vmem:[#allocation5 + $0x58c] sm:$0xff]
    %v1601 = vld [vmem:[#allocation5 + $0x594] sm:$0xff]
    %v1602 = vld [vmem:[#allocation5 + $0x59c] sm:$0xf]
    %v1603 = vld [vmem:[#allocation5 + $0x5dc] sm:$0xff]
    %v1604 = vld [vmem:[#allocation5 + $0x5e4] sm:$0xff]
    %v1605 = vld [vmem:[#allocation5 + $0x5ec] sm:$0xf]
    %v1606 = vld [vmem:[#allocation5 + $0x62c] sm:$0xff]
    %v1607 = vld [vmem:[#allocation5 + $0x634] sm:$0xff]
    %v1608 = vld [vmem:[#allocation5 + $0x63c] sm:$0xf]
    %v1669 = vunpack.c.l.b16 %v1549
    %v1670 = vunpack.c.h.b16 %v1549
    %v1671 = vunpack.c.l.b16 %v1550
    %v1672 = vunpack.c.h.b16 %v1550
    %v1673 = vunpack.c.l.b16 %v1551
    %v1674 = vunpack.c.l.b16 %v1552
    %v1675 = vunpack.c.h.b16 %v1552
    %v1676 = vunpack.c.l.b16 %v1553
    %v1677 = vunpack.c.h.b16 %v1553
    %v1678 = vunpack.c.l.b16 %v1554
    %v1679 = vunpack.c.l.b16 %v1555
    %v1680 = vunpack.c.h.b16 %v1555
    %v1681 = vunpack.c.l.b16 %v1556
    %v1682 = vunpack.c.h.b16 %v1556
    %v1683 = vunpack.c.l.b16 %v1557
    %v1684 = vunpack.c.l.b16 %v1558
    %v1685 = vunpack.c.h.b16 %v1558
    %v1686 = vunpack.c.l.b16 %v1559
    %v1687 = vunpack.c.h.b16 %v1559
    %v1688 = vunpack.c.l.b16 %v1560
    %v1689 = vunpack.c.l.b16 %v1561
    %v1690 = vunpack.c.h.b16 %v1561
    %v1691 = vunpack.c.l.b16 %v1562
    %v1692 = vunpack.c.h.b16 %v1562
    %v1693 = vunpack.c.l.b16 %v1563
    %v1694 = vunpack.c.l.b16 %v1564
    %v1695 = vunpack.c.h.b16 %v1564
    %v1696 = vunpack.c.l.b16 %v1565
    %v1697 = vunpack.c.h.b16 %v1565
    %v1698 = vunpack.c.l.b16 %v1566
    %v1699 = vunpack.c.l.b16 %v1567
    %v1700 = vunpack.c.h.b16 %v1567
    %v1701 = vunpack.c.l.b16 %v1568
    %v1702 = vunpack.c.h.b16 %v1568
    %v1703 = vunpack.c.l.b16 %v1569
    %v1704 = vunpack.c.l.b16 %v1570
    %v1705 = vunpack.c.h.b16 %v1570
    %v1706 = vunpack.c.l.b16 %v1571
    %v1707 = vunpack.c.h.b16 %v1571
    %v1708 = vunpack.c.l.b16 %v1572
    %v1709 = vunpack.c.l.b16 %v1573
    %v1710 = vunpack.c.h.b16 %v1573
    %v1711 = vunpack.c.l.b16 %v1574
    %v1712 = vunpack.c.h.b16 %v1574
    %v1713 = vunpack.c.l.b16 %v1575
    %v1714 = vunpack.c.l.b16 %v1576
    %v1715 = vunpack.c.h.b16 %v1576
    %v1716 = vunpack.c.l.b16 %v1577
    %v1717 = vunpack.c.h.b16 %v1577
    %v1718 = vunpack.c.l.b16 %v1578
    %v1719 = vunpack.c.l.b16 %v1579
    %v1720 = vunpack.c.h.b16 %v1579
    %v1721 = vunpack.c.l.b16 %v1580
    %v1722 = vunpack.c.h.b16 %v1580
    %v1723 = vunpack.c.l.b16 %v1581
    %v1724 = vunpack.c.l.b16 %v1582
    %v1725 = vunpack.c.h.b16 %v1582
    %v1726 = vunpack.c.l.b16 %v1583
    %v1727 = vunpack.c.h.b16 %v1583
    %v1728 = vunpack.c.l.b16 %v1584
    %v1729 = vunpack.c.l.b16 %v1585
    %v1730 = vunpack.c.h.b16 %v1585
    %v1731 = vunpack.c.l.b16 %v1586
    %v1732 = vunpack.c.h.b16 %v1586
    %v1733 = vunpack.c.l.b16 %v1587
    %v1734 = vunpack.c.l.b16 %v1588
    %v1735 = vunpack.c.h.b16 %v1588
    %v1736 = vunpack.c.l.b16 %v1589
    %v1737 = vunpack.c.h.b16 %v1589
    %v1738 = vunpack.c.l.b16 %v1590
    %v1739 = vunpack.c.l.b16 %v1591
    %v1740 = vunpack.c.h.b16 %v1591
    %v1741 = vunpack.c.l.b16 %v1592
    %v1742 = vunpack.c.h.b16 %v1592
    %v1743 = vunpack.c.l.b16 %v1593
    %v1744 = vunpack.c.l.b16 %v1594
    %v1745 = vunpack.c.h.b16 %v1594
    %v1746 = vunpack.c.l.b16 %v1595
    %v1747 = vunpack.c.h.b16 %v1595
    %v1748 = vunpack.c.l.b16 %v1596
    %v1749 = vunpack.c.l.b16 %v1597
    %v1750 = vunpack.c.h.b16 %v1597
    %v1751 = vunpack.c.l.b16 %v1598
    %v1752 = vunpack.c.h.b16 %v1598
    %v1753 = vunpack.c.l.b16 %v1599
    %v1754 = vunpack.c.l.b16 %v1600
    %v1755 = vunpack.c.h.b16 %v1600
    %v1756 = vunpack.c.l.b16 %v1601
    %v1757 = vunpack.c.h.b16 %v1601
    %v1758 = vunpack.c.l.b16 %v1602
    %v1759 = vunpack.c.l.b16 %v1603
    %v1760 = vunpack.c.h.b16 %v1603
    %v1761 = vunpack.c.l.b16 %v1604
    %v1762 = vunpack.c.h.b16 %v1604
    %v1763 = vunpack.c.l.b16 %v1605
    %v1764 = vunpack.c.l.b16 %v1606
    %v1765 = vunpack.c.h.b16 %v1606
    %v1766 = vunpack.c.l.b16 %v1607
    %v1767 = vunpack.c.h.b16 %v1607
    %v1768 = vunpack.c.l.b16 %v1608
    %v1769 = vpack.c.b16 %v1674, %v1669
    %v1770 = vpack.c.b16 %v1675, %v1670
    %v1771 = vpack.c.b16 %v1676, %v1671
    %v1772 = vpack.c.b16 %v1677, %v1672
    %v1773 = vpack.c.b16 %v1678, %v1673
    %v1774 = vpack.c.b16 %v1684, %v1679
    %v1775 = vpack.c.b16 %v1685, %v1680
    %v1776 = vpack.c.b16 %v1686, %v1681
    %v1777 = vpack.c.b16 %v1687, %v1682
    %v1778 = vpack.c.b16 %v1688, %v1683
    %v1779 = vpack.c.b16 %v1694, %v1689
    %v1780 = vpack.c.b16 %v1695, %v1690
    %v1781 = vpack.c.b16 %v1696, %v1691
    %v1782 = vpack.c.b16 %v1697, %v1692
    %v1783 = vpack.c.b16 %v1698, %v1693
    %v1784 = vpack.c.b16 %v1704, %v1699
    %v1785 = vpack.c.b16 %v1705, %v1700
    %v1786 = vpack.c.b16 %v1706, %v1701
    %v1787 = vpack.c.b16 %v1707, %v1702
    %v1788 = vpack.c.b16 %v1708, %v1703
    %v1789 = vpack.c.b16 %v1714, %v1709
    %v1790 = vpack.c.b16 %v1715, %v1710
    %v1791 = vpack.c.b16 %v1716, %v1711
    %v1792 = vpack.c.b16 %v1717, %v1712
    %v1793 = vpack.c.b16 %v1718, %v1713
    %v1794 = vpack.c.b16 %v1724, %v1719
    %v1795 = vpack.c.b16 %v1725, %v1720
    %v1796 = vpack.c.b16 %v1726, %v1721
    %v1797 = vpack.c.b16 %v1727, %v1722
    %v1798 = vpack.c.b16 %v1728, %v1723
    %v1799 = vpack.c.b16 %v1734, %v1729
    %v1800 = vpack.c.b16 %v1735, %v1730
    %v1801 = vpack.c.b16 %v1736, %v1731
    %v1802 = vpack.c.b16 %v1737, %v1732
    %v1803 = vpack.c.b16 %v1738, %v1733
    %v1804 = vpack.c.b16 %v1744, %v1739
    %v1805 = vpack.c.b16 %v1745, %v1740
    %v1806 = vpack.c.b16 %v1746, %v1741
    %v1807 = vpack.c.b16 %v1747, %v1742
    %v1808 = vpack.c.b16 %v1748, %v1743
    %v1809 = vpack.c.b16 %v1754, %v1749
    %v1810 = vpack.c.b16 %v1755, %v1750
    %v1811 = vpack.c.b16 %v1756, %v1751
    %v1812 = vpack.c.b16 %v1757, %v1752
    %v1813 = vpack.c.b16 %v1758, %v1753
    %v1814 = vpack.c.b16 %v1764, %v1759
    %v1815 = vpack.c.b16 %v1765, %v1760
    %v1816 = vpack.c.b16 %v1766, %v1761
    %v1817 = vpack.c.b16 %v1767, %v1762
    %v1818 = vpack.c.b16 %v1768, %v1763
    %1869 = vmatpush.bf16.msra.mxu0 %v1804
    %1870 = vmatpush.bf16.msra.mxu0 %v1799
    %1871 = vmatpush.bf16.msra.mxu0 %v1794
    %1872 = vmatpush.bf16.msra.mxu0 %v1789
    %1873 = vmatpush.bf16.msra.mxu0 %v1784
    %1874 = vmatpush.bf16.msra.mxu0 %v1779
    %1875 = vmatpush.bf16.msra.mxu0 %v1774
    %1876 = vmatpush.bf16.msra.mxu0 %v1769
    %1877 = vmatmul.bf16.gmra.mxu0 %v156
    %v1878 = vpop.f32.mrf.mxu0
    %v1879 = vadd.f32 %v220, %v1878
    %v1880 = vpop.f32.mrf.mxu0
    %1881 = vdwg.mxu0
    %1882 = vmatpush.bf16.msra.mxu0 0
    %1883 = vmatpush.bf16.msra.mxu0 0
    %1884 = vmatpush.bf16.msra.mxu0 0
    %1885 = vmatpush.bf16.msra.mxu0 0
    %1886 = vmatpush.bf16.msra.mxu0 0
    %1887 = vmatpush.bf16.msra.mxu0 0
    %1888 = vmatpush.bf16.msra.mxu0 %v1814
    %1889 = vmatpush.bf16.msra.mxu0 %v1809
    %1890 = vmatmul.bf16.gmra.mxu0 %v492
    %v1891 = vpop.f32.mrf.mxu0
    %v1892 = vadd.f32 %v1879, %v1891
    %v1893 = vpop.f32.mrf.mxu0
    %1894 = vdwg.mxu0
    %1895 = vmatpush.bf16.msra.mxu0 %v1805
    %1896 = vmatpush.bf16.msra.mxu0 %v1800
    %1897 = vmatpush.bf16.msra.mxu0 %v1795
    %1898 = vmatpush.bf16.msra.mxu0 %v1790
    %1899 = vmatpush.bf16.msra.mxu0 %v1785
    %1900 = vmatpush.bf16.msra.mxu0 %v1780
    %1901 = vmatpush.bf16.msra.mxu0 %v1775
    %1902 = vmatpush.bf16.msra.mxu0 %v1770
    %1903 = vmatmul.bf16.gmra.mxu0 %v156
    %v1904 = vpop.f32.mrf.mxu0
    %v1905 = vadd.f32 %v221, %v1904
    %v1906 = vpop.f32.mrf.mxu0
    %1907 = vdwg.mxu0
    %1908 = vmatpush.bf16.msra.mxu0 0
    %1909 = vmatpush.bf16.msra.mxu0 0
    %1910 = vmatpush.bf16.msra.mxu0 0
    %1911 = vmatpush.bf16.msra.mxu0 0
    %1912 = vmatpush.bf16.msra.mxu0 0
    %1913 = vmatpush.bf16.msra.mxu0 0
    %1914 = vmatpush.bf16.msra.mxu0 %v1815
    %1915 = vmatpush.bf16.msra.mxu0 %v1810
    %1916 = vmatmul.bf16.gmra.mxu0 %v492
    %v1917 = vpop.f32.mrf.mxu0
    %v1918 = vadd.f32 %v1905, %v1917
    %v1919 = vpop.f32.mrf.mxu0
    %1920 = vdwg.mxu0
    %1921 = vmatpush.bf16.msra.mxu0 %v1806
    %1922 = vmatpush.bf16.msra.mxu0 %v1801
    %1923 = vmatpush.bf16.msra.mxu0 %v1796
    %1924 = vmatpush.bf16.msra.mxu0 %v1791
    %1925 = vmatpush.bf16.msra.mxu0 %v1786
    %1926 = vmatpush.bf16.msra.mxu0 %v1781
    %1927 = vmatpush.bf16.msra.mxu0 %v1776
    %1928 = vmatpush.bf16.msra.mxu0 %v1771
    %1929 = vmatmul.bf16.gmra.mxu0 %v156
    %v1930 = vpop.f32.mrf.mxu0
    %v1931 = vadd.f32 %v222, %v1930
    %v1932 = vpop.f32.mrf.mxu0
    %1933 = vdwg.mxu0
    %1934 = vmatpush.bf16.msra.mxu0 0
    %1935 = vmatpush.bf16.msra.mxu0 0
    %1936 = vmatpush.bf16.msra.mxu0 0
    %1937 = vmatpush.bf16.msra.mxu0 0
    %1938 = vmatpush.bf16.msra.mxu0 0
    %1939 = vmatpush.bf16.msra.mxu0 0
    %1940 = vmatpush.bf16.msra.mxu0 %v1816
    %1941 = vmatpush.bf16.msra.mxu0 %v1811
    %1942 = vmatmul.bf16.gmra.mxu0 %v492
    %v1943 = vpop.f32.mrf.mxu0
    %v1944 = vadd.f32 %v1931, %v1943
    %v1945 = vpop.f32.mrf.mxu0
    %1946 = vdwg.mxu0
    %1947 = vmatpush.bf16.msra.mxu0 %v1807
    %1948 = vmatpush.bf16.msra.mxu0 %v1802
    %1949 = vmatpush.bf16.msra.mxu0 %v1797
    %1950 = vmatpush.bf16.msra.mxu0 %v1792
    %1951 = vmatpush.bf16.msra.mxu0 %v1787
    %1952 = vmatpush.bf16.msra.mxu0 %v1782
    %1953 = vmatpush.bf16.msra.mxu0 %v1777
    %1954 = vmatpush.bf16.msra.mxu0 %v1772
    %1955 = vmatmul.bf16.gmra.mxu0 %v156
    %v1956 = vpop.f32.mrf.mxu0
    %v1957 = vadd.f32 %v223, %v1956
    %v1958 = vpop.f32.mrf.mxu0
    %1959 = vdwg.mxu0
    %1960 = vmatpush.bf16.msra.mxu0 0
    %1961 = vmatpush.bf16.msra.mxu0 0
    %1962 = vmatpush.bf16.msra.mxu0 0
    %1963 = vmatpush.bf16.msra.mxu0 0
    %1964 = vmatpush.bf16.msra.mxu0 0
    %1965 = vmatpush.bf16.msra.mxu0 0
    %1966 = vmatpush.bf16.msra.mxu0 %v1817
    %1967 = vmatpush.bf16.msra.mxu0 %v1812
    %1968 = vmatmul.bf16.gmra.mxu0 %v492
    %v1969 = vpop.f32.mrf.mxu0
    %v1970 = vadd.f32 %v1957, %v1969
    %v1971 = vpop.f32.mrf.mxu0
    %1972 = vdwg.mxu0
    %1973 = vmatpush.bf16.msra.mxu0 %v1808
    %1974 = vmatpush.bf16.msra.mxu0 %v1803
    %1975 = vmatpush.bf16.msra.mxu0 %v1798
    %1976 = vmatpush.bf16.msra.mxu0 %v1793
    %1977 = vmatpush.bf16.msra.mxu0 %v1788
    %1978 = vmatpush.bf16.msra.mxu0 %v1783
    %1979 = vmatpush.bf16.msra.mxu0 %v1778
    %1980 = vmatpush.bf16.msra.mxu0 %v1773
    %1981 = vmatmul.bf16.gmra.mxu0 %v156
    %v1982 = vpop.f32.mrf.mxu0
    %v1983 = vadd.f32 %v224, %v1982
    %v1984 = vpop.f32.mrf.mxu0
    %1985 = vdwg.mxu0
    %1986 = vmatpush.bf16.msra.mxu0 0
    %1987 = vmatpush.bf16.msra.mxu0 0
    %1988 = vmatpush.bf16.msra.mxu0 0
    %1989 = vmatpush.bf16.msra.mxu0 0
    %1990 = vmatpush.bf16.msra.mxu0 0
    %1991 = vmatpush.bf16.msra.mxu0 0
    %1992 = vmatpush.bf16.msra.mxu0 %v1818
    %1993 = vmatpush.bf16.msra.mxu0 %v1813
    %1994 = vmatmul.bf16.gmra.mxu0 %v492
    %v1995 = vpop.f32.mrf.mxu0
    %v1996 = vadd.f32 %v1983, %v1995
    %v1997 = vpop.f32.mrf.mxu0
    %1998 = vdwg.mxu0
    %v1999 = vmax.f32 %v1892, 0.0
    %v2000 = vmax.f32 %v1918, 0.0
    %v2001 = vmax.f32 %v1944, 0.0
    %v2002 = vmax.f32 %v1970, 0.0
    %v2003 = vmax.f32 %v1996, 0.0
    %v2004 = vmax.f32 %v1544, %v1999
    %v2005 = vmax.f32 %v1545, %v2000
    %v2006 = vmax.f32 %v1546, %v2001
    %v2007 = vmax.f32 %v1547, %v2002
    %v2008 = vmax.f32 %v1548, %v2003
    %v2009 = vpack.c.bf16 %v2004, %v2004
    %v2010 = vpack.c.bf16 %v2005, %v2005
    %v2011 = vpack.c.bf16 %v2006, %v2006
    %v2012 = vpack.c.bf16 %v2007, %v2007
    %v2013 = vpack.c.bf16 %v2008, %v2008
    %v2014 = vld [vmem:[#allocation10] sm:$0x3]
    %v2015 = vld [vmem:[#allocation8] sm:$0xff]
    %v2016 = vld [vmem:[#allocation8 + $0x20] sm:$0xff]
    %v2017 = vld [vmem:[#allocation8 + $0x40] sm:$0xff]
    %v2018 = vld [vmem:[#allocation8 + $0x60] sm:$0xff]
    %v2019 = vld [vmem:[#allocation8 + $0x80] sm:$0xff]
    %v2020 = vld [vmem:[#allocation8 + $0xa0] sm:$0xff]
    %v2021 = vld [vmem:[#allocation8 + $0xc0] sm:$0xff]
    %v2022 = vld [vmem:[#allocation8 + $0xe0] sm:$0xff]
    %v2023 = vld [vmem:[#allocation8 + $0x100] sm:$0xff]
    %v2024 = vld [vmem:[#allocation8 + $0x120] sm:$0xff]
    %v2025 = vld [vmem:[#allocation8 + $0x140] sm:$0xff]
    %v2026 = vld [vmem:[#allocation8 + $0x160] sm:$0xff]
    %v2027 = vld [vmem:[#allocation8 + $0x180] sm:$0xff]
    %v2028 = vld [vmem:[#allocation8 + $0x1a0] sm:$0xff]
    %v2029 = vld [vmem:[#allocation8 + $0x1c0] sm:$0xff]
    %v2030 = vld [vmem:[#allocation8 + $0x1e0] sm:$0xff]
    %v2031 = vld [vmem:[#allocation8 + $0x200] sm:$0xff]
    %v2032 = vld [vmem:[#allocation8 + $0x220] sm:$0xff]
    %v2033 = vld [vmem:[#allocation8 + $0x240] sm:$0xff]
    %v2034 = vld [vmem:[#allocation8 + $0x260] sm:$0xff]
    %v2035 = vld [vmem:[#allocation8 + $0x280] sm:$0xff]
    %v2036 = vld [vmem:[#allocation8 + $0x2a0] sm:$0xff]
    %v2037 = vld [vmem:[#allocation8 + $0x2c0] sm:$0xff]
    %v2038 = vld [vmem:[#allocation8 + $0x2e0] sm:$0xff]
    %v2039 = vld [vmem:[#allocation8 + $0x300] sm:$0xff]
    %v2040 = vld [vmem:[#allocation8 + $0x320] sm:$0xff]
    %v2041 = vld [vmem:[#allocation8 + $0x340] sm:$0xff]
    %v2042 = vld [vmem:[#allocation8 + $0x360] sm:$0xff]
    %v2043 = vld [vmem:[#allocation8 + $0x380] sm:$0xff]
    %v2044 = vld [vmem:[#allocation8 + $0x3a0] sm:$0xff]
    %v2045 = vld [vmem:[#allocation8 + $0x3c0] sm:$0xff]
    %v2046 = vld [vmem:[#allocation8 + $0x3e0] sm:$0xff]
    %v2047 = vld [vmem:[#allocation8 + $0x400] sm:$0xff]
    %v2048 = vld [vmem:[#allocation8 + $0x420] sm:$0xff]
    %v2049 = vld [vmem:[#allocation8 + $0x440] sm:$0xff]
    %v2050 = vld [vmem:[#allocation8 + $0x460] sm:$0xff]
    %v2051 = vld [vmem:[#allocation8 + $0x480] sm:$0xff]
    %v2052 = vld [vmem:[#allocation8 + $0x4a0] sm:$0xff]
    %v2053 = vld [vmem:[#allocation8 + $0x4c0] sm:$0xff]
    %v2054 = vld [vmem:[#allocation8 + $0x4e0] sm:$0xff]
    %v2055 = vld [vmem:[#allocation8 + $0x500] sm:$0xff]
    %v2056 = vld [vmem:[#allocation8 + $0x520] sm:$0xff]
    %v2057 = vld [vmem:[#allocation8 + $0x540] sm:$0xff]
    %v2058 = vld [vmem:[#allocation8 + $0x560] sm:$0xff]
    %v2059 = vld [vmem:[#allocation8 + $0x580] sm:$0xff]
    %v2060 = vld [vmem:[#allocation8 + $0x5a0] sm:$0xff]
    %v2061 = vld [vmem:[#allocation8 + $0x5c0] sm:$0xff]
    %v2062 = vld [vmem:[#allocation8 + $0x5e0] sm:$0xff]
    %v2063 = vld [vmem:[#allocation8 + $0x600] sm:$0xff]
    %v2064 = vld [vmem:[#allocation8 + $0x620] sm:$0xff]
    %v2065 = vld [vmem:[#allocation8 + $0x640] sm:$0xff]
    %v2066 = vld [vmem:[#allocation8 + $0x660] sm:$0xff]
    %v2067 = vld [vmem:[#allocation8 + $0x680] sm:$0xff]
    %v2068 = vld [vmem:[#allocation8 + $0x6a0] sm:$0xff]
    %v2069 = vld [vmem:[#allocation8 + $0x6c0] sm:$0xff]
    %v2070 = vld [vmem:[#allocation8 + $0x6e0] sm:$0xff]
    %v2071 = vld [vmem:[#allocation8 + $0x700] sm:$0xff]
    %v2072 = vld [vmem:[#allocation8 + $0x720] sm:$0xff]
    %v2073 = vld [vmem:[#allocation8 + $0x740] sm:$0xff]
    %v2074 = vld [vmem:[#allocation8 + $0x760] sm:$0xff]
    %v2075 = vld [vmem:[#allocation8 + $0x780] sm:$0xff]
    %v2076 = vld [vmem:[#allocation8 + $0x7a0] sm:$0xff]
    %v2077 = vld [vmem:[#allocation8 + $0x7c0] sm:$0xff]
    %v2078 = vld [vmem:[#allocation8 + $0x7e0] sm:$0xff]
    %v2079 = vld [vmem:[#allocation8 + $0x800] sm:$0xff]
    %v2080 = vld [vmem:[#allocation8 + $0x820] sm:$0xff]
    %v2081 = vld [vmem:[#allocation8 + $0x840] sm:$0xff]
    %v2082 = vld [vmem:[#allocation8 + $0x860] sm:$0xff]
    %v2083 = vld [vmem:[#allocation8 + $0x880] sm:$0xff]
    %v2084 = vld [vmem:[#allocation8 + $0x8a0] sm:$0xff]
    %v2085 = vld [vmem:[#allocation8 + $0x8c0] sm:$0xff]
    %v2086 = vld [vmem:[#allocation8 + $0x8e0] sm:$0xff]
    %v2087 = vld [vmem:[#allocation8 + $0x900] sm:$0xff]
    %v2088 = vld [vmem:[#allocation8 + $0x920] sm:$0xff]
    %v2089 = vld [vmem:[#allocation8 + $0x940] sm:$0xff]
    %v2090 = vld [vmem:[#allocation8 + $0x960] sm:$0xff]
    %v2091 = vld [vmem:[#allocation8 + $0x980] sm:$0xff]
    %v2092 = vld [vmem:[#allocation8 + $0x9a0] sm:$0xff]
    %v2093 = vld [vmem:[#allocation8 + $0x9c0] sm:$0xff]
    %v2094 = vld [vmem:[#allocation8 + $0x9e0] sm:$0xff]
    %v2096 = vperm.slane %v2014, 0
    %v2097 = vperm.slane %v2014, 1
    %v2180 = vunpack.c.l.b16 %v2015
    %v2181 = vunpack.c.h.b16 %v2015
    %v2182 = vunpack.c.l.b16 %v2016
    %v2183 = vunpack.c.h.b16 %v2016
    %v2184 = vunpack.c.l.b16 %v2017
    %v2185 = vunpack.c.h.b16 %v2017
    %v2186 = vunpack.c.l.b16 %v2018
    %v2187 = vunpack.c.h.b16 %v2018
    %v2188 = vunpack.c.l.b16 %v2019
    %v2189 = vunpack.c.h.b16 %v2019
    %v2190 = vunpack.c.l.b16 %v2020
    %v2191 = vunpack.c.h.b16 %v2020
    %v2192 = vunpack.c.l.b16 %v2021
    %v2193 = vunpack.c.h.b16 %v2021
    %v2194 = vunpack.c.l.b16 %v2022
    %v2195 = vunpack.c.h.b16 %v2022
    %v2196 = vunpack.c.l.b16 %v2023
    %v2197 = vunpack.c.h.b16 %v2023
    %v2198 = vunpack.c.l.b16 %v2024
    %v2199 = vunpack.c.h.b16 %v2024
    %v2200 = vunpack.c.l.b16 %v2025
    %v2201 = vunpack.c.h.b16 %v2025
    %v2202 = vunpack.c.l.b16 %v2026
    %v2203 = vunpack.c.h.b16 %v2026
    %v2204 = vunpack.c.l.b16 %v2027
    %v2205 = vunpack.c.h.b16 %v2027
    %v2206 = vunpack.c.l.b16 %v2028
    %v2207 = vunpack.c.h.b16 %v2028
    %v2208 = vunpack.c.l.b16 %v2029
    %v2209 = vunpack.c.h.b16 %v2029
    %v2210 = vunpack.c.l.b16 %v2030
    %v2211 = vunpack.c.h.b16 %v2030
    %v2212 = vunpack.c.l.b16 %v2031
    %v2213 = vunpack.c.h.b16 %v2031
    %v2214 = vunpack.c.l.b16 %v2032
    %v2215 = vunpack.c.h.b16 %v2032
    %v2216 = vunpack.c.l.b16 %v2033
    %v2217 = vunpack.c.h.b16 %v2033
    %v2218 = vunpack.c.l.b16 %v2034
    %v2219 = vunpack.c.h.b16 %v2034
    %v2220 = vunpack.c.l.b16 %v2035
    %v2221 = vunpack.c.h.b16 %v2035
    %v2222 = vunpack.c.l.b16 %v2036
    %v2223 = vunpack.c.h.b16 %v2036
    %v2224 = vunpack.c.l.b16 %v2037
    %v2225 = vunpack.c.h.b16 %v2037
    %v2226 = vunpack.c.l.b16 %v2038
    %v2227 = vunpack.c.h.b16 %v2038
    %v2228 = vunpack.c.l.b16 %v2039
    %v2229 = vunpack.c.h.b16 %v2039
    %v2230 = vunpack.c.l.b16 %v2040
    %v2231 = vunpack.c.h.b16 %v2040
    %v2232 = vunpack.c.l.b16 %v2041
    %v2233 = vunpack.c.h.b16 %v2041
    %v2234 = vunpack.c.l.b16 %v2042
    %v2235 = vunpack.c.h.b16 %v2042
    %v2236 = vunpack.c.l.b16 %v2043
    %v2237 = vunpack.c.h.b16 %v2043
    %v2238 = vunpack.c.l.b16 %v2044
    %v2239 = vunpack.c.h.b16 %v2044
    %v2240 = vunpack.c.l.b16 %v2045
    %v2241 = vunpack.c.h.b16 %v2045
    %v2242 = vunpack.c.l.b16 %v2046
    %v2243 = vunpack.c.h.b16 %v2046
    %v2244 = vunpack.c.l.b16 %v2047
    %v2245 = vunpack.c.h.b16 %v2047
    %v2246 = vunpack.c.l.b16 %v2048
    %v2247 = vunpack.c.h.b16 %v2048
    %v2248 = vunpack.c.l.b16 %v2049
    %v2249 = vunpack.c.h.b16 %v2049
    %v2250 = vunpack.c.l.b16 %v2050
    %v2251 = vunpack.c.h.b16 %v2050
    %v2252 = vunpack.c.l.b16 %v2051
    %v2253 = vunpack.c.h.b16 %v2051
    %v2254 = vunpack.c.l.b16 %v2052
    %v2255 = vunpack.c.h.b16 %v2052
    %v2256 = vunpack.c.l.b16 %v2053
    %v2257 = vunpack.c.h.b16 %v2053
    %v2258 = vunpack.c.l.b16 %v2054
    %v2259 = vunpack.c.h.b16 %v2054
    %v2260 = vunpack.c.l.b16 %v2055
    %v2261 = vunpack.c.h.b16 %v2055
    %v2262 = vunpack.c.l.b16 %v2056
    %v2263 = vunpack.c.h.b16 %v2056
    %v2264 = vunpack.c.l.b16 %v2057
    %v2265 = vunpack.c.h.b16 %v2057
    %v2266 = vunpack.c.l.b16 %v2058
    %v2267 = vunpack.c.h.b16 %v2058
    %v2268 = vunpack.c.l.b16 %v2059
    %v2269 = vunpack.c.h.b16 %v2059
    %v2270 = vunpack.c.l.b16 %v2060
    %v2271 = vunpack.c.h.b16 %v2060
    %v2272 = vunpack.c.l.b16 %v2061
    %v2273 = vunpack.c.h.b16 %v2061
    %v2274 = vunpack.c.l.b16 %v2062
    %v2275 = vunpack.c.h.b16 %v2062
    %v2276 = vunpack.c.l.b16 %v2063
    %v2277 = vunpack.c.h.b16 %v2063
    %v2278 = vunpack.c.l.b16 %v2064
    %v2279 = vunpack.c.h.b16 %v2064
    %v2280 = vunpack.c.l.b16 %v2065
    %v2281 = vunpack.c.h.b16 %v2065
    %v2282 = vunpack.c.l.b16 %v2066
    %v2283 = vunpack.c.h.b16 %v2066
    %v2284 = vunpack.c.l.b16 %v2067
    %v2285 = vunpack.c.h.b16 %v2067
    %v2286 = vunpack.c.l.b16 %v2068
    %v2287 = vunpack.c.h.b16 %v2068
    %v2288 = vunpack.c.l.b16 %v2069
    %v2289 = vunpack.c.h.b16 %v2069
    %v2290 = vunpack.c.l.b16 %v2070
    %v2291 = vunpack.c.h.b16 %v2070
    %v2292 = vunpack.c.l.b16 %v2071
    %v2293 = vunpack.c.h.b16 %v2071
    %v2294 = vunpack.c.l.b16 %v2072
    %v2295 = vunpack.c.h.b16 %v2072
    %v2296 = vunpack.c.l.b16 %v2073
    %v2297 = vunpack.c.h.b16 %v2073
    %v2298 = vunpack.c.l.b16 %v2074
    %v2299 = vunpack.c.h.b16 %v2074
    %v2300 = vunpack.c.l.b16 %v2075
    %v2301 = vunpack.c.h.b16 %v2075
    %v2302 = vunpack.c.l.b16 %v2076
    %v2303 = vunpack.c.h.b16 %v2076
    %v2304 = vunpack.c.l.b16 %v2077
    %v2305 = vunpack.c.h.b16 %v2077
    %v2306 = vunpack.c.l.b16 %v2078
    %v2307 = vunpack.c.h.b16 %v2078
    %v2308 = vunpack.c.l.b16 %v2079
    %v2309 = vunpack.c.h.b16 %v2079
    %v2310 = vunpack.c.l.b16 %v2080
    %v2311 = vunpack.c.h.b16 %v2080
    %v2312 = vunpack.c.l.b16 %v2081
    %v2313 = vunpack.c.h.b16 %v2081
    %v2314 = vunpack.c.l.b16 %v2082
    %v2315 = vunpack.c.h.b16 %v2082
    %v2316 = vunpack.c.l.b16 %v2083
    %v2317 = vunpack.c.h.b16 %v2083
    %v2318 = vunpack.c.l.b16 %v2084
    %v2319 = vunpack.c.h.b16 %v2084
    %v2320 = vunpack.c.l.b16 %v2085
    %v2321 = vunpack.c.h.b16 %v2085
    %v2322 = vunpack.c.l.b16 %v2086
    %v2323 = vunpack.c.h.b16 %v2086
    %v2324 = vunpack.c.l.b16 %v2087
    %v2325 = vunpack.c.h.b16 %v2087
    %v2326 = vunpack.c.l.b16 %v2088
    %v2327 = vunpack.c.h.b16 %v2088
    %v2328 = vunpack.c.l.b16 %v2089
    %v2329 = vunpack.c.h.b16 %v2089
    %v2330 = vunpack.c.l.b16 %v2090
    %v2331 = vunpack.c.h.b16 %v2090
    %v2332 = vunpack.c.l.b16 %v2091
    %v2333 = vunpack.c.h.b16 %v2091
    %v2334 = vunpack.c.l.b16 %v2092
    %v2335 = vunpack.c.h.b16 %v2092
    %v2336 = vunpack.c.l.b16 %v2093
    %v2337 = vunpack.c.h.b16 %v2093
    %v2338 = vunpack.c.l.b16 %v2094
    %v2339 = vunpack.c.h.b16 %v2094
    %v2340 = vpack.c.b16 %v2182, %v2180
    %v2341 = vpack.c.b16 %v2183, %v2181
    %v2342 = vpack.c.b16 %v2186, %v2184
    %v2343 = vpack.c.b16 %v2187, %v2185
    %v2344 = vpack.c.b16 %v2190, %v2188
    %v2345 = vpack.c.b16 %v2191, %v2189
    %v2346 = vpack.c.b16 %v2194, %v2192
    %v2347 = vpack.c.b16 %v2195, %v2193
    %v2348 = vpack.c.b16 %v2198, %v2196
    %v2349 = vpack.c.b16 %v2199, %v2197
    %v2350 = vpack.c.b16 %v2202, %v2200
    %v2351 = vpack.c.b16 %v2203, %v2201
    %v2352 = vpack.c.b16 %v2206, %v2204
    %v2353 = vpack.c.b16 %v2207, %v2205
    %v2354 = vpack.c.b16 %v2210, %v2208
    %v2355 = vpack.c.b16 %v2211, %v2209
    %v2356 = vpack.c.b16 %v2214, %v2212
    %v2357 = vpack.c.b16 %v2215, %v2213
    %v2358 = vpack.c.b16 %v2218, %v2216
    %v2359 = vpack.c.b16 %v2219, %v2217
    %v2360 = vpack.c.b16 %v2222, %v2220
    %v2361 = vpack.c.b16 %v2223, %v2221
    %v2362 = vpack.c.b16 %v2226, %v2224
    %v2363 = vpack.c.b16 %v2227, %v2225
    %v2364 = vpack.c.b16 %v2230, %v2228
    %v2365 = vpack.c.b16 %v2231, %v2229
    %v2366 = vpack.c.b16 %v2234, %v2232
    %v2367 = vpack.c.b16 %v2235, %v2233
    %v2368 = vpack.c.b16 %v2238, %v2236
    %v2369 = vpack.c.b16 %v2239, %v2237
    %v2370 = vpack.c.b16 %v2242, %v2240
    %v2371 = vpack.c.b16 %v2243, %v2241
    %v2372 = vpack.c.b16 %v2246, %v2244
    %v2373 = vpack.c.b16 %v2247, %v2245
    %v2374 = vpack.c.b16 %v2250, %v2248
    %v2375 = vpack.c.b16 %v2251, %v2249
    %v2376 = vpack.c.b16 %v2254, %v2252
    %v2377 = vpack.c.b16 %v2255, %v2253
    %v2378 = vpack.c.b16 %v2258, %v2256
    %v2379 = vpack.c.b16 %v2259, %v2257
    %v2380 = vpack.c.b16 %v2262, %v2260
    %v2381 = vpack.c.b16 %v2263, %v2261
    %v2382 = vpack.c.b16 %v2266, %v2264
    %v2383 = vpack.c.b16 %v2267, %v2265
    %v2384 = vpack.c.b16 %v2270, %v2268
    %v2385 = vpack.c.b16 %v2271, %v2269
    %v2386 = vpack.c.b16 %v2274, %v2272
    %v2387 = vpack.c.b16 %v2275, %v2273
    %v2388 = vpack.c.b16 %v2278, %v2276
    %v2389 = vpack.c.b16 %v2279, %v2277
    %v2390 = vpack.c.b16 %v2282, %v2280
    %v2391 = vpack.c.b16 %v2283, %v2281
    %v2392 = vpack.c.b16 %v2286, %v2284
    %v2393 = vpack.c.b16 %v2287, %v2285
    %v2394 = vpack.c.b16 %v2290, %v2288
    %v2395 = vpack.c.b16 %v2291, %v2289
    %v2396 = vpack.c.b16 %v2294, %v2292
    %v2397 = vpack.c.b16 %v2295, %v2293
    %v2398 = vpack.c.b16 %v2298, %v2296
    %v2399 = vpack.c.b16 %v2299, %v2297
    %v2400 = vpack.c.b16 %v2302, %v2300
    %v2401 = vpack.c.b16 %v2303, %v2301
    %v2402 = vpack.c.b16 %v2306, %v2304
    %v2403 = vpack.c.b16 %v2307, %v2305
    %v2404 = vpack.c.b16 %v2310, %v2308
    %v2405 = vpack.c.b16 %v2311, %v2309
    %v2406 = vpack.c.b16 %v2314, %v2312
    %v2407 = vpack.c.b16 %v2315, %v2313
    %v2408 = vpack.c.b16 %v2318, %v2316
    %v2409 = vpack.c.b16 %v2319, %v2317
    %v2410 = vpack.c.b16 %v2322, %v2320
    %v2411 = vpack.c.b16 %v2323, %v2321
    %v2412 = vpack.c.b16 %v2326, %v2324
    %v2413 = vpack.c.b16 %v2327, %v2325
    %v2414 = vpack.c.b16 %v2330, %v2328
    %v2415 = vpack.c.b16 %v2331, %v2329
    %v2416 = vpack.c.b16 %v2334, %v2332
    %v2417 = vpack.c.b16 %v2335, %v2333
    %v2418 = vpack.c.b16 %v2338, %v2336
    %v2419 = vpack.c.b16 %v2339, %v2337
    %2500 = vmatpush.bf16.msra.mxu0 %v2354
    %2501 = vmatpush.bf16.msra.mxu0 %v2352
    %2502 = vmatpush.bf16.msra.mxu0 %v2350
    %2503 = vmatpush.bf16.msra.mxu0 %v2348
    %2504 = vmatpush.bf16.msra.mxu0 %v2346
    %2505 = vmatpush.bf16.msra.mxu0 %v2344
    %2506 = vmatpush.bf16.msra.mxu0 %v2342
    %2507 = vmatpush.bf16.msra.mxu0 %v2340
    %2508 = vmatmul.bf16.gmra.mxu0 %v2009
    %v2509 = vpop.f32.mrf.mxu0
    %v2510 = vadd.f32 %v2096, %v2509
    %v2511 = vpop.f32.mrf.mxu0
    %2512 = vdwg.mxu0
    %2513 = vmatpush.bf16.msra.mxu0 %v2370
    %2514 = vmatpush.bf16.msra.mxu0 %v2368
    %2515 = vmatpush.bf16.msra.mxu0 %v2366
    %2516 = vmatpush.bf16.msra.mxu0 %v2364
    %2517 = vmatpush.bf16.msra.mxu0 %v2362
    %2518 = vmatpush.bf16.msra.mxu0 %v2360
    %2519 = vmatpush.bf16.msra.mxu0 %v2358
    %2520 = vmatpush.bf16.msra.mxu0 %v2356
    %2521 = vmatmul.bf16.gmra.mxu0 %v2010
    %v2522 = vpop.f32.mrf.mxu0
    %v2523 = vadd.f32 %v2510, %v2522
    %v2524 = vpop.f32.mrf.mxu0
    %2525 = vdwg.mxu0
    %2526 = vmatpush.bf16.msra.mxu0 %v2386
    %2527 = vmatpush.bf16.msra.mxu0 %v2384
    %2528 = vmatpush.bf16.msra.mxu0 %v2382
    %2529 = vmatpush.bf16.msra.mxu0 %v2380
    %2530 = vmatpush.bf16.msra.mxu0 %v2378
    %2531 = vmatpush.bf16.msra.mxu0 %v2376
    %2532 = vmatpush.bf16.msra.mxu0 %v2374
    %2533 = vmatpush.bf16.msra.mxu0 %v2372
    %2534 = vmatmul.bf16.gmra.mxu0 %v2011
    %v2535 = vpop.f32.mrf.mxu0
    %v2536 = vadd.f32 %v2523, %v2535
    %v2537 = vpop.f32.mrf.mxu0
    %2538 = vdwg.mxu0
    %2539 = vmatpush.bf16.msra.mxu0 %v2402
    %2540 = vmatpush.bf16.msra.mxu0 %v2400
    %2541 = vmatpush.bf16.msra.mxu0 %v2398
    %2542 = vmatpush.bf16.msra.mxu0 %v2396
    %2543 = vmatpush.bf16.msra.mxu0 %v2394
    %2544 = vmatpush.bf16.msra.mxu0 %v2392
    %2545 = vmatpush.bf16.msra.mxu0 %v2390
    %2546 = vmatpush.bf16.msra.mxu0 %v2388
    %2547 = vmatmul.bf16.gmra.mxu0 %v2012
    %v2548 = vpop.f32.mrf.mxu0
    %v2549 = vadd.f32 %v2536, %v2548
    %v2550 = vpop.f32.mrf.mxu0
    %2551 = vdwg.mxu0
    %2552 = vmatpush.bf16.msra.mxu0 %v2418
    %2553 = vmatpush.bf16.msra.mxu0 %v2416
    %2554 = vmatpush.bf16.msra.mxu0 %v2414
    %2555 = vmatpush.bf16.msra.mxu0 %v2412
    %2556 = vmatpush.bf16.msra.mxu0 %v2410
    %2557 = vmatpush.bf16.msra.mxu0 %v2408
    %2558 = vmatpush.bf16.msra.mxu0 %v2406
    %2559 = vmatpush.bf16.msra.mxu0 %v2404
    %2560 = vmatmul.bf16.gmra.mxu0 %v2013
    %v2561 = vpop.f32.mrf.mxu0
    %v2562 = vadd.f32 %v2549, %v2561
    %v2563 = vpop.f32.mrf.mxu0
    %2564 = vdwg.mxu0
    %2565 = vmatpush.bf16.msra.mxu0 %v2355
    %2566 = vmatpush.bf16.msra.mxu0 %v2353
    %2567 = vmatpush.bf16.msra.mxu0 %v2351
    %2568 = vmatpush.bf16.msra.mxu0 %v2349
    %2569 = vmatpush.bf16.msra.mxu0 %v2347
    %2570 = vmatpush.bf16.msra.mxu0 %v2345
    %2571 = vmatpush.bf16.msra.mxu0 %v2343
    %2572 = vmatpush.bf16.msra.mxu0 %v2341
    %2573 = vmatmul.bf16.gmra.mxu0 %v2009
    %v2574 = vpop.f32.mrf.mxu0
    %v2575 = vadd.f32 %v2097, %v2574
    %v2576 = vpop.f32.mrf.mxu0
    %2577 = vdwg.mxu0
    %2578 = vmatpush.bf16.msra.mxu0 %v2371
    %2579 = vmatpush.bf16.msra.mxu0 %v2369
    %2580 = vmatpush.bf16.msra.mxu0 %v2367
    %2581 = vmatpush.bf16.msra.mxu0 %v2365
    %2582 = vmatpush.bf16.msra.mxu0 %v2363
    %2583 = vmatpush.bf16.msra.mxu0 %v2361
    %2584 = vmatpush.bf16.msra.mxu0 %v2359
    %2585 = vmatpush.bf16.msra.mxu0 %v2357
    %2586 = vmatmul.bf16.gmra.mxu0 %v2010
    %v2587 = vpop.f32.mrf.mxu0
    %v2588 = vadd.f32 %v2575, %v2587
    %v2589 = vpop.f32.mrf.mxu0
    %2590 = vdwg.mxu0
    %2591 = vmatpush.bf16.msra.mxu0 %v2387
    %2592 = vmatpush.bf16.msra.mxu0 %v2385
    %2593 = vmatpush.bf16.msra.mxu0 %v2383
    %2594 = vmatpush.bf16.msra.mxu0 %v2381
    %2595 = vmatpush.bf16.msra.mxu0 %v2379
    %2596 = vmatpush.bf16.msra.mxu0 %v2377
    %2597 = vmatpush.bf16.msra.mxu0 %v2375
    %2598 = vmatpush.bf16.msra.mxu0 %v2373
    %2599 = vmatmul.bf16.gmra.mxu0 %v2011
    %v2600 = vpop.f32.mrf.mxu0
    %v2601 = vadd.f32 %v2588, %v2600
    %v2602 = vpop.f32.mrf.mxu0
    %2603 = vdwg.mxu0
    %2604 = vmatpush.bf16.msra.mxu0 %v2403
    %2605 = vmatpush.bf16.msra.mxu0 %v2401
    %2606 = vmatpush.bf16.msra.mxu0 %v2399
    %2607 = vmatpush.bf16.msra.mxu0 %v2397
    %2608 = vmatpush.bf16.msra.mxu0 %v2395
    %2609 = vmatpush.bf16.msra.mxu0 %v2393
    %2610 = vmatpush.bf16.msra.mxu0 %v2391
    %2611 = vmatpush.bf16.msra.mxu0 %v2389
    %2612 = vmatmul.bf16.gmra.mxu0 %v2012
    %v2613 = vpop.f32.mrf.mxu0
    %v2614 = vadd.f32 %v2601, %v2613
    %v2615 = vpop.f32.mrf.mxu0
    %2616 = vdwg.mxu0
    %2617 = vmatpush.bf16.msra.mxu0 %v2419
    %2618 = vmatpush.bf16.msra.mxu0 %v2417
    %2619 = vmatpush.bf16.msra.mxu0 %v2415
    %2620 = vmatpush.bf16.msra.mxu0 %v2413
    %2621 = vmatpush.bf16.msra.mxu0 %v2411
    %2622 = vmatpush.bf16.msra.mxu0 %v2409
    %2623 = vmatpush.bf16.msra.mxu0 %v2407
    %2624 = vmatpush.bf16.msra.mxu0 %v2405
    %2625 = vmatmul.bf16.gmra.mxu0 %v2013
    %v2626 = vpop.f32.mrf.mxu0
    %v2627 = vadd.f32 %v2614, %v2626
    %v2628 = vpop.f32.mrf.mxu0
    %2629 = vdwg.mxu0
    %v2630 = vmax.f32 %v2562, 0.0
    %v2631 = vmax.f32 %v2627, 0.0
    %v2632 = vld [vmem:[#allocation8 + $0x8] sm:$0xff]
    %v2633 = vld [vmem:[#allocation8 + $0x28] sm:$0xff]
    %v2634 = vld [vmem:[#allocation8 + $0x48] sm:$0xff]
    %v2635 = vld [vmem:[#allocation8 + $0x68] sm:$0xff]
    %v2636 = vld [vmem:[#allocation8 + $0x88] sm:$0xff]
    %v2637 = vld [vmem:[#allocation8 + $0xa8] sm:$0xff]
    %v2638 = vld [vmem:[#allocation8 + $0xc8] sm:$0xff]
    %v2639 = vld [vmem:[#allocation8 + $0xe8] sm:$0xff]
    %v2640 = vld [vmem:[#allocation8 + $0x108] sm:$0xff]
    %v2641 = vld [vmem:[#allocation8 + $0x128] sm:$0xff]
    %v2642 = vld [vmem:[#allocation8 + $0x148] sm:$0xff]
    %v2643 = vld [vmem:[#allocation8 + $0x168] sm:$0xff]
    %v2644 = vld [vmem:[#allocation8 + $0x188] sm:$0xff]
    %v2645 = vld [vmem:[#allocation8 + $0x1a8] sm:$0xff]
    %v2646 = vld [vmem:[#allocation8 + $0x1c8] sm:$0xff]
    %v2647 = vld [vmem:[#allocation8 + $0x1e8] sm:$0xff]
    %v2648 = vld [vmem:[#allocation8 + $0x208] sm:$0xff]
    %v2649 = vld [vmem:[#allocation8 + $0x228] sm:$0xff]
    %v2650 = vld [vmem:[#allocation8 + $0x248] sm:$0xff]
    %v2651 = vld [vmem:[#allocation8 + $0x268] sm:$0xff]
    %v2652 = vld [vmem:[#allocation8 + $0x288] sm:$0xff]
    %v2653 = vld [vmem:[#allocation8 + $0x2a8] sm:$0xff]
    %v2654 = vld [vmem:[#allocation8 + $0x2c8] sm:$0xff]
    %v2655 = vld [vmem:[#allocation8 + $0x2e8] sm:$0xff]
    %v2656 = vld [vmem:[#allocation8 + $0x308] sm:$0xff]
    %v2657 = vld [vmem:[#allocation8 + $0x328] sm:$0xff]
    %v2658 = vld [vmem:[#allocation8 + $0x348] sm:$0xff]
    %v2659 = vld [vmem:[#allocation8 + $0x368] sm:$0xff]
    %v2660 = vld [vmem:[#allocation8 + $0x388] sm:$0xff]
    %v2661 = vld [vmem:[#allocation8 + $0x3a8] sm:$0xff]
    %v2662 = vld [vmem:[#allocation8 + $0x3c8] sm:$0xff]
    %v2663 = vld [vmem:[#allocation8 + $0x3e8] sm:$0xff]
    %v2664 = vld [vmem:[#allocation8 + $0x408] sm:$0xff]
    %v2665 = vld [vmem:[#allocation8 + $0x428] sm:$0xff]
    %v2666 = vld [vmem:[#allocation8 + $0x448] sm:$0xff]
    %v2667 = vld [vmem:[#allocation8 + $0x468] sm:$0xff]
    %v2668 = vld [vmem:[#allocation8 + $0x488] sm:$0xff]
    %v2669 = vld [vmem:[#allocation8 + $0x4a8] sm:$0xff]
    %v2670 = vld [vmem:[#allocation8 + $0x4c8] sm:$0xff]
    %v2671 = vld [vmem:[#allocation8 + $0x4e8] sm:$0xff]
    %v2672 = vld [vmem:[#allocation8 + $0x508] sm:$0xff]
    %v2673 = vld [vmem:[#allocation8 + $0x528] sm:$0xff]
    %v2674 = vld [vmem:[#allocation8 + $0x548] sm:$0xff]
    %v2675 = vld [vmem:[#allocation8 + $0x568] sm:$0xff]
    %v2676 = vld [vmem:[#allocation8 + $0x588] sm:$0xff]
    %v2677 = vld [vmem:[#allocation8 + $0x5a8] sm:$0xff]
    %v2678 = vld [vmem:[#allocation8 + $0x5c8] sm:$0xff]
    %v2679 = vld [vmem:[#allocation8 + $0x5e8] sm:$0xff]
    %v2680 = vld [vmem:[#allocation8 + $0x608] sm:$0xff]
    %v2681 = vld [vmem:[#allocation8 + $0x628] sm:$0xff]
    %v2682 = vld [vmem:[#allocation8 + $0x648] sm:$0xff]
    %v2683 = vld [vmem:[#allocation8 + $0x668] sm:$0xff]
    %v2684 = vld [vmem:[#allocation8 + $0x688] sm:$0xff]
    %v2685 = vld [vmem:[#allocation8 + $0x6a8] sm:$0xff]
    %v2686 = vld [vmem:[#allocation8 + $0x6c8] sm:$0xff]
    %v2687 = vld [vmem:[#allocation8 + $0x6e8] sm:$0xff]
    %v2688 = vld [vmem:[#allocation8 + $0x708] sm:$0xff]
    %v2689 = vld [vmem:[#allocation8 + $0x728] sm:$0xff]
    %v2690 = vld [vmem:[#allocation8 + $0x748] sm:$0xff]
    %v2691 = vld [vmem:[#allocation8 + $0x768] sm:$0xff]
    %v2692 = vld [vmem:[#allocation8 + $0x788] sm:$0xff]
    %v2693 = vld [vmem:[#allocation8 + $0x7a8] sm:$0xff]
    %v2694 = vld [vmem:[#allocation8 + $0x7c8] sm:$0xff]
    %v2695 = vld [vmem:[#allocation8 + $0x7e8] sm:$0xff]
    %v2696 = vld [vmem:[#allocation8 + $0x808] sm:$0xff]
    %v2697 = vld [vmem:[#allocation8 + $0x828] sm:$0xff]
    %v2698 = vld [vmem:[#allocation8 + $0x848] sm:$0xff]
    %v2699 = vld [vmem:[#allocation8 + $0x868] sm:$0xff]
    %v2700 = vld [vmem:[#allocation8 + $0x888] sm:$0xff]
    %v2701 = vld [vmem:[#allocation8 + $0x8a8] sm:$0xff]
    %v2702 = vld [vmem:[#allocation8 + $0x8c8] sm:$0xff]
    %v2703 = vld [vmem:[#allocation8 + $0x8e8] sm:$0xff]
    %v2704 = vld [vmem:[#allocation8 + $0x908] sm:$0xff]
    %v2705 = vld [vmem:[#allocation8 + $0x928] sm:$0xff]
    %v2706 = vld [vmem:[#allocation8 + $0x948] sm:$0xff]
    %v2707 = vld [vmem:[#allocation8 + $0x968] sm:$0xff]
    %v2708 = vld [vmem:[#allocation8 + $0x988] sm:$0xff]
    %v2709 = vld [vmem:[#allocation8 + $0x9a8] sm:$0xff]
    %v2710 = vld [vmem:[#allocation8 + $0x9c8] sm:$0xff]
    %v2711 = vld [vmem:[#allocation8 + $0x9e8] sm:$0xff]
    %v2792 = vunpack.c.l.b16 %v2632
    %v2793 = vunpack.c.h.b16 %v2632
    %v2794 = vunpack.c.l.b16 %v2633
    %v2795 = vunpack.c.h.b16 %v2633
    %v2796 = vunpack.c.l.b16 %v2634
    %v2797 = vunpack.c.h.b16 %v2634
    %v2798 = vunpack.c.l.b16 %v2635
    %v2799 = vunpack.c.h.b16 %v2635
    %v2800 = vunpack.c.l.b16 %v2636
    %v2801 = vunpack.c.h.b16 %v2636
    %v2802 = vunpack.c.l.b16 %v2637
    %v2803 = vunpack.c.h.b16 %v2637
    %v2804 = vunpack.c.l.b16 %v2638
    %v2805 = vunpack.c.h.b16 %v2638
    %v2806 = vunpack.c.l.b16 %v2639
    %v2807 = vunpack.c.h.b16 %v2639
    %v2808 = vunpack.c.l.b16 %v2640
    %v2809 = vunpack.c.h.b16 %v2640
    %v2810 = vunpack.c.l.b16 %v2641
    %v2811 = vunpack.c.h.b16 %v2641
    %v2812 = vunpack.c.l.b16 %v2642
    %v2813 = vunpack.c.h.b16 %v2642
    %v2814 = vunpack.c.l.b16 %v2643
    %v2815 = vunpack.c.h.b16 %v2643
    %v2816 = vunpack.c.l.b16 %v2644
    %v2817 = vunpack.c.h.b16 %v2644
    %v2818 = vunpack.c.l.b16 %v2645
    %v2819 = vunpack.c.h.b16 %v2645
    %v2820 = vunpack.c.l.b16 %v2646
    %v2821 = vunpack.c.h.b16 %v2646
    %v2822 = vunpack.c.l.b16 %v2647
    %v2823 = vunpack.c.h.b16 %v2647
    %v2824 = vunpack.c.l.b16 %v2648
    %v2825 = vunpack.c.h.b16 %v2648
    %v2826 = vunpack.c.l.b16 %v2649
    %v2827 = vunpack.c.h.b16 %v2649
    %v2828 = vunpack.c.l.b16 %v2650
    %v2829 = vunpack.c.h.b16 %v2650
    %v2830 = vunpack.c.l.b16 %v2651
    %v2831 = vunpack.c.h.b16 %v2651
    %v2832 = vunpack.c.l.b16 %v2652
    %v2833 = vunpack.c.h.b16 %v2652
    %v2834 = vunpack.c.l.b16 %v2653
    %v2835 = vunpack.c.h.b16 %v2653
    %v2836 = vunpack.c.l.b16 %v2654
    %v2837 = vunpack.c.h.b16 %v2654
    %v2838 = vunpack.c.l.b16 %v2655
    %v2839 = vunpack.c.h.b16 %v2655
    %v2840 = vunpack.c.l.b16 %v2656
    %v2841 = vunpack.c.h.b16 %v2656
    %v2842 = vunpack.c.l.b16 %v2657
    %v2843 = vunpack.c.h.b16 %v2657
    %v2844 = vunpack.c.l.b16 %v2658
    %v2845 = vunpack.c.h.b16 %v2658
    %v2846 = vunpack.c.l.b16 %v2659
    %v2847 = vunpack.c.h.b16 %v2659
    %v2848 = vunpack.c.l.b16 %v2660
    %v2849 = vunpack.c.h.b16 %v2660
    %v2850 = vunpack.c.l.b16 %v2661
    %v2851 = vunpack.c.h.b16 %v2661
    %v2852 = vunpack.c.l.b16 %v2662
    %v2853 = vunpack.c.h.b16 %v2662
    %v2854 = vunpack.c.l.b16 %v2663
    %v2855 = vunpack.c.h.b16 %v2663
    %v2856 = vunpack.c.l.b16 %v2664
    %v2857 = vunpack.c.h.b16 %v2664
    %v2858 = vunpack.c.l.b16 %v2665
    %v2859 = vunpack.c.h.b16 %v2665
    %v2860 = vunpack.c.l.b16 %v2666
    %v2861 = vunpack.c.h.b16 %v2666
    %v2862 = vunpack.c.l.b16 %v2667
    %v2863 = vunpack.c.h.b16 %v2667
    %v2864 = vunpack.c.l.b16 %v2668
    %v2865 = vunpack.c.h.b16 %v2668
    %v2866 = vunpack.c.l.b16 %v2669
    %v2867 = vunpack.c.h.b16 %v2669
    %v2868 = vunpack.c.l.b16 %v2670
    %v2869 = vunpack.c.h.b16 %v2670
    %v2870 = vunpack.c.l.b16 %v2671
    %v2871 = vunpack.c.h.b16 %v2671
    %v2872 = vunpack.c.l.b16 %v2672
    %v2873 = vunpack.c.h.b16 %v2672
    %v2874 = vunpack.c.l.b16 %v2673
    %v2875 = vunpack.c.h.b16 %v2673
    %v2876 = vunpack.c.l.b16 %v2674
    %v2877 = vunpack.c.h.b16 %v2674
    %v2878 = vunpack.c.l.b16 %v2675
    %v2879 = vunpack.c.h.b16 %v2675
    %v2880 = vunpack.c.l.b16 %v2676
    %v2881 = vunpack.c.h.b16 %v2676
    %v2882 = vunpack.c.l.b16 %v2677
    %v2883 = vunpack.c.h.b16 %v2677
    %v2884 = vunpack.c.l.b16 %v2678
    %v2885 = vunpack.c.h.b16 %v2678
    %v2886 = vunpack.c.l.b16 %v2679
    %v2887 = vunpack.c.h.b16 %v2679
    %v2888 = vunpack.c.l.b16 %v2680
    %v2889 = vunpack.c.h.b16 %v2680
    %v2890 = vunpack.c.l.b16 %v2681
    %v2891 = vunpack.c.h.b16 %v2681
    %v2892 = vunpack.c.l.b16 %v2682
    %v2893 = vunpack.c.h.b16 %v2682
    %v2894 = vunpack.c.l.b16 %v2683
    %v2895 = vunpack.c.h.b16 %v2683
    %v2896 = vunpack.c.l.b16 %v2684
    %v2897 = vunpack.c.h.b16 %v2684
    %v2898 = vunpack.c.l.b16 %v2685
    %v2899 = vunpack.c.h.b16 %v2685
    %v2900 = vunpack.c.l.b16 %v2686
    %v2901 = vunpack.c.h.b16 %v2686
    %v2902 = vunpack.c.l.b16 %v2687
    %v2903 = vunpack.c.h.b16 %v2687
    %v2904 = vunpack.c.l.b16 %v2688
    %v2905 = vunpack.c.h.b16 %v2688
    %v2906 = vunpack.c.l.b16 %v2689
    %v2907 = vunpack.c.h.b16 %v2689
    %v2908 = vunpack.c.l.b16 %v2690
    %v2909 = vunpack.c.h.b16 %v2690
    %v2910 = vunpack.c.l.b16 %v2691
    %v2911 = vunpack.c.h.b16 %v2691
    %v2912 = vunpack.c.l.b16 %v2692
    %v2913 = vunpack.c.h.b16 %v2692
    %v2914 = vunpack.c.l.b16 %v2693
    %v2915 = vunpack.c.h.b16 %v2693
    %v2916 = vunpack.c.l.b16 %v2694
    %v2917 = vunpack.c.h.b16 %v2694
    %v2918 = vunpack.c.l.b16 %v2695
    %v2919 = vunpack.c.h.b16 %v2695
    %v2920 = vunpack.c.l.b16 %v2696
    %v2921 = vunpack.c.h.b16 %v2696
    %v2922 = vunpack.c.l.b16 %v2697
    %v2923 = vunpack.c.h.b16 %v2697
    %v2924 = vunpack.c.l.b16 %v2698
    %v2925 = vunpack.c.h.b16 %v2698
    %v2926 = vunpack.c.l.b16 %v2699
    %v2927 = vunpack.c.h.b16 %v2699
    %v2928 = vunpack.c.l.b16 %v2700
    %v2929 = vunpack.c.h.b16 %v2700
    %v2930 = vunpack.c.l.b16 %v2701
    %v2931 = vunpack.c.h.b16 %v2701
    %v2932 = vunpack.c.l.b16 %v2702
    %v2933 = vunpack.c.h.b16 %v2702
    %v2934 = vunpack.c.l.b16 %v2703
    %v2935 = vunpack.c.h.b16 %v2703
    %v2936 = vunpack.c.l.b16 %v2704
    %v2937 = vunpack.c.h.b16 %v2704
    %v2938 = vunpack.c.l.b16 %v2705
    %v2939 = vunpack.c.h.b16 %v2705
    %v2940 = vunpack.c.l.b16 %v2706
    %v2941 = vunpack.c.h.b16 %v2706
    %v2942 = vunpack.c.l.b16 %v2707
    %v2943 = vunpack.c.h.b16 %v2707
    %v2944 = vunpack.c.l.b16 %v2708
    %v2945 = vunpack.c.h.b16 %v2708
    %v2946 = vunpack.c.l.b16 %v2709
    %v2947 = vunpack.c.h.b16 %v2709
    %v2948 = vunpack.c.l.b16 %v2710
    %v2949 = vunpack.c.h.b16 %v2710
    %v2950 = vunpack.c.l.b16 %v2711
    %v2951 = vunpack.c.h.b16 %v2711
    %v2952 = vpack.c.b16 %v2794, %v2792
    %v2953 = vpack.c.b16 %v2795, %v2793
    %v2954 = vpack.c.b16 %v2798, %v2796
    %v2955 = vpack.c.b16 %v2799, %v2797
    %v2956 = vpack.c.b16 %v2802, %v2800
    %v2957 = vpack.c.b16 %v2803, %v2801
    %v2958 = vpack.c.b16 %v2806, %v2804
    %v2959 = vpack.c.b16 %v2807, %v2805
    %v2960 = vpack.c.b16 %v2810, %v2808
    %v2961 = vpack.c.b16 %v2811, %v2809
    %v2962 = vpack.c.b16 %v2814, %v2812
    %v2963 = vpack.c.b16 %v2815, %v2813
    %v2964 = vpack.c.b16 %v2818, %v2816
    %v2965 = vpack.c.b16 %v2819, %v2817
    %v2966 = vpack.c.b16 %v2822, %v2820
    %v2967 = vpack.c.b16 %v2823, %v2821
    %v2968 = vpack.c.b16 %v2826, %v2824
    %v2969 = vpack.c.b16 %v2827, %v2825
    %v2970 = vpack.c.b16 %v2830, %v2828
    %v2971 = vpack.c.b16 %v2831, %v2829
    %v2972 = vpack.c.b16 %v2834, %v2832
    %v2973 = vpack.c.b16 %v2835, %v2833
    %v2974 = vpack.c.b16 %v2838, %v2836
    %v2975 = vpack.c.b16 %v2839, %v2837
    %v2976 = vpack.c.b16 %v2842, %v2840
    %v2977 = vpack.c.b16 %v2843, %v2841
    %v2978 = vpack.c.b16 %v2846, %v2844
    %v2979 = vpack.c.b16 %v2847, %v2845
    %v2980 = vpack.c.b16 %v2850, %v2848
    %v2981 = vpack.c.b16 %v2851, %v2849
    %v2982 = vpack.c.b16 %v2854, %v2852
    %v2983 = vpack.c.b16 %v2855, %v2853
    %v2984 = vpack.c.b16 %v2858, %v2856
    %v2985 = vpack.c.b16 %v2859, %v2857
    %v2986 = vpack.c.b16 %v2862, %v2860
    %v2987 = vpack.c.b16 %v2863, %v2861
    %v2988 = vpack.c.b16 %v2866, %v2864
    %v2989 = vpack.c.b16 %v2867, %v2865
    %v2990 = vpack.c.b16 %v2870, %v2868
    %v2991 = vpack.c.b16 %v2871, %v2869
    %v2992 = vpack.c.b16 %v2874, %v2872
    %v2993 = vpack.c.b16 %v2875, %v2873
    %v2994 = vpack.c.b16 %v2878, %v2876
    %v2995 = vpack.c.b16 %v2879, %v2877
    %v2996 = vpack.c.b16 %v2882, %v2880
    %v2997 = vpack.c.b16 %v2883, %v2881
    %v2998 = vpack.c.b16 %v2886, %v2884
    %v2999 = vpack.c.b16 %v2887, %v2885
    %v3000 = vpack.c.b16 %v2890, %v2888
    %v3001 = vpack.c.b16 %v2891, %v2889
    %v3002 = vpack.c.b16 %v2894, %v2892
    %v3003 = vpack.c.b16 %v2895, %v2893
    %v3004 = vpack.c.b16 %v2898, %v2896
    %v3005 = vpack.c.b16 %v2899, %v2897
    %v3006 = vpack.c.b16 %v2902, %v2900
    %v3007 = vpack.c.b16 %v2903, %v2901
    %v3008 = vpack.c.b16 %v2906, %v2904
    %v3009 = vpack.c.b16 %v2907, %v2905
    %v3010 = vpack.c.b16 %v2910, %v2908
    %v3011 = vpack.c.b16 %v2911, %v2909
    %v3012 = vpack.c.b16 %v2914, %v2912
    %v3013 = vpack.c.b16 %v2915, %v2913
    %v3014 = vpack.c.b16 %v2918, %v2916
    %v3015 = vpack.c.b16 %v2919, %v2917
    %v3016 = vpack.c.b16 %v2922, %v2920
    %v3017 = vpack.c.b16 %v2923, %v2921
    %v3018 = vpack.c.b16 %v2926, %v2924
    %v3019 = vpack.c.b16 %v2927, %v2925
    %v3020 = vpack.c.b16 %v2930, %v2928
    %v3021 = vpack.c.b16 %v2931, %v2929
    %v3022 = vpack.c.b16 %v2934, %v2932
    %v3023 = vpack.c.b16 %v2935, %v2933
    %v3024 = vpack.c.b16 %v2938, %v2936
    %v3025 = vpack.c.b16 %v2939, %v2937
    %v3026 = vpack.c.b16 %v2942, %v2940
    %v3027 = vpack.c.b16 %v2943, %v2941
    %v3028 = vpack.c.b16 %v2946, %v2944
    %v3029 = vpack.c.b16 %v2947, %v2945
    %v3030 = vpack.c.b16 %v2950, %v2948
    %v3031 = vpack.c.b16 %v2951, %v2949
    %3112 = vmatpush.bf16.msra.mxu0 %v2966
    %3113 = vmatpush.bf16.msra.mxu0 %v2964
    %3114 = vmatpush.bf16.msra.mxu0 %v2962
    %3115 = vmatpush.bf16.msra.mxu0 %v2960
    %3116 = vmatpush.bf16.msra.mxu0 %v2958
    %3117 = vmatpush.bf16.msra.mxu0 %v2956
    %3118 = vmatpush.bf16.msra.mxu0 %v2954
    %3119 = vmatpush.bf16.msra.mxu0 %v2952
    %3120 = vmatmul.bf16.gmra.mxu0 %v2009
    %v3121 = vpop.f32.mrf.mxu0
    %v3122 = vadd.f32 %v2096, %v3121
    %v3123 = vpop.f32.mrf.mxu0
    %3124 = vdwg.mxu0
    %3125 = vmatpush.bf16.msra.mxu0 %v2982
    %3126 = vmatpush.bf16.msra.mxu0 %v2980
    %3127 = vmatpush.bf16.msra.mxu0 %v2978
    %3128 = vmatpush.bf16.msra.mxu0 %v2976
    %3129 = vmatpush.bf16.msra.mxu0 %v2974
    %3130 = vmatpush.bf16.msra.mxu0 %v2972
    %3131 = vmatpush.bf16.msra.mxu0 %v2970
    %3132 = vmatpush.bf16.msra.mxu0 %v2968
    %3133 = vmatmul.bf16.gmra.mxu0 %v2010
    %v3134 = vpop.f32.mrf.mxu0
    %v3135 = vadd.f32 %v3122, %v3134
    %v3136 = vpop.f32.mrf.mxu0
    %3137 = vdwg.mxu0
    %3138 = vmatpush.bf16.msra.mxu0 %v2998
    %3139 = vmatpush.bf16.msra.mxu0 %v2996
    %3140 = vmatpush.bf16.msra.mxu0 %v2994
    %3141 = vmatpush.bf16.msra.mxu0 %v2992
    %3142 = vmatpush.bf16.msra.mxu0 %v2990
    %3143 = vmatpush.bf16.msra.mxu0 %v2988
    %3144 = vmatpush.bf16.msra.mxu0 %v2986
    %3145 = vmatpush.bf16.msra.mxu0 %v2984
    %3146 = vmatmul.bf16.gmra.mxu0 %v2011
    %v3147 = vpop.f32.mrf.mxu0
    %v3148 = vadd.f32 %v3135, %v3147
    %v3149 = vpop.f32.mrf.mxu0
    %3150 = vdwg.mxu0
    %3151 = vmatpush.bf16.msra.mxu0 %v3014
    %3152 = vmatpush.bf16.msra.mxu0 %v3012
    %3153 = vmatpush.bf16.msra.mxu0 %v3010
    %3154 = vmatpush.bf16.msra.mxu0 %v3008
    %3155 = vmatpush.bf16.msra.mxu0 %v3006
    %3156 = vmatpush.bf16.msra.mxu0 %v3004
    %3157 = vmatpush.bf16.msra.mxu0 %v3002
    %3158 = vmatpush.bf16.msra.mxu0 %v3000
    %3159 = vmatmul.bf16.gmra.mxu0 %v2012
    %v3160 = vpop.f32.mrf.mxu0
    %v3161 = vadd.f32 %v3148, %v3160
    %v3162 = vpop.f32.mrf.mxu0
    %3163 = vdwg.mxu0
    %3164 = vmatpush.bf16.msra.mxu0 %v3030
    %3165 = vmatpush.bf16.msra.mxu0 %v3028
    %3166 = vmatpush.bf16.msra.mxu0 %v3026
    %3167 = vmatpush.bf16.msra.mxu0 %v3024
    %3168 = vmatpush.bf16.msra.mxu0 %v3022
    %3169 = vmatpush.bf16.msra.mxu0 %v3020
    %3170 = vmatpush.bf16.msra.mxu0 %v3018
    %3171 = vmatpush.bf16.msra.mxu0 %v3016
    %3172 = vmatmul.bf16.gmra.mxu0 %v2013
    %v3173 = vpop.f32.mrf.mxu0
    %v3174 = vadd.f32 %v3161, %v3173
    %v3175 = vpop.f32.mrf.mxu0
    %3176 = vdwg.mxu0
    %3177 = vmatpush.bf16.msra.mxu0 %v2967
    %3178 = vmatpush.bf16.msra.mxu0 %v2965
    %3179 = vmatpush.bf16.msra.mxu0 %v2963
    %3180 = vmatpush.bf16.msra.mxu0 %v2961
    %3181 = vmatpush.bf16.msra.mxu0 %v2959
    %3182 = vmatpush.bf16.msra.mxu0 %v2957
    %3183 = vmatpush.bf16.msra.mxu0 %v2955
    %3184 = vmatpush.bf16.msra.mxu0 %v2953
    %3185 = vmatmul.bf16.gmra.mxu0 %v2009
    %v3186 = vpop.f32.mrf.mxu0
    %v3187 = vadd.f32 %v2097, %v3186
    %v3188 = vpop.f32.mrf.mxu0
    %3189 = vdwg.mxu0
    %3190 = vmatpush.bf16.msra.mxu0 %v2983
    %3191 = vmatpush.bf16.msra.mxu0 %v2981
    %3192 = vmatpush.bf16.msra.mxu0 %v2979
    %3193 = vmatpush.bf16.msra.mxu0 %v2977
    %3194 = vmatpush.bf16.msra.mxu0 %v2975
    %3195 = vmatpush.bf16.msra.mxu0 %v2973
    %3196 = vmatpush.bf16.msra.mxu0 %v2971
    %3197 = vmatpush.bf16.msra.mxu0 %v2969
    %3198 = vmatmul.bf16.gmra.mxu0 %v2010
    %v3199 = vpop.f32.mrf.mxu0
    %v3200 = vadd.f32 %v3187, %v3199
    %v3201 = vpop.f32.mrf.mxu0
    %3202 = vdwg.mxu0
    %3203 = vmatpush.bf16.msra.mxu0 %v2999
    %3204 = vmatpush.bf16.msra.mxu0 %v2997
    %3205 = vmatpush.bf16.msra.mxu0 %v2995
    %3206 = vmatpush.bf16.msra.mxu0 %v2993
    %3207 = vmatpush.bf16.msra.mxu0 %v2991
    %3208 = vmatpush.bf16.msra.mxu0 %v2989
    %3209 = vmatpush.bf16.msra.mxu0 %v2987
    %3210 = vmatpush.bf16.msra.mxu0 %v2985
    %3211 = vmatmul.bf16.gmra.mxu0 %v2011
    %v3212 = vpop.f32.mrf.mxu0
    %v3213 = vadd.f32 %v3200, %v3212
    %v3214 = vpop.f32.mrf.mxu0
    %3215 = vdwg.mxu0
    %3216 = vmatpush.bf16.msra.mxu0 %v3015
    %3217 = vmatpush.bf16.msra.mxu0 %v3013
    %3218 = vmatpush.bf16.msra.mxu0 %v3011
    %3219 = vmatpush.bf16.msra.mxu0 %v3009
    %3220 = vmatpush.bf16.msra.mxu0 %v3007
    %3221 = vmatpush.bf16.msra.mxu0 %v3005
    %3222 = vmatpush.bf16.msra.mxu0 %v3003
    %3223 = vmatpush.bf16.msra.mxu0 %v3001
    %3224 = vmatmul.bf16.gmra.mxu0 %v2012
    %v3225 = vpop.f32.mrf.mxu0
    %v3226 = vadd.f32 %v3213, %v3225
    %v3227 = vpop.f32.mrf.mxu0
    %3228 = vdwg.mxu0
    %3229 = vmatpush.bf16.msra.mxu0 %v3031
    %3230 = vmatpush.bf16.msra.mxu0 %v3029
    %3231 = vmatpush.bf16.msra.mxu0 %v3027
    %3232 = vmatpush.bf16.msra.mxu0 %v3025
    %3233 = vmatpush.bf16.msra.mxu0 %v3023
    %3234 = vmatpush.bf16.msra.mxu0 %v3021
    %3235 = vmatpush.bf16.msra.mxu0 %v3019
    %3236 = vmatpush.bf16.msra.mxu0 %v3017
    %3237 = vmatmul.bf16.gmra.mxu0 %v2013
    %v3238 = vpop.f32.mrf.mxu0
    %v3239 = vadd.f32 %v3226, %v3238
    %v3240 = vpop.f32.mrf.mxu0
    %3241 = vdwg.mxu0
    %v3242 = vmax.f32 %v3174, 0.0
    %v3243 = vmax.f32 %v3239, 0.0
    %v3244 = vmax.f32 %v2630, %v3242
    %v3245 = vmax.f32 %v2631, %v3243
    %v3246 = vld [vmem:[#allocation8 + $0x10] sm:$0xff]
    %v3247 = vld [vmem:[#allocation8 + $0x30] sm:$0xff]
    %v3248 = vld [vmem:[#allocation8 + $0x50] sm:$0xff]
    %v3249 = vld [vmem:[#allocation8 + $0x70] sm:$0xff]
    %v3250 = vld [vmem:[#allocation8 + $0x90] sm:$0xff]
    %v3251 = vld [vmem:[#allocation8 + $0xb0] sm:$0xff]
    %v3252 = vld [vmem:[#allocation8 + $0xd0] sm:$0xff]
    %v3253 = vld [vmem:[#allocation8 + $0xf0] sm:$0xff]
    %v3254 = vld [vmem:[#allocation8 + $0x110] sm:$0xff]
    %v3255 = vld [vmem:[#allocation8 + $0x130] sm:$0xff]
    %v3256 = vld [vmem:[#allocation8 + $0x150] sm:$0xff]
    %v3257 = vld [vmem:[#allocation8 + $0x170] sm:$0xff]
    %v3258 = vld [vmem:[#allocation8 + $0x190] sm:$0xff]
    %v3259 = vld [vmem:[#allocation8 + $0x1b0] sm:$0xff]
    %v3260 = vld [vmem:[#allocation8 + $0x1d0] sm:$0xff]
    %v3261 = vld [vmem:[#allocation8 + $0x1f0] sm:$0xff]
    %v3262 = vld [vmem:[#allocation8 + $0x210] sm:$0xff]
    %v3263 = vld [vmem:[#allocation8 + $0x230] sm:$0xff]
    %v3264 = vld [vmem:[#allocation8 + $0x250] sm:$0xff]
    %v3265 = vld [vmem:[#allocation8 + $0x270] sm:$0xff]
    %v3266 = vld [vmem:[#allocation8 + $0x290] sm:$0xff]
    %v3267 = vld [vmem:[#allocation8 + $0x2b0] sm:$0xff]
    %v3268 = vld [vmem:[#allocation8 + $0x2d0] sm:$0xff]
    %v3269 = vld [vmem:[#allocation8 + $0x2f0] sm:$0xff]
    %v3270 = vld [vmem:[#allocation8 + $0x310] sm:$0xff]
    %v3271 = vld [vmem:[#allocation8 + $0x330] sm:$0xff]
    %v3272 = vld [vmem:[#allocation8 + $0x350] sm:$0xff]
    %v3273 = vld [vmem:[#allocation8 + $0x370] sm:$0xff]
    %v3274 = vld [vmem:[#allocation8 + $0x390] sm:$0xff]
    %v3275 = vld [vmem:[#allocation8 + $0x3b0] sm:$0xff]
    %v3276 = vld [vmem:[#allocation8 + $0x3d0] sm:$0xff]
    %v3277 = vld [vmem:[#allocation8 + $0x3f0] sm:$0xff]
    %v3278 = vld [vmem:[#allocation8 + $0x410] sm:$0xff]
    %v3279 = vld [vmem:[#allocation8 + $0x430] sm:$0xff]
    %v3280 = vld [vmem:[#allocation8 + $0x450] sm:$0xff]
    %v3281 = vld [vmem:[#allocation8 + $0x470] sm:$0xff]
    %v3282 = vld [vmem:[#allocation8 + $0x490] sm:$0xff]
    %v3283 = vld [vmem:[#allocation8 + $0x4b0] sm:$0xff]
    %v3284 = vld [vmem:[#allocation8 + $0x4d0] sm:$0xff]
    %v3285 = vld [vmem:[#allocation8 + $0x4f0] sm:$0xff]
    %v3286 = vld [vmem:[#allocation8 + $0x510] sm:$0xff]
    %v3287 = vld [vmem:[#allocation8 + $0x530] sm:$0xff]
    %v3288 = vld [vmem:[#allocation8 + $0x550] sm:$0xff]
    %v3289 = vld [vmem:[#allocation8 + $0x570] sm:$0xff]
    %v3290 = vld [vmem:[#allocation8 + $0x590] sm:$0xff]
    %v3291 = vld [vmem:[#allocation8 + $0x5b0] sm:$0xff]
    %v3292 = vld [vmem:[#allocation8 + $0x5d0] sm:$0xff]
    %v3293 = vld [vmem:[#allocation8 + $0x5f0] sm:$0xff]
    %v3294 = vld [vmem:[#allocation8 + $0x610] sm:$0xff]
    %v3295 = vld [vmem:[#allocation8 + $0x630] sm:$0xff]
    %v3296 = vld [vmem:[#allocation8 + $0x650] sm:$0xff]
    %v3297 = vld [vmem:[#allocation8 + $0x670] sm:$0xff]
    %v3298 = vld [vmem:[#allocation8 + $0x690] sm:$0xff]
    %v3299 = vld [vmem:[#allocation8 + $0x6b0] sm:$0xff]
    %v3300 = vld [vmem:[#allocation8 + $0x6d0] sm:$0xff]
    %v3301 = vld [vmem:[#allocation8 + $0x6f0] sm:$0xff]
    %v3302 = vld [vmem:[#allocation8 + $0x710] sm:$0xff]
    %v3303 = vld [vmem:[#allocation8 + $0x730] sm:$0xff]
    %v3304 = vld [vmem:[#allocation8 + $0x750] sm:$0xff]
    %v3305 = vld [vmem:[#allocation8 + $0x770] sm:$0xff]
    %v3306 = vld [vmem:[#allocation8 + $0x790] sm:$0xff]
    %v3307 = vld [vmem:[#allocation8 + $0x7b0] sm:$0xff]
    %v3308 = vld [vmem:[#allocation8 + $0x7d0] sm:$0xff]
    %v3309 = vld [vmem:[#allocation8 + $0x7f0] sm:$0xff]
    %v3310 = vld [vmem:[#allocation8 + $0x810] sm:$0xff]
    %v3311 = vld [vmem:[#allocation8 + $0x830] sm:$0xff]
    %v3312 = vld [vmem:[#allocation8 + $0x850] sm:$0xff]
    %v3313 = vld [vmem:[#allocation8 + $0x870] sm:$0xff]
    %v3314 = vld [vmem:[#allocation8 + $0x890] sm:$0xff]
    %v3315 = vld [vmem:[#allocation8 + $0x8b0] sm:$0xff]
    %v3316 = vld [vmem:[#allocation8 + $0x8d0] sm:$0xff]
    %v3317 = vld [vmem:[#allocation8 + $0x8f0] sm:$0xff]
    %v3318 = vld [vmem:[#allocation8 + $0x910] sm:$0xff]
    %v3319 = vld [vmem:[#allocation8 + $0x930] sm:$0xff]
    %v3320 = vld [vmem:[#allocation8 + $0x950] sm:$0xff]
    %v3321 = vld [vmem:[#allocation8 + $0x970] sm:$0xff]
    %v3322 = vld [vmem:[#allocation8 + $0x990] sm:$0xff]
    %v3323 = vld [vmem:[#allocation8 + $0x9b0] sm:$0xff]
    %v3324 = vld [vmem:[#allocation8 + $0x9d0] sm:$0xff]
    %v3325 = vld [vmem:[#allocation8 + $0x9f0] sm:$0xff]
    %v3406 = vunpack.c.l.b16 %v3246
    %v3407 = vunpack.c.h.b16 %v3246
    %v3408 = vunpack.c.l.b16 %v3247
    %v3409 = vunpack.c.h.b16 %v3247
    %v3410 = vunpack.c.l.b16 %v3248
    %v3411 = vunpack.c.h.b16 %v3248
    %v3412 = vunpack.c.l.b16 %v3249
    %v3413 = vunpack.c.h.b16 %v3249
    %v3414 = vunpack.c.l.b16 %v3250
    %v3415 = vunpack.c.h.b16 %v3250
    %v3416 = vunpack.c.l.b16 %v3251
    %v3417 = vunpack.c.h.b16 %v3251
    %v3418 = vunpack.c.l.b16 %v3252
    %v3419 = vunpack.c.h.b16 %v3252
    %v3420 = vunpack.c.l.b16 %v3253
    %v3421 = vunpack.c.h.b16 %v3253
    %v3422 = vunpack.c.l.b16 %v3254
    %v3423 = vunpack.c.h.b16 %v3254
    %v3424 = vunpack.c.l.b16 %v3255
    %v3425 = vunpack.c.h.b16 %v3255
    %v3426 = vunpack.c.l.b16 %v3256
    %v3427 = vunpack.c.h.b16 %v3256
    %v3428 = vunpack.c.l.b16 %v3257
    %v3429 = vunpack.c.h.b16 %v3257
    %v3430 = vunpack.c.l.b16 %v3258
    %v3431 = vunpack.c.h.b16 %v3258
    %v3432 = vunpack.c.l.b16 %v3259
    %v3433 = vunpack.c.h.b16 %v3259
    %v3434 = vunpack.c.l.b16 %v3260
    %v3435 = vunpack.c.h.b16 %v3260
    %v3436 = vunpack.c.l.b16 %v3261
    %v3437 = vunpack.c.h.b16 %v3261
    %v3438 = vunpack.c.l.b16 %v3262
    %v3439 = vunpack.c.h.b16 %v3262
    %v3440 = vunpack.c.l.b16 %v3263
    %v3441 = vunpack.c.h.b16 %v3263
    %v3442 = vunpack.c.l.b16 %v3264
    %v3443 = vunpack.c.h.b16 %v3264
    %v3444 = vunpack.c.l.b16 %v3265
    %v3445 = vunpack.c.h.b16 %v3265
    %v3446 = vunpack.c.l.b16 %v3266
    %v3447 = vunpack.c.h.b16 %v3266
    %v3448 = vunpack.c.l.b16 %v3267
    %v3449 = vunpack.c.h.b16 %v3267
    %v3450 = vunpack.c.l.b16 %v3268
    %v3451 = vunpack.c.h.b16 %v3268
    %v3452 = vunpack.c.l.b16 %v3269
    %v3453 = vunpack.c.h.b16 %v3269
    %v3454 = vunpack.c.l.b16 %v3270
    %v3455 = vunpack.c.h.b16 %v3270
    %v3456 = vunpack.c.l.b16 %v3271
    %v3457 = vunpack.c.h.b16 %v3271
    %v3458 = vunpack.c.l.b16 %v3272
    %v3459 = vunpack.c.h.b16 %v3272
    %v3460 = vunpack.c.l.b16 %v3273
    %v3461 = vunpack.c.h.b16 %v3273
    %v3462 = vunpack.c.l.b16 %v3274
    %v3463 = vunpack.c.h.b16 %v3274
    %v3464 = vunpack.c.l.b16 %v3275
    %v3465 = vunpack.c.h.b16 %v3275
    %v3466 = vunpack.c.l.b16 %v3276
    %v3467 = vunpack.c.h.b16 %v3276
    %v3468 = vunpack.c.l.b16 %v3277
    %v3469 = vunpack.c.h.b16 %v3277
    %v3470 = vunpack.c.l.b16 %v3278
    %v3471 = vunpack.c.h.b16 %v3278
    %v3472 = vunpack.c.l.b16 %v3279
    %v3473 = vunpack.c.h.b16 %v3279
    %v3474 = vunpack.c.l.b16 %v3280
    %v3475 = vunpack.c.h.b16 %v3280
    %v3476 = vunpack.c.l.b16 %v3281
    %v3477 = vunpack.c.h.b16 %v3281
    %v3478 = vunpack.c.l.b16 %v3282
    %v3479 = vunpack.c.h.b16 %v3282
    %v3480 = vunpack.c.l.b16 %v3283
    %v3481 = vunpack.c.h.b16 %v3283
    %v3482 = vunpack.c.l.b16 %v3284
    %v3483 = vunpack.c.h.b16 %v3284
    %v3484 = vunpack.c.l.b16 %v3285
    %v3485 = vunpack.c.h.b16 %v3285
    %v3486 = vunpack.c.l.b16 %v3286
    %v3487 = vunpack.c.h.b16 %v3286
    %v3488 = vunpack.c.l.b16 %v3287
    %v3489 = vunpack.c.h.b16 %v3287
    %v3490 = vunpack.c.l.b16 %v3288
    %v3491 = vunpack.c.h.b16 %v3288
    %v3492 = vunpack.c.l.b16 %v3289
    %v3493 = vunpack.c.h.b16 %v3289
    %v3494 = vunpack.c.l.b16 %v3290
    %v3495 = vunpack.c.h.b16 %v3290
    %v3496 = vunpack.c.l.b16 %v3291
    %v3497 = vunpack.c.h.b16 %v3291
    %v3498 = vunpack.c.l.b16 %v3292
    %v3499 = vunpack.c.h.b16 %v3292
    %v3500 = vunpack.c.l.b16 %v3293
    %v3501 = vunpack.c.h.b16 %v3293
    %v3502 = vunpack.c.l.b16 %v3294
    %v3503 = vunpack.c.h.b16 %v3294
    %v3504 = vunpack.c.l.b16 %v3295
    %v3505 = vunpack.c.h.b16 %v3295
    %v3506 = vunpack.c.l.b16 %v3296
    %v3507 = vunpack.c.h.b16 %v3296
    %v3508 = vunpack.c.l.b16 %v3297
    %v3509 = vunpack.c.h.b16 %v3297
    %v3510 = vunpack.c.l.b16 %v3298
    %v3511 = vunpack.c.h.b16 %v3298
    %v3512 = vunpack.c.l.b16 %v3299
    %v3513 = vunpack.c.h.b16 %v3299
    %v3514 = vunpack.c.l.b16 %v3300
    %v3515 = vunpack.c.h.b16 %v3300
    %v3516 = vunpack.c.l.b16 %v3301
    %v3517 = vunpack.c.h.b16 %v3301
    %v3518 = vunpack.c.l.b16 %v3302
    %v3519 = vunpack.c.h.b16 %v3302
    %v3520 = vunpack.c.l.b16 %v3303
    %v3521 = vunpack.c.h.b16 %v3303
    %v3522 = vunpack.c.l.b16 %v3304
    %v3523 = vunpack.c.h.b16 %v3304
    %v3524 = vunpack.c.l.b16 %v3305
    %v3525 = vunpack.c.h.b16 %v3305
    %v3526 = vunpack.c.l.b16 %v3306
    %v3527 = vunpack.c.h.b16 %v3306
    %v3528 = vunpack.c.l.b16 %v3307
    %v3529 = vunpack.c.h.b16 %v3307
    %v3530 = vunpack.c.l.b16 %v3308
    %v3531 = vunpack.c.h.b16 %v3308
    %v3532 = vunpack.c.l.b16 %v3309
    %v3533 = vunpack.c.h.b16 %v3309
    %v3534 = vunpack.c.l.b16 %v3310
    %v3535 = vunpack.c.h.b16 %v3310
    %v3536 = vunpack.c.l.b16 %v3311
    %v3537 = vunpack.c.h.b16 %v3311
    %v3538 = vunpack.c.l.b16 %v3312
    %v3539 = vunpack.c.h.b16 %v3312
    %v3540 = vunpack.c.l.b16 %v3313
    %v3541 = vunpack.c.h.b16 %v3313
    %v3542 = vunpack.c.l.b16 %v3314
    %v3543 = vunpack.c.h.b16 %v3314
    %v3544 = vunpack.c.l.b16 %v3315
    %v3545 = vunpack.c.h.b16 %v3315
    %v3546 = vunpack.c.l.b16 %v3316
    %v3547 = vunpack.c.h.b16 %v3316
    %v3548 = vunpack.c.l.b16 %v3317
    %v3549 = vunpack.c.h.b16 %v3317
    %v3550 = vunpack.c.l.b16 %v3318
    %v3551 = vunpack.c.h.b16 %v3318
    %v3552 = vunpack.c.l.b16 %v3319
    %v3553 = vunpack.c.h.b16 %v3319
    %v3554 = vunpack.c.l.b16 %v3320
    %v3555 = vunpack.c.h.b16 %v3320
    %v3556 = vunpack.c.l.b16 %v3321
    %v3557 = vunpack.c.h.b16 %v3321
    %v3558 = vunpack.c.l.b16 %v3322
    %v3559 = vunpack.c.h.b16 %v3322
    %v3560 = vunpack.c.l.b16 %v3323
    %v3561 = vunpack.c.h.b16 %v3323
    %v3562 = vunpack.c.l.b16 %v3324
    %v3563 = vunpack.c.h.b16 %v3324
    %v3564 = vunpack.c.l.b16 %v3325
    %v3565 = vunpack.c.h.b16 %v3325
    %v3566 = vpack.c.b16 %v3408, %v3406
    %v3567 = vpack.c.b16 %v3409, %v3407
    %v3568 = vpack.c.b16 %v3412, %v3410
    %v3569 = vpack.c.b16 %v3413, %v3411
    %v3570 = vpack.c.b16 %v3416, %v3414
    %v3571 = vpack.c.b16 %v3417, %v3415
    %v3572 = vpack.c.b16 %v3420, %v3418
    %v3573 = vpack.c.b16 %v3421, %v3419
    %v3574 = vpack.c.b16 %v3424, %v3422
    %v3575 = vpack.c.b16 %v3425, %v3423
    %v3576 = vpack.c.b16 %v3428, %v3426
    %v3577 = vpack.c.b16 %v3429, %v3427
    %v3578 = vpack.c.b16 %v3432, %v3430
    %v3579 = vpack.c.b16 %v3433, %v3431
    %v3580 = vpack.c.b16 %v3436, %v3434
    %v3581 = vpack.c.b16 %v3437, %v3435
    %v3582 = vpack.c.b16 %v3440, %v3438
    %v3583 = vpack.c.b16 %v3441, %v3439
    %v3584 = vpack.c.b16 %v3444, %v3442
    %v3585 = vpack.c.b16 %v3445, %v3443
    %v3586 = vpack.c.b16 %v3448, %v3446
    %v3587 = vpack.c.b16 %v3449, %v3447
    %v3588 = vpack.c.b16 %v3452, %v3450
    %v3589 = vpack.c.b16 %v3453, %v3451
    %v3590 = vpack.c.b16 %v3456, %v3454
    %v3591 = vpack.c.b16 %v3457, %v3455
    %v3592 = vpack.c.b16 %v3460, %v3458
    %v3593 = vpack.c.b16 %v3461, %v3459
    %v3594 = vpack.c.b16 %v3464, %v3462
    %v3595 = vpack.c.b16 %v3465, %v3463
    %v3596 = vpack.c.b16 %v3468, %v3466
    %v3597 = vpack.c.b16 %v3469, %v3467
    %v3598 = vpack.c.b16 %v3472, %v3470
    %v3599 = vpack.c.b16 %v3473, %v3471
    %v3600 = vpack.c.b16 %v3476, %v3474
    %v3601 = vpack.c.b16 %v3477, %v3475
    %v3602 = vpack.c.b16 %v3480, %v3478
    %v3603 = vpack.c.b16 %v3481, %v3479
    %v3604 = vpack.c.b16 %v3484, %v3482
    %v3605 = vpack.c.b16 %v3485, %v3483
    %v3606 = vpack.c.b16 %v3488, %v3486
    %v3607 = vpack.c.b16 %v3489, %v3487
    %v3608 = vpack.c.b16 %v3492, %v3490
    %v3609 = vpack.c.b16 %v3493, %v3491
    %v3610 = vpack.c.b16 %v3496, %v3494
    %v3611 = vpack.c.b16 %v3497, %v3495
    %v3612 = vpack.c.b16 %v3500, %v3498
    %v3613 = vpack.c.b16 %v3501, %v3499
    %v3614 = vpack.c.b16 %v3504, %v3502
    %v3615 = vpack.c.b16 %v3505, %v3503
    %v3616 = vpack.c.b16 %v3508, %v3506
    %v3617 = vpack.c.b16 %v3509, %v3507
    %v3618 = vpack.c.b16 %v3512, %v3510
    %v3619 = vpack.c.b16 %v3513, %v3511
    %v3620 = vpack.c.b16 %v3516, %v3514
    %v3621 = vpack.c.b16 %v3517, %v3515
    %v3622 = vpack.c.b16 %v3520, %v3518
    %v3623 = vpack.c.b16 %v3521, %v3519
    %v3624 = vpack.c.b16 %v3524, %v3522
    %v3625 = vpack.c.b16 %v3525, %v3523
    %v3626 = vpack.c.b16 %v3528, %v3526
    %v3627 = vpack.c.b16 %v3529, %v3527
    %v3628 = vpack.c.b16 %v3532, %v3530
    %v3629 = vpack.c.b16 %v3533, %v3531
    %v3630 = vpack.c.b16 %v3536, %v3534
    %v3631 = vpack.c.b16 %v3537, %v3535
    %v3632 = vpack.c.b16 %v3540, %v3538
    %v3633 = vpack.c.b16 %v3541, %v3539
    %v3634 = vpack.c.b16 %v3544, %v3542
    %v3635 = vpack.c.b16 %v3545, %v3543
    %v3636 = vpack.c.b16 %v3548, %v3546
    %v3637 = vpack.c.b16 %v3549, %v3547
    %v3638 = vpack.c.b16 %v3552, %v3550
    %v3639 = vpack.c.b16 %v3553, %v3551
    %v3640 = vpack.c.b16 %v3556, %v3554
    %v3641 = vpack.c.b16 %v3557, %v3555
    %v3642 = vpack.c.b16 %v3560, %v3558
    %v3643 = vpack.c.b16 %v3561, %v3559
    %v3644 = vpack.c.b16 %v3564, %v3562
    %v3645 = vpack.c.b16 %v3565, %v3563
    %3726 = vmatpush.bf16.msra.mxu0 %v3580
    %3727 = vmatpush.bf16.msra.mxu0 %v3578
    %3728 = vmatpush.bf16.msra.mxu0 %v3576
    %3729 = vmatpush.bf16.msra.mxu0 %v3574
    %3730 = vmatpush.bf16.msra.mxu0 %v3572
    %3731 = vmatpush.bf16.msra.mxu0 %v3570
    %3732 = vmatpush.bf16.msra.mxu0 %v3568
    %3733 = vmatpush.bf16.msra.mxu0 %v3566
    %3734 = vmatmul.bf16.gmra.mxu0 %v2009
    %v3735 = vpop.f32.mrf.mxu0
    %v3736 = vadd.f32 %v2096, %v3735
    %v3737 = vpop.f32.mrf.mxu0
    %3738 = vdwg.mxu0
    %3739 = vmatpush.bf16.msra.mxu0 %v3596
    %3740 = vmatpush.bf16.msra.mxu0 %v3594
    %3741 = vmatpush.bf16.msra.mxu0 %v3592
    %3742 = vmatpush.bf16.msra.mxu0 %v3590
    %3743 = vmatpush.bf16.msra.mxu0 %v3588
    %3744 = vmatpush.bf16.msra.mxu0 %v3586
    %3745 = vmatpush.bf16.msra.mxu0 %v3584
    %3746 = vmatpush.bf16.msra.mxu0 %v3582
    %3747 = vmatmul.bf16.gmra.mxu0 %v2010
    %v3748 = vpop.f32.mrf.mxu0
    %v3749 = vadd.f32 %v3736, %v3748
    %v3750 = vpop.f32.mrf.mxu0
    %3751 = vdwg.mxu0
    %3752 = vmatpush.bf16.msra.mxu0 %v3612
    %3753 = vmatpush.bf16.msra.mxu0 %v3610
    %3754 = vmatpush.bf16.msra.mxu0 %v3608
    %3755 = vmatpush.bf16.msra.mxu0 %v3606
    %3756 = vmatpush.bf16.msra.mxu0 %v3604
    %3757 = vmatpush.bf16.msra.mxu0 %v3602
    %3758 = vmatpush.bf16.msra.mxu0 %v3600
    %3759 = vmatpush.bf16.msra.mxu0 %v3598
    %3760 = vmatmul.bf16.gmra.mxu0 %v2011
    %v3761 = vpop.f32.mrf.mxu0
    %v3762 = vadd.f32 %v3749, %v3761
    %v3763 = vpop.f32.mrf.mxu0
    %3764 = vdwg.mxu0
    %3765 = vmatpush.bf16.msra.mxu0 %v3628
    %3766 = vmatpush.bf16.msra.mxu0 %v3626
    %3767 = vmatpush.bf16.msra.mxu0 %v3624
    %3768 = vmatpush.bf16.msra.mxu0 %v3622
    %3769 = vmatpush.bf16.msra.mxu0 %v3620
    %3770 = vmatpush.bf16.msra.mxu0 %v3618
    %3771 = vmatpush.bf16.msra.mxu0 %v3616
    %3772 = vmatpush.bf16.msra.mxu0 %v3614
    %3773 = vmatmul.bf16.gmra.mxu0 %v2012
    %v3774 = vpop.f32.mrf.mxu0
    %v3775 = vadd.f32 %v3762, %v3774
    %v3776 = vpop.f32.mrf.mxu0
    %3777 = vdwg.mxu0
    %3778 = vmatpush.bf16.msra.mxu0 %v3644
    %3779 = vmatpush.bf16.msra.mxu0 %v3642
    %3780 = vmatpush.bf16.msra.mxu0 %v3640
    %3781 = vmatpush.bf16.msra.mxu0 %v3638
    %3782 = vmatpush.bf16.msra.mxu0 %v3636
    %3783 = vmatpush.bf16.msra.mxu0 %v3634
    %3784 = vmatpush.bf16.msra.mxu0 %v3632
    %3785 = vmatpush.bf16.msra.mxu0 %v3630
    %3786 = vmatmul.bf16.gmra.mxu0 %v2013
    %v3787 = vpop.f32.mrf.mxu0
    %v3788 = vadd.f32 %v3775, %v3787
    %v3789 = vpop.f32.mrf.mxu0
    %3790 = vdwg.mxu0
    %3791 = vmatpush.bf16.msra.mxu0 %v3581
    %3792 = vmatpush.bf16.msra.mxu0 %v3579
    %3793 = vmatpush.bf16.msra.mxu0 %v3577
    %3794 = vmatpush.bf16.msra.mxu0 %v3575
    %3795 = vmatpush.bf16.msra.mxu0 %v3573
    %3796 = vmatpush.bf16.msra.mxu0 %v3571
    %3797 = vmatpush.bf16.msra.mxu0 %v3569
    %3798 = vmatpush.bf16.msra.mxu0 %v3567
    %3799 = vmatmul.bf16.gmra.mxu0 %v2009
    %v3800 = vpop.f32.mrf.mxu0
    %v3801 = vadd.f32 %v2097, %v3800
    %v3802 = vpop.f32.mrf.mxu0
    %3803 = vdwg.mxu0
    %3804 = vmatpush.bf16.msra.mxu0 %v3597
    %3805 = vmatpush.bf16.msra.mxu0 %v3595
    %3806 = vmatpush.bf16.msra.mxu0 %v3593
    %3807 = vmatpush.bf16.msra.mxu0 %v3591
    %3808 = vmatpush.bf16.msra.mxu0 %v3589
    %3809 = vmatpush.bf16.msra.mxu0 %v3587
    %3810 = vmatpush.bf16.msra.mxu0 %v3585
    %3811 = vmatpush.bf16.msra.mxu0 %v3583
    %3812 = vmatmul.bf16.gmra.mxu0 %v2010
    %v3813 = vpop.f32.mrf.mxu0
    %v3814 = vadd.f32 %v3801, %v3813
    %v3815 = vpop.f32.mrf.mxu0
    %3816 = vdwg.mxu0
    %3817 = vmatpush.bf16.msra.mxu0 %v3613
    %3818 = vmatpush.bf16.msra.mxu0 %v3611
    %3819 = vmatpush.bf16.msra.mxu0 %v3609
    %3820 = vmatpush.bf16.msra.mxu0 %v3607
    %3821 = vmatpush.bf16.msra.mxu0 %v3605
    %3822 = vmatpush.bf16.msra.mxu0 %v3603
    %3823 = vmatpush.bf16.msra.mxu0 %v3601
    %3824 = vmatpush.bf16.msra.mxu0 %v3599
    %3825 = vmatmul.bf16.gmra.mxu0 %v2011
    %v3826 = vpop.f32.mrf.mxu0
    %v3827 = vadd.f32 %v3814, %v3826
    %v3828 = vpop.f32.mrf.mxu0
    %3829 = vdwg.mxu0
    %3830 = vmatpush.bf16.msra.mxu0 %v3629
    %3831 = vmatpush.bf16.msra.mxu0 %v3627
    %3832 = vmatpush.bf16.msra.mxu0 %v3625
    %3833 = vmatpush.bf16.msra.mxu0 %v3623
    %3834 = vmatpush.bf16.msra.mxu0 %v3621
    %3835 = vmatpush.bf16.msra.mxu0 %v3619
    %3836 = vmatpush.bf16.msra.mxu0 %v3617
    %3837 = vmatpush.bf16.msra.mxu0 %v3615
    %3838 = vmatmul.bf16.gmra.mxu0 %v2012
    %v3839 = vpop.f32.mrf.mxu0
    %v3840 = vadd.f32 %v3827, %v3839
    %v3841 = vpop.f32.mrf.mxu0
    %3842 = vdwg.mxu0
    %3843 = vmatpush.bf16.msra.mxu0 %v3645
    %3844 = vmatpush.bf16.msra.mxu0 %v3643
    %3845 = vmatpush.bf16.msra.mxu0 %v3641
    %3846 = vmatpush.bf16.msra.mxu0 %v3639
    %3847 = vmatpush.bf16.msra.mxu0 %v3637
    %3848 = vmatpush.bf16.msra.mxu0 %v3635
    %3849 = vmatpush.bf16.msra.mxu0 %v3633
    %3850 = vmatpush.bf16.msra.mxu0 %v3631
    %3851 = vmatmul.bf16.gmra.mxu0 %v2013
    %v3852 = vpop.f32.mrf.mxu0
    %v3853 = vadd.f32 %v3840, %v3852
    %v3854 = vpop.f32.mrf.mxu0
    %3855 = vdwg.mxu0
    %v3856 = vmax.f32 %v3788, 0.0
    %v3857 = vmax.f32 %v3853, 0.0
    %v3858 = vmax.f32 %v3244, %v3856
    %v3859 = vmax.f32 %v3245, %v3857
    %v3860 = vld [vmem:[#allocation8 + $0x18] sm:$0xff]
    %v3861 = vld [vmem:[#allocation8 + $0x38] sm:$0xff]
    %v3862 = vld [vmem:[#allocation8 + $0x58] sm:$0xff]
    %v3863 = vld [vmem:[#allocation8 + $0x78] sm:$0xff]
    %v3864 = vld [vmem:[#allocation8 + $0x98] sm:$0xff]
    %v3865 = vld [vmem:[#allocation8 + $0xb8] sm:$0xff]
    %v3866 = vld [vmem:[#allocation8 + $0xd8] sm:$0xff]
    %v3867 = vld [vmem:[#allocation8 + $0xf8] sm:$0xff]
    %v3868 = vld [vmem:[#allocation8 + $0x118] sm:$0xff]
    %v3869 = vld [vmem:[#allocation8 + $0x138] sm:$0xff]
    %v3870 = vld [vmem:[#allocation8 + $0x158] sm:$0xff]
    %v3871 = vld [vmem:[#allocation8 + $0x178] sm:$0xff]
    %v3872 = vld [vmem:[#allocation8 + $0x198] sm:$0xff]
    %v3873 = vld [vmem:[#allocation8 + $0x1b8] sm:$0xff]
    %v3874 = vld [vmem:[#allocation8 + $0x1d8] sm:$0xff]
    %v3875 = vld [vmem:[#allocation8 + $0x1f8] sm:$0xff]
    %v3876 = vld [vmem:[#allocation8 + $0x218] sm:$0xff]
    %v3877 = vld [vmem:[#allocation8 + $0x238] sm:$0xff]
    %v3878 = vld [vmem:[#allocation8 + $0x258] sm:$0xff]
    %v3879 = vld [vmem:[#allocation8 + $0x278] sm:$0xff]
    %v3880 = vld [vmem:[#allocation8 + $0x298] sm:$0xff]
    %v3881 = vld [vmem:[#allocation8 + $0x2b8] sm:$0xff]
    %v3882 = vld [vmem:[#allocation8 + $0x2d8] sm:$0xff]
    %v3883 = vld [vmem:[#allocation8 + $0x2f8] sm:$0xff]
    %v3884 = vld [vmem:[#allocation8 + $0x318] sm:$0xff]
    %v3885 = vld [vmem:[#allocation8 + $0x338] sm:$0xff]
    %v3886 = vld [vmem:[#allocation8 + $0x358] sm:$0xff]
    %v3887 = vld [vmem:[#allocation8 + $0x378] sm:$0xff]
    %v3888 = vld [vmem:[#allocation8 + $0x398] sm:$0xff]
    %v3889 = vld [vmem:[#allocation8 + $0x3b8] sm:$0xff]
    %v3890 = vld [vmem:[#allocation8 + $0x3d8] sm:$0xff]
    %v3891 = vld [vmem:[#allocation8 + $0x3f8] sm:$0xff]
    %v3892 = vld [vmem:[#allocation8 + $0x418] sm:$0xff]
    %v3893 = vld [vmem:[#allocation8 + $0x438] sm:$0xff]
    %v3894 = vld [vmem:[#allocation8 + $0x458] sm:$0xff]
    %v3895 = vld [vmem:[#allocation8 + $0x478] sm:$0xff]
    %v3896 = vld [vmem:[#allocation8 + $0x498] sm:$0xff]
    %v3897 = vld [vmem:[#allocation8 + $0x4b8] sm:$0xff]
    %v3898 = vld [vmem:[#allocation8 + $0x4d8] sm:$0xff]
    %v3899 = vld [vmem:[#allocation8 + $0x4f8] sm:$0xff]
    %v3900 = vld [vmem:[#allocation8 + $0x518] sm:$0xff]
    %v3901 = vld [vmem:[#allocation8 + $0x538] sm:$0xff]
    %v3902 = vld [vmem:[#allocation8 + $0x558] sm:$0xff]
    %v3903 = vld [vmem:[#allocation8 + $0x578] sm:$0xff]
    %v3904 = vld [vmem:[#allocation8 + $0x598] sm:$0xff]
    %v3905 = vld [vmem:[#allocation8 + $0x5b8] sm:$0xff]
    %v3906 = vld [vmem:[#allocation8 + $0x5d8] sm:$0xff]
    %v3907 = vld [vmem:[#allocation8 + $0x5f8] sm:$0xff]
    %v3908 = vld [vmem:[#allocation8 + $0x618] sm:$0xff]
    %v3909 = vld [vmem:[#allocation8 + $0x638] sm:$0xff]
    %v3910 = vld [vmem:[#allocation8 + $0x658] sm:$0xff]
    %v3911 = vld [vmem:[#allocation8 + $0x678] sm:$0xff]
    %v3912 = vld [vmem:[#allocation8 + $0x698] sm:$0xff]
    %v3913 = vld [vmem:[#allocation8 + $0x6b8] sm:$0xff]
    %v3914 = vld [vmem:[#allocation8 + $0x6d8] sm:$0xff]
    %v3915 = vld [vmem:[#allocation8 + $0x6f8] sm:$0xff]
    %v3916 = vld [vmem:[#allocation8 + $0x718] sm:$0xff]
    %v3917 = vld [vmem:[#allocation8 + $0x738] sm:$0xff]
    %v3918 = vld [vmem:[#allocation8 + $0x758] sm:$0xff]
    %v3919 = vld [vmem:[#allocation8 + $0x778] sm:$0xff]
    %v3920 = vld [vmem:[#allocation8 + $0x798] sm:$0xff]
    %v3921 = vld [vmem:[#allocation8 + $0x7b8] sm:$0xff]
    %v3922 = vld [vmem:[#allocation8 + $0x7d8] sm:$0xff]
    %v3923 = vld [vmem:[#allocation8 + $0x7f8] sm:$0xff]
    %v3924 = vld [vmem:[#allocation8 + $0x818] sm:$0xff]
    %v3925 = vld [vmem:[#allocation8 + $0x838] sm:$0xff]
    %v3926 = vld [vmem:[#allocation8 + $0x858] sm:$0xff]
    %v3927 = vld [vmem:[#allocation8 + $0x878] sm:$0xff]
    %v3928 = vld [vmem:[#allocation8 + $0x898] sm:$0xff]
    %v3929 = vld [vmem:[#allocation8 + $0x8b8] sm:$0xff]
    %v3930 = vld [vmem:[#allocation8 + $0x8d8] sm:$0xff]
    %v3931 = vld [vmem:[#allocation8 + $0x8f8] sm:$0xff]
    %v3932 = vld [vmem:[#allocation8 + $0x918] sm:$0xff]
    %v3933 = vld [vmem:[#allocation8 + $0x938] sm:$0xff]
    %v3934 = vld [vmem:[#allocation8 + $0x958] sm:$0xff]
    %v3935 = vld [vmem:[#allocation8 + $0x978] sm:$0xff]
    %v3936 = vld [vmem:[#allocation8 + $0x998] sm:$0xff]
    %v3937 = vld [vmem:[#allocation8 + $0x9b8] sm:$0xff]
    %v3938 = vld [vmem:[#allocation8 + $0x9d8] sm:$0xff]
    %v3939 = vld [vmem:[#allocation8 + $0x9f8] sm:$0xff]
    %v4020 = vunpack.c.l.b16 %v3860
    %v4021 = vunpack.c.h.b16 %v3860
    %v4022 = vunpack.c.l.b16 %v3861
    %v4023 = vunpack.c.h.b16 %v3861
    %v4024 = vunpack.c.l.b16 %v3862
    %v4025 = vunpack.c.h.b16 %v3862
    %v4026 = vunpack.c.l.b16 %v3863
    %v4027 = vunpack.c.h.b16 %v3863
    %v4028 = vunpack.c.l.b16 %v3864
    %v4029 = vunpack.c.h.b16 %v3864
    %v4030 = vunpack.c.l.b16 %v3865
    %v4031 = vunpack.c.h.b16 %v3865
    %v4032 = vunpack.c.l.b16 %v3866
    %v4033 = vunpack.c.h.b16 %v3866
    %v4034 = vunpack.c.l.b16 %v3867
    %v4035 = vunpack.c.h.b16 %v3867
    %v4036 = vunpack.c.l.b16 %v3868
    %v4037 = vunpack.c.h.b16 %v3868
    %v4038 = vunpack.c.l.b16 %v3869
    %v4039 = vunpack.c.h.b16 %v3869
    %v4040 = vunpack.c.l.b16 %v3870
    %v4041 = vunpack.c.h.b16 %v3870
    %v4042 = vunpack.c.l.b16 %v3871
    %v4043 = vunpack.c.h.b16 %v3871
    %v4044 = vunpack.c.l.b16 %v3872
    %v4045 = vunpack.c.h.b16 %v3872
    %v4046 = vunpack.c.l.b16 %v3873
    %v4047 = vunpack.c.h.b16 %v3873
    %v4048 = vunpack.c.l.b16 %v3874
    %v4049 = vunpack.c.h.b16 %v3874
    %v4050 = vunpack.c.l.b16 %v3875
    %v4051 = vunpack.c.h.b16 %v3875
    %v4052 = vunpack.c.l.b16 %v3876
    %v4053 = vunpack.c.h.b16 %v3876
    %v4054 = vunpack.c.l.b16 %v3877
    %v4055 = vunpack.c.h.b16 %v3877
    %v4056 = vunpack.c.l.b16 %v3878
    %v4057 = vunpack.c.h.b16 %v3878
    %v4058 = vunpack.c.l.b16 %v3879
    %v4059 = vunpack.c.h.b16 %v3879
    %v4060 = vunpack.c.l.b16 %v3880
    %v4061 = vunpack.c.h.b16 %v3880
    %v4062 = vunpack.c.l.b16 %v3881
    %v4063 = vunpack.c.h.b16 %v3881
    %v4064 = vunpack.c.l.b16 %v3882
    %v4065 = vunpack.c.h.b16 %v3882
    %v4066 = vunpack.c.l.b16 %v3883
    %v4067 = vunpack.c.h.b16 %v3883
    %v4068 = vunpack.c.l.b16 %v3884
    %v4069 = vunpack.c.h.b16 %v3884
    %v4070 = vunpack.c.l.b16 %v3885
    %v4071 = vunpack.c.h.b16 %v3885
    %v4072 = vunpack.c.l.b16 %v3886
    %v4073 = vunpack.c.h.b16 %v3886
    %v4074 = vunpack.c.l.b16 %v3887
    %v4075 = vunpack.c.h.b16 %v3887
    %v4076 = vunpack.c.l.b16 %v3888
    %v4077 = vunpack.c.h.b16 %v3888
    %v4078 = vunpack.c.l.b16 %v3889
    %v4079 = vunpack.c.h.b16 %v3889
    %v4080 = vunpack.c.l.b16 %v3890
    %v4081 = vunpack.c.h.b16 %v3890
    %v4082 = vunpack.c.l.b16 %v3891
    %v4083 = vunpack.c.h.b16 %v3891
    %v4084 = vunpack.c.l.b16 %v3892
    %v4085 = vunpack.c.h.b16 %v3892
    %v4086 = vunpack.c.l.b16 %v3893
    %v4087 = vunpack.c.h.b16 %v3893
    %v4088 = vunpack.c.l.b16 %v3894
    %v4089 = vunpack.c.h.b16 %v3894
    %v4090 = vunpack.c.l.b16 %v3895
    %v4091 = vunpack.c.h.b16 %v3895
    %v4092 = vunpack.c.l.b16 %v3896
    %v4093 = vunpack.c.h.b16 %v3896
    %v4094 = vunpack.c.l.b16 %v3897
    %v4095 = vunpack.c.h.b16 %v3897
    %v4096 = vunpack.c.l.b16 %v3898
    %v4097 = vunpack.c.h.b16 %v3898
    %v4098 = vunpack.c.l.b16 %v3899
    %v4099 = vunpack.c.h.b16 %v3899
    %v4100 = vunpack.c.l.b16 %v3900
    %v4101 = vunpack.c.h.b16 %v3900
    %v4102 = vunpack.c.l.b16 %v3901
    %v4103 = vunpack.c.h.b16 %v3901
    %v4104 = vunpack.c.l.b16 %v3902
    %v4105 = vunpack.c.h.b16 %v3902
    %v4106 = vunpack.c.l.b16 %v3903
    %v4107 = vunpack.c.h.b16 %v3903
    %v4108 = vunpack.c.l.b16 %v3904
    %v4109 = vunpack.c.h.b16 %v3904
    %v4110 = vunpack.c.l.b16 %v3905
    %v4111 = vunpack.c.h.b16 %v3905
    %v4112 = vunpack.c.l.b16 %v3906
    %v4113 = vunpack.c.h.b16 %v3906
    %v4114 = vunpack.c.l.b16 %v3907
    %v4115 = vunpack.c.h.b16 %v3907
    %v4116 = vunpack.c.l.b16 %v3908
    %v4117 = vunpack.c.h.b16 %v3908
    %v4118 = vunpack.c.l.b16 %v3909
    %v4119 = vunpack.c.h.b16 %v3909
    %v4120 = vunpack.c.l.b16 %v3910
    %v4121 = vunpack.c.h.b16 %v3910
    %v4122 = vunpack.c.l.b16 %v3911
    %v4123 = vunpack.c.h.b16 %v3911
    %v4124 = vunpack.c.l.b16 %v3912
    %v4125 = vunpack.c.h.b16 %v3912
    %v4126 = vunpack.c.l.b16 %v3913
    %v4127 = vunpack.c.h.b16 %v3913
    %v4128 = vunpack.c.l.b16 %v3914
    %v4129 = vunpack.c.h.b16 %v3914
    %v4130 = vunpack.c.l.b16 %v3915
    %v4131 = vunpack.c.h.b16 %v3915
    %v4132 = vunpack.c.l.b16 %v3916
    %v4133 = vunpack.c.h.b16 %v3916
    %v4134 = vunpack.c.l.b16 %v3917
    %v4135 = vunpack.c.h.b16 %v3917
    %v4136 = vunpack.c.l.b16 %v3918
    %v4137 = vunpack.c.h.b16 %v3918
    %v4138 = vunpack.c.l.b16 %v3919
    %v4139 = vunpack.c.h.b16 %v3919
    %v4140 = vunpack.c.l.b16 %v3920
    %v4141 = vunpack.c.h.b16 %v3920
    %v4142 = vunpack.c.l.b16 %v3921
    %v4143 = vunpack.c.h.b16 %v3921
    %v4144 = vunpack.c.l.b16 %v3922
    %v4145 = vunpack.c.h.b16 %v3922
    %v4146 = vunpack.c.l.b16 %v3923
    %v4147 = vunpack.c.h.b16 %v3923
    %v4148 = vunpack.c.l.b16 %v3924
    %v4149 = vunpack.c.h.b16 %v3924
    %v4150 = vunpack.c.l.b16 %v3925
    %v4151 = vunpack.c.h.b16 %v3925
    %v4152 = vunpack.c.l.b16 %v3926
    %v4153 = vunpack.c.h.b16 %v3926
    %v4154 = vunpack.c.l.b16 %v3927
    %v4155 = vunpack.c.h.b16 %v3927
    %v4156 = vunpack.c.l.b16 %v3928
    %v4157 = vunpack.c.h.b16 %v3928
    %v4158 = vunpack.c.l.b16 %v3929
    %v4159 = vunpack.c.h.b16 %v3929
    %v4160 = vunpack.c.l.b16 %v3930
    %v4161 = vunpack.c.h.b16 %v3930
    %v4162 = vunpack.c.l.b16 %v3931
    %v4163 = vunpack.c.h.b16 %v3931
    %v4164 = vunpack.c.l.b16 %v3932
    %v4165 = vunpack.c.h.b16 %v3932
    %v4166 = vunpack.c.l.b16 %v3933
    %v4167 = vunpack.c.h.b16 %v3933
    %v4168 = vunpack.c.l.b16 %v3934
    %v4169 = vunpack.c.h.b16 %v3934
    %v4170 = vunpack.c.l.b16 %v3935
    %v4171 = vunpack.c.h.b16 %v3935
    %v4172 = vunpack.c.l.b16 %v3936
    %v4173 = vunpack.c.h.b16 %v3936
    %v4174 = vunpack.c.l.b16 %v3937
    %v4175 = vunpack.c.h.b16 %v3937
    %v4176 = vunpack.c.l.b16 %v3938
    %v4177 = vunpack.c.h.b16 %v3938
    %v4178 = vunpack.c.l.b16 %v3939
    %v4179 = vunpack.c.h.b16 %v3939
    %v4180 = vpack.c.b16 %v4022, %v4020
    %v4181 = vpack.c.b16 %v4023, %v4021
    %v4182 = vpack.c.b16 %v4026, %v4024
    %v4183 = vpack.c.b16 %v4027, %v4025
    %v4184 = vpack.c.b16 %v4030, %v4028
    %v4185 = vpack.c.b16 %v4031, %v4029
    %v4186 = vpack.c.b16 %v4034, %v4032
    %v4187 = vpack.c.b16 %v4035, %v4033
    %v4188 = vpack.c.b16 %v4038, %v4036
    %v4189 = vpack.c.b16 %v4039, %v4037
    %v4190 = vpack.c.b16 %v4042, %v4040
    %v4191 = vpack.c.b16 %v4043, %v4041
    %v4192 = vpack.c.b16 %v4046, %v4044
    %v4193 = vpack.c.b16 %v4047, %v4045
    %v4194 = vpack.c.b16 %v4050, %v4048
    %v4195 = vpack.c.b16 %v4051, %v4049
    %v4196 = vpack.c.b16 %v4054, %v4052
    %v4197 = vpack.c.b16 %v4055, %v4053
    %v4198 = vpack.c.b16 %v4058, %v4056
    %v4199 = vpack.c.b16 %v4059, %v4057
    %v4200 = vpack.c.b16 %v4062, %v4060
    %v4201 = vpack.c.b16 %v4063, %v4061
    %v4202 = vpack.c.b16 %v4066, %v4064
    %v4203 = vpack.c.b16 %v4067, %v4065
    %v4204 = vpack.c.b16 %v4070, %v4068
    %v4205 = vpack.c.b16 %v4071, %v4069
    %v4206 = vpack.c.b16 %v4074, %v4072
    %v4207 = vpack.c.b16 %v4075, %v4073
    %v4208 = vpack.c.b16 %v4078, %v4076
    %v4209 = vpack.c.b16 %v4079, %v4077
    %v4210 = vpack.c.b16 %v4082, %v4080
    %v4211 = vpack.c.b16 %v4083, %v4081
    %v4212 = vpack.c.b16 %v4086, %v4084
    %v4213 = vpack.c.b16 %v4087, %v4085
    %v4214 = vpack.c.b16 %v4090, %v4088
    %v4215 = vpack.c.b16 %v4091, %v4089
    %v4216 = vpack.c.b16 %v4094, %v4092
    %v4217 = vpack.c.b16 %v4095, %v4093
    %v4218 = vpack.c.b16 %v4098, %v4096
    %v4219 = vpack.c.b16 %v4099, %v4097
    %v4220 = vpack.c.b16 %v4102, %v4100
    %v4221 = vpack.c.b16 %v4103, %v4101
    %v4222 = vpack.c.b16 %v4106, %v4104
    %v4223 = vpack.c.b16 %v4107, %v4105
    %v4224 = vpack.c.b16 %v4110, %v4108
    %v4225 = vpack.c.b16 %v4111, %v4109
    %v4226 = vpack.c.b16 %v4114, %v4112
    %v4227 = vpack.c.b16 %v4115, %v4113
    %v4228 = vpack.c.b16 %v4118, %v4116
    %v4229 = vpack.c.b16 %v4119, %v4117
    %v4230 = vpack.c.b16 %v4122, %v4120
    %v4231 = vpack.c.b16 %v4123, %v4121
    %v4232 = vpack.c.b16 %v4126, %v4124
    %v4233 = vpack.c.b16 %v4127, %v4125
    %v4234 = vpack.c.b16 %v4130, %v4128
    %v4235 = vpack.c.b16 %v4131, %v4129
    %v4236 = vpack.c.b16 %v4134, %v4132
    %v4237 = vpack.c.b16 %v4135, %v4133
    %v4238 = vpack.c.b16 %v4138, %v4136
    %v4239 = vpack.c.b16 %v4139, %v4137
    %v4240 = vpack.c.b16 %v4142, %v4140
    %v4241 = vpack.c.b16 %v4143, %v4141
    %v4242 = vpack.c.b16 %v4146, %v4144
    %v4243 = vpack.c.b16 %v4147, %v4145
    %v4244 = vpack.c.b16 %v4150, %v4148
    %v4245 = vpack.c.b16 %v4151, %v4149
    %v4246 = vpack.c.b16 %v4154, %v4152
    %v4247 = vpack.c.b16 %v4155, %v4153
    %v4248 = vpack.c.b16 %v4158, %v4156
    %v4249 = vpack.c.b16 %v4159, %v4157
    %v4250 = vpack.c.b16 %v4162, %v4160
    %v4251 = vpack.c.b16 %v4163, %v4161
    %v4252 = vpack.c.b16 %v4166, %v4164
    %v4253 = vpack.c.b16 %v4167, %v4165
    %v4254 = vpack.c.b16 %v4170, %v4168
    %v4255 = vpack.c.b16 %v4171, %v4169
    %v4256 = vpack.c.b16 %v4174, %v4172
    %v4257 = vpack.c.b16 %v4175, %v4173
    %v4258 = vpack.c.b16 %v4178, %v4176
    %v4259 = vpack.c.b16 %v4179, %v4177
    %4340 = vmatpush.bf16.msra.mxu0 %v4194
    %4341 = vmatpush.bf16.msra.mxu0 %v4192
    %4342 = vmatpush.bf16.msra.mxu0 %v4190
    %4343 = vmatpush.bf16.msra.mxu0 %v4188
    %4344 = vmatpush.bf16.msra.mxu0 %v4186
    %4345 = vmatpush.bf16.msra.mxu0 %v4184
    %4346 = vmatpush.bf16.msra.mxu0 %v4182
    %4347 = vmatpush.bf16.msra.mxu0 %v4180
    %4348 = vmatmul.bf16.gmra.mxu0 %v2009
    %v4349 = vpop.f32.mrf.mxu0
    %v4350 = vadd.f32 %v2096, %v4349
    %v4351 = vpop.f32.mrf.mxu0
    %4352 = vdwg.mxu0
    %4353 = vmatpush.bf16.msra.mxu0 %v4210
    %4354 = vmatpush.bf16.msra.mxu0 %v4208
    %4355 = vmatpush.bf16.msra.mxu0 %v4206
    %4356 = vmatpush.bf16.msra.mxu0 %v4204
    %4357 = vmatpush.bf16.msra.mxu0 %v4202
    %4358 = vmatpush.bf16.msra.mxu0 %v4200
    %4359 = vmatpush.bf16.msra.mxu0 %v4198
    %4360 = vmatpush.bf16.msra.mxu0 %v4196
    %4361 = vmatmul.bf16.gmra.mxu0 %v2010
    %v4362 = vpop.f32.mrf.mxu0
    %v4363 = vadd.f32 %v4350, %v4362
    %v4364 = vpop.f32.mrf.mxu0
    %4365 = vdwg.mxu0
    %4366 = vmatpush.bf16.msra.mxu0 %v4226
    %4367 = vmatpush.bf16.msra.mxu0 %v4224
    %4368 = vmatpush.bf16.msra.mxu0 %v4222
    %4369 = vmatpush.bf16.msra.mxu0 %v4220
    %4370 = vmatpush.bf16.msra.mxu0 %v4218
    %4371 = vmatpush.bf16.msra.mxu0 %v4216
    %4372 = vmatpush.bf16.msra.mxu0 %v4214
    %4373 = vmatpush.bf16.msra.mxu0 %v4212
    %4374 = vmatmul.bf16.gmra.mxu0 %v2011
    %v4375 = vpop.f32.mrf.mxu0
    %v4376 = vadd.f32 %v4363, %v4375
    %v4377 = vpop.f32.mrf.mxu0
    %4378 = vdwg.mxu0
    %4379 = vmatpush.bf16.msra.mxu0 %v4242
    %4380 = vmatpush.bf16.msra.mxu0 %v4240
    %4381 = vmatpush.bf16.msra.mxu0 %v4238
    %4382 = vmatpush.bf16.msra.mxu0 %v4236
    %4383 = vmatpush.bf16.msra.mxu0 %v4234
    %4384 = vmatpush.bf16.msra.mxu0 %v4232
    %4385 = vmatpush.bf16.msra.mxu0 %v4230
    %4386 = vmatpush.bf16.msra.mxu0 %v4228
    %4387 = vmatmul.bf16.gmra.mxu0 %v2012
    %v4388 = vpop.f32.mrf.mxu0
    %v4389 = vadd.f32 %v4376, %v4388
    %v4390 = vpop.f32.mrf.mxu0
    %4391 = vdwg.mxu0
    %4392 = vmatpush.bf16.msra.mxu0 %v4258
    %4393 = vmatpush.bf16.msra.mxu0 %v4256
    %4394 = vmatpush.bf16.msra.mxu0 %v4254
    %4395 = vmatpush.bf16.msra.mxu0 %v4252
    %4396 = vmatpush.bf16.msra.mxu0 %v4250
    %4397 = vmatpush.bf16.msra.mxu0 %v4248
    %4398 = vmatpush.bf16.msra.mxu0 %v4246
    %4399 = vmatpush.bf16.msra.mxu0 %v4244
    %4400 = vmatmul.bf16.gmra.mxu0 %v2013
    %v4401 = vpop.f32.mrf.mxu0
    %v4402 = vadd.f32 %v4389, %v4401
    %v4403 = vpop.f32.mrf.mxu0
    %4404 = vdwg.mxu0
    %4405 = vmatpush.bf16.msra.mxu0 %v4195
    %4406 = vmatpush.bf16.msra.mxu0 %v4193
    %4407 = vmatpush.bf16.msra.mxu0 %v4191
    %4408 = vmatpush.bf16.msra.mxu0 %v4189
    %4409 = vmatpush.bf16.msra.mxu0 %v4187
    %4410 = vmatpush.bf16.msra.mxu0 %v4185
    %4411 = vmatpush.bf16.msra.mxu0 %v4183
    %4412 = vmatpush.bf16.msra.mxu0 %v4181
    %4413 = vmatmul.bf16.gmra.mxu0 %v2009
    %v4414 = vpop.f32.mrf.mxu0
    %v4415 = vadd.f32 %v2097, %v4414
    %v4416 = vpop.f32.mrf.mxu0
    %4417 = vdwg.mxu0
    %4418 = vmatpush.bf16.msra.mxu0 %v4211
    %4419 = vmatpush.bf16.msra.mxu0 %v4209
    %4420 = vmatpush.bf16.msra.mxu0 %v4207
    %4421 = vmatpush.bf16.msra.mxu0 %v4205
    %4422 = vmatpush.bf16.msra.mxu0 %v4203
    %4423 = vmatpush.bf16.msra.mxu0 %v4201
    %4424 = vmatpush.bf16.msra.mxu0 %v4199
    %4425 = vmatpush.bf16.msra.mxu0 %v4197
    %4426 = vmatmul.bf16.gmra.mxu0 %v2010
    %v4427 = vpop.f32.mrf.mxu0
    %v4428 = vadd.f32 %v4415, %v4427
    %v4429 = vpop.f32.mrf.mxu0
    %4430 = vdwg.mxu0
    %4431 = vmatpush.bf16.msra.mxu0 %v4227
    %4432 = vmatpush.bf16.msra.mxu0 %v4225
    %4433 = vmatpush.bf16.msra.mxu0 %v4223
    %4434 = vmatpush.bf16.msra.mxu0 %v4221
    %4435 = vmatpush.bf16.msra.mxu0 %v4219
    %4436 = vmatpush.bf16.msra.mxu0 %v4217
    %4437 = vmatpush.bf16.msra.mxu0 %v4215
    %4438 = vmatpush.bf16.msra.mxu0 %v4213
    %4439 = vmatmul.bf16.gmra.mxu0 %v2011
    %v4440 = vpop.f32.mrf.mxu0
    %v4441 = vadd.f32 %v4428, %v4440
    %v4442 = vpop.f32.mrf.mxu0
    %4443 = vdwg.mxu0
    %4444 = vmatpush.bf16.msra.mxu0 %v4243
    %4445 = vmatpush.bf16.msra.mxu0 %v4241
    %4446 = vmatpush.bf16.msra.mxu0 %v4239
    %4447 = vmatpush.bf16.msra.mxu0 %v4237
    %4448 = vmatpush.bf16.msra.mxu0 %v4235
    %4449 = vmatpush.bf16.msra.mxu0 %v4233
    %4450 = vmatpush.bf16.msra.mxu0 %v4231
    %4451 = vmatpush.bf16.msra.mxu0 %v4229
    %4452 = vmatmul.bf16.gmra.mxu0 %v2012
    %v4453 = vpop.f32.mrf.mxu0
    %v4454 = vadd.f32 %v4441, %v4453
    %v4455 = vpop.f32.mrf.mxu0
    %4456 = vdwg.mxu0
    %4457 = vmatpush.bf16.msra.mxu0 %v4259
    %4458 = vmatpush.bf16.msra.mxu0 %v4257
    %4459 = vmatpush.bf16.msra.mxu0 %v4255
    %4460 = vmatpush.bf16.msra.mxu0 %v4253
    %4461 = vmatpush.bf16.msra.mxu0 %v4251
    %4462 = vmatpush.bf16.msra.mxu0 %v4249
    %4463 = vmatpush.bf16.msra.mxu0 %v4247
    %4464 = vmatpush.bf16.msra.mxu0 %v4245
    %4465 = vmatmul.bf16.gmra.mxu0 %v2013
    %v4466 = vpop.f32.mrf.mxu0
    %v4467 = vadd.f32 %v4454, %v4466
    %v4468 = vpop.f32.mrf.mxu0
    %4469 = vdwg.mxu0
    %v4470 = vmax.f32 %v4402, 0.0
    %v4471 = vmax.f32 %v4467, 0.0
    %v4472 = vmax.f32 %v3858, %v4470
    %v4473 = vmax.f32 %v3859, %v4471
    %v4474 = vpack.c.bf16 %v4472, %v4472
    %v4475 = vpack.c.bf16 %v4473, %v4473
    %v4476 = vld [vmem:[%s5] sm:$0xf]
    %v4477 = vld [vmem:[%s5 + $0x4] sm:$0xf]
    %v4478 = vld [vmem:[%s5 + $0x8] sm:$0xf]
    %v4479 = vld [vmem:[%s5 + $0xc] sm:$0xf]
    %v4480 = vld [vmem:[%s5 + $0x10] sm:$0xf]
    %v4481 = vld [vmem:[%s5 + $0x14] sm:$0xf]
    %v4482 = vld [vmem:[%s5 + $0x18] sm:$0xf]
    %v4483 = vld [vmem:[%s5 + $0x1c] sm:$0xf]
    %v4484 = vld [vmem:[%s5 + $0x20] sm:$0xf]
    %v4485 = vld [vmem:[%s5 + $0x24] sm:$0xf]
    %v4486 = vld [vmem:[%s5 + $0x28] sm:$0xf]
    %v4487 = vld [vmem:[%s5 + $0x2c] sm:$0xf]
    %v4488 = vld [vmem:[%s5 + $0x30] sm:$0xf]
    %v4489 = vld [vmem:[%s5 + $0x34] sm:$0xf]
    %v4490 = vld [vmem:[%s5 + $0x38] sm:$0xf]
    %v4491 = vld [vmem:[%s5 + $0x3c] sm:$0xf]
    %v4492 = vld [vmem:[%s5 + $0x40] sm:$0xf]
    %v4493 = vld [vmem:[%s5 + $0x44] sm:$0xf]
    %v4494 = vld [vmem:[%s5 + $0x48] sm:$0xf]
    %v4495 = vld [vmem:[%s5 + $0x4c] sm:$0xf]
    %v4496 = vld [vmem:[%s5 + $0x50] sm:$0xf]
    %v4497 = vld [vmem:[%s5 + $0x54] sm:$0xf]
    %v4498 = vld [vmem:[%s5 + $0x58] sm:$0xf]
    %v4499 = vld [vmem:[%s5 + $0x5c] sm:$0xf]
    %v4500 = vld [vmem:[%s5 + $0x60] sm:$0xf]
    %v4501 = vld [vmem:[%s5 + $0x64] sm:$0xf]
    %v4502 = vld [vmem:[%s5 + $0x68] sm:$0xf]
    %v4503 = vld [vmem:[%s5 + $0x6c] sm:$0xf]
    %v4504 = vld [vmem:[%s5 + $0x70] sm:$0xf]
    %v4505 = vld [vmem:[%s5 + $0x74] sm:$0xf]
    %v4506 = vld [vmem:[%s5 + $0x78] sm:$0xf]
    %v4507 = vld [vmem:[%s5 + $0x7c] sm:$0xf]
    %v4508 = vld [vmem:[#allocation11] sm:$0x1]
    %v4510 = vperm.slane %v4508, 0
    %v4544 = vunpack.c.l.b16 %v4476
    %v4545 = vunpack.c.l.b16 %v4477
    %v4546 = vunpack.c.l.b16 %v4478
    %v4547 = vunpack.c.l.b16 %v4479
    %v4548 = vunpack.c.l.b16 %v4480
    %v4549 = vunpack.c.l.b16 %v4481
    %v4550 = vunpack.c.l.b16 %v4482
    %v4551 = vunpack.c.l.b16 %v4483
    %v4552 = vunpack.c.l.b16 %v4484
    %v4553 = vunpack.c.l.b16 %v4485
    %v4554 = vunpack.c.l.b16 %v4486
    %v4555 = vunpack.c.l.b16 %v4487
    %v4556 = vunpack.c.l.b16 %v4488
    %v4557 = vunpack.c.l.b16 %v4489
    %v4558 = vunpack.c.l.b16 %v4490
    %v4559 = vunpack.c.l.b16 %v4491
    %v4560 = vunpack.c.l.b16 %v4492
    %v4561 = vunpack.c.l.b16 %v4493
    %v4562 = vunpack.c.l.b16 %v4494
    %v4563 = vunpack.c.l.b16 %v4495
    %v4564 = vunpack.c.l.b16 %v4496
    %v4565 = vunpack.c.l.b16 %v4497
    %v4566 = vunpack.c.l.b16 %v4498
    %v4567 = vunpack.c.l.b16 %v4499
    %v4568 = vunpack.c.l.b16 %v4500
    %v4569 = vunpack.c.l.b16 %v4501
    %v4570 = vunpack.c.l.b16 %v4502
    %v4571 = vunpack.c.l.b16 %v4503
    %v4572 = vunpack.c.l.b16 %v4504
    %v4573 = vunpack.c.l.b16 %v4505
    %v4574 = vunpack.c.l.b16 %v4506
    %v4575 = vunpack.c.l.b16 %v4507
    %v4576 = vpack.c.b16 %v4545, %v4544
    %v4577 = vpack.c.b16 %v4547, %v4546
    %v4578 = vpack.c.b16 %v4549, %v4548
    %v4579 = vpack.c.b16 %v4551, %v4550
    %v4580 = vpack.c.b16 %v4553, %v4552
    %v4581 = vpack.c.b16 %v4555, %v4554
    %v4582 = vpack.c.b16 %v4557, %v4556
    %v4583 = vpack.c.b16 %v4559, %v4558
    %v4584 = vpack.c.b16 %v4561, %v4560
    %v4585 = vpack.c.b16 %v4563, %v4562
    %v4586 = vpack.c.b16 %v4565, %v4564
    %v4587 = vpack.c.b16 %v4567, %v4566
    %v4588 = vpack.c.b16 %v4569, %v4568
    %v4589 = vpack.c.b16 %v4571, %v4570
    %v4590 = vpack.c.b16 %v4573, %v4572
    %v4591 = vpack.c.b16 %v4575, %v4574
    %4608 = vmatpush.bf16.msra.mxu0 %v4583
    %4609 = vmatpush.bf16.msra.mxu0 %v4582
    %4610 = vmatpush.bf16.msra.mxu0 %v4581
    %4611 = vmatpush.bf16.msra.mxu0 %v4580
    %4612 = vmatpush.bf16.msra.mxu0 %v4579
    %4613 = vmatpush.bf16.msra.mxu0 %v4578
    %4614 = vmatpush.bf16.msra.mxu0 %v4577
    %4615 = vmatpush.bf16.msra.mxu0 %v4576
    %4616 = vmatmul.bf16.gmra.mxu0 %v4474
    %v4617 = vpop.f32.mrf.mxu0
    %v4618 = vadd.f32 %v4510, %v4617
    %v4619 = vpop.f32.mrf.mxu0
    %4620 = vdwg.mxu0
    %4621 = vmatpush.bf16.msra.mxu0 %v4591
    %4622 = vmatpush.bf16.msra.mxu0 %v4590
    %4623 = vmatpush.bf16.msra.mxu0 %v4589
    %4624 = vmatpush.bf16.msra.mxu0 %v4588
    %4625 = vmatpush.bf16.msra.mxu0 %v4587
    %4626 = vmatpush.bf16.msra.mxu0 %v4586
    %4627 = vmatpush.bf16.msra.mxu0 %v4585
    %4628 = vmatpush.bf16.msra.mxu0 %v4584
    %4629 = vmatmul.bf16.gmra.mxu0 %v4475
    %v4630 = vpop.f32.mrf.mxu0
    %v4631 = vadd.f32 %v4618, %v4630
    %v4632 = vpop.f32.mrf.mxu0
    %4633 = vdwg.mxu0
    %v4634 = vmax.f32 %v4631, 0.0
    %v4635 = vpack.c.bf16 %v4634, %v4634
    %v4636 = vld [vmem:[#allocation13] sm:$0xf]
    %v4637 = vld [vmem:[#allocation13 + $0x4] sm:$0xf]
    %v4638 = vld [vmem:[#allocation13 + $0x8] sm:$0xf]
    %v4639 = vld [vmem:[#allocation13 + $0xc] sm:$0xf]
    %v4640 = vld [vmem:[#allocation13 + $0x10] sm:$0xf]
    %v4641 = vld [vmem:[#allocation13 + $0x14] sm:$0xf]
    %v4642 = vld [vmem:[#allocation13 + $0x18] sm:$0xf]
    %v4643 = vld [vmem:[#allocation13 + $0x1c] sm:$0xf]
    %v4644 = vld [vmem:[#allocation14] sm:$0x1]
    %v4646 = vperm.slane %v4644, 0
    %v4656 = vunpack.c.l.b16 %v4636
    %v4657 = vunpack.c.l.b16 %v4637
    %v4658 = vunpack.c.l.b16 %v4638
    %v4659 = vunpack.c.l.b16 %v4639
    %v4660 = vunpack.c.l.b16 %v4640
    %v4661 = vunpack.c.l.b16 %v4641
    %v4662 = vunpack.c.l.b16 %v4642
    %v4663 = vunpack.c.l.b16 %v4643
    %v4664 = vpack.c.b16 %v4657, %v4656
    %v4665 = vpack.c.b16 %v4659, %v4658
    %v4666 = vpack.c.b16 %v4661, %v4660
    %v4667 = vpack.c.b16 %v4663, %v4662
    %vm4672 = vcmask 523264
    %v4674 = vsel %vm4672, %v4635, 0
    %4676 = vmatpush.bf16.msra.mxu0 0
    %4677 = vmatpush.bf16.msra.mxu0 0
    %4678 = vmatpush.bf16.msra.mxu0 0
    %4679 = vmatpush.bf16.msra.mxu0 0
    %4680 = vmatpush.bf16.msra.mxu0 %v4667
    %4681 = vmatpush.bf16.msra.mxu0 %v4666
    %4682 = vmatpush.bf16.msra.mxu0 %v4665
    %4683 = vmatpush.bf16.msra.mxu0 %v4664
    %4684 = vmatmul.bf16.gmra.mxu0 %v4674
    %v4685 = vpop.f32.mrf.mxu0
    %v4686 = vadd.f32 %v4646, %v4685
    %v4687 = vpop.f32.mrf.mxu0
    %4688 = vdwg.mxu0
    %4689 = vst [vmem:[#allocation16] sm:$0x3] %v4686
    // Predicated region
    $region70: #{tpu_custom_call.1} parent=1 // pred_check
      _
    $region71: #{tpu_custom_call.1} parent=1 // pred_check_branch
      %4691 = sbr.rel (0) target = $region73
    $region72: #{tpu_custom_call.1} parent=1 // pred_region
      %4693 = vsyncadd [#allocation4], 0
      %s4695 = sshll.u32 [#allocation16], 4
      %s4696 = int_to_ptr.vmem [resolvable:$true] %s4695
      %s4697 = sshll.u32 %s9, 4
      %s4698 = int_to_ptr.hbm [resolvable:$true] %s4697
      %4700 = dma.vmem_to_hbm [thread:$0]  %s4696, 32, %s4698, [#allocation4]
    $region73: #{tpu_custom_call.1} parent=1 // pred_fallthru
      _
    // Predicated region
    $region74: #{tpu_custom_call.1} parent=1 // pred_check
      _
    $region75: #{tpu_custom_call.1} parent=1 // pred_check_branch
      %4702 = sbr.rel (0) target = $region77
    $region76: #{tpu_custom_call.1} parent=1 // pred_region
      %4704 = dma.done [#allocation4], 32
    $region77: #{tpu_custom_call.1} parent=1 // pred_fallthru
      _
    %4705 = vsyncpa [#allocation3], 1
    %4706 = vsyncpa [#allocation6], 1
    %4707 = vsyncpa [#allocation9], 1
    %4708 = vsyncpa [#allocation12], 1
    %4709 = vsyncpa [#allocation15], 1
    %4710 = vsyncpa [#allocation4], 1

</llo_original>
